<compile_context>
chip_gen: v5e
topology: v5e:2x2
jax: 0.10.0
libtpu: 0.0.40
codegen_flags: <defaults>
</compile_context>

<pallas_src>
import functools
import math

import jax
import jax.numpy as jnp
from jax.experimental import pallas as pl
from jax.experimental.pallas import tpu as pltpu


# ----------------------------- in-kernel helpers -----------------------------

def _erf_poly(x):
    """Abramowitz & Stegun 7.1.26 erf, |abs err| <= 1.5e-7 (below bf16 matmul noise)."""
    a1, a2, a3, a4, a5 = 0.254829592, -0.284496736, 1.421413741, -1.453152027, 1.061405429
    p = 0.3275911
    sgn = jnp.where(x >= 0.0, 1.0, -1.0)
    ax = jnp.abs(x)
    t = 1.0 / (1.0 + p * ax)
    poly = ((((a5 * t + a4) * t + a3) * t + a2) * t + a1) * t
    return sgn * (1.0 - poly * jnp.exp(-ax * ax))


def _gelu_exact(x):
    # nn.GELU default (erf form); erf via 1.5e-7-accurate polynomial.
    return 0.5 * x * (1.0 + _erf_poly(x * 0.7071067811865476))


def _layernorm(x, g, b, eps=1e-5):     # torch LayerNorm default eps
    mean = jnp.mean(x, axis=-1, keepdims=True)
    var = jnp.mean(jnp.square(x - mean), axis=-1, keepdims=True)
    return (x - mean) * jax.lax.rsqrt(var + eps) * g + b


# ------------------------------- Pallas kernels ------------------------------

def _encoder_stack_kernel(x_ref, ln1g, ln1b, wqkv, wproj, bproj,
                          ln2g, ln2b, wfc1, bfc1, wfc2, bfc2, o_ref,
                          *, batch, n_pad, n_tok, num_heads):
    """One pre-norm transformer encoder layer per grid step; the activation tensor lives in the
    VMEM-resident output block across the whole layer grid (written to HBM once at the end).
    Padded key tokens (index >= n_tok) are masked out of the softmax."""
    layer = pl.program_id(0)

    @pl.when(layer == 0)
    def _():
        o_ref[...] = x_ref[...]          # load the embedded tokens into the resident block

    x = o_ref[...]                       # (M, D) f32, M = batch * n_pad
    D = x.shape[-1]
    dh = D // num_heads
    scale = dh ** -0.5

    # ---- attention block: x = x + proj(attn(LN1(x))) ----
    h1 = _layernorm(x, ln1g[0], ln1b[0])
    qkv = jnp.dot(h1.astype(jnp.bfloat16), wqkv[0],
                  preferred_element_type=jnp.float32)            # (M, 3D), qkv_bias=False

    key_iota = jax.lax.broadcasted_iota(jnp.int32, (n_pad, n_pad), 1)
    key_mask = key_iota < n_tok                                   # mask padded key tokens

    attn_rows = []
    for b in range(batch):                                        # static unroll (tiny)
        qkv_b = qkv[b * n_pad:(b + 1) * n_pad, :]                 # 8-aligned sublane slice
        heads = []
        for h in range(num_heads):                                # static unroll
            q = qkv_b[:, h * dh:(h + 1) * dh].astype(jnp.bfloat16)
            k = qkv_b[:, D + h * dh:D + (h + 1) * dh].astype(jnp.bfloat16)
            v = qkv_b[:, 2 * D + h * dh:2 * D + (h + 1) * dh].astype(jnp.bfloat16)
            s = jax.lax.dot_general(q, k, (((1,), (1,)), ((), ())),
                                    preferred_element_type=jnp.float32) * scale
            s = jnp.where(key_mask, s, -1e30)
            s = s - jnp.max(s, axis=-1, keepdims=True)
            p = jnp.exp(s)
            p = p * pl.reciprocal(jnp.sum(p, axis=-1, keepdims=True), approx=True)
            heads.append(jnp.dot(p.astype(jnp.bfloat16), v,
                                 preferred_element_type=jnp.float32))
        attn_rows.append(jnp.concatenate(heads, axis=-1))         # (n_pad, D)
    attn = jnp.concatenate(attn_rows, axis=0)                     # (M, D)

    x = x + jnp.dot(attn.astype(jnp.bfloat16), wproj[0],
                    preferred_element_type=jnp.float32) + bproj[0]

    # ---- MLP block: x = x + fc2(GELU(fc1(LN2(x)))) ----
    h2 = _layernorm(x, ln2g[0], ln2b[0])
    f = jnp.dot(h2.astype(jnp.bfloat16), wfc1[0],
                preferred_element_type=jnp.float32) + bfc1[0]
    f = _gelu_exact(f)
    x = x + jnp.dot(f.astype(jnp.bfloat16), wfc2[0],
                    preferred_element_type=jnp.float32) + bfc2[0]

    o_ref[...] = x


def _mm_bias_kernel(x_ref, w_ref, b_ref, o_ref):
    o_ref[...] = jnp.dot(x_ref[...].astype(jnp.bfloat16), w_ref[...],
                         preferred_element_type=jnp.float32) + b_ref[...]


def _head_kernel(x_ref, g1_ref, b1_ref, g2_ref, b2_ref, w_ref, b_ref, o_ref):
    """Final encoder LayerNorm (cls row) + MLPHead (LayerNorm + Linear), fused; lane-padded out."""
    h = _layernorm(x_ref[...], g1_ref[...], b1_ref[...])
    h = _layernorm(h, g2_ref[...], b2_ref[...])
    o_ref[...] = jnp.dot(h.astype(jnp.bfloat16), w_ref[...],
                         preferred_element_type=jnp.float32) + b_ref[...]


def _conv_pool_kernel(pe_ref, po_ref, w_ref, o_ref):
    """Fused Conv1d(2,64,k7,s2,p3,no-bias) + MaxPool1d(3,2,1) for one batch element.
    pe/po hold im2col rows for even/odd conv output positions;
    pool[i] = max(conv[2i-1], conv[2i], conv[2i+1]), conv[-1] := -inf."""
    w = w_ref[...]
    e = jnp.dot(pe_ref[0].astype(jnp.bfloat16), w, preferred_element_type=jnp.float32)
    o = jnp.dot(po_ref[0].astype(jnp.bfloat16), w, preferred_element_type=jnp.float32)
    neg_row = jnp.full((1, o.shape[1]), -1e30, jnp.float32)
    o_prev = jnp.concatenate([neg_row, o[:-1, :]], axis=0)        # o_prev[i] = conv[2i-1]
    o_ref[0] = jnp.maximum(jnp.maximum(e, o), o_prev)


# -------------------------------- wrappers -----------------------------------

def pallas_encoder_stack(x2, sp, *, batch, n_pad, n_tok, num_heads):
    """Whole encoder stack in one pallas_call; grid=(depth,), per-layer weights streamed."""
    M, D = x2.shape
    depth = sp['w_qkv'].shape[0]
    D3 = sp['w_qkv'].shape[2]
    Dm = sp['w_fc1'].shape[2]

    def full2d(shape):
        return pl.BlockSpec(shape, lambda l: (0, 0))

    def per_layer(shape):
        return pl.BlockSpec((1,) + shape, lambda l: (l, 0, 0))

    grid_spec = pltpu.PrefetchScalarGridSpec(
        num_scalar_prefetch=0,
        grid=(depth,),
        in_specs=[
            full2d((M, D)),           # x (only read at layer 0)
            per_layer((1, D)),        # ln1_g
            per_layer((1, D)),        # ln1_b
            per_layer((D, D3)),       # w_qkv
            per_layer((D, D)),        # w_proj
            per_layer((1, D)),        # b_proj
            per_layer((1, D)),        # ln2_g
            per_layer((1, D)),        # ln2_b
            per_layer((D, Dm)),       # w_fc1
            per_layer((1, Dm)),       # b_fc1
            per_layer((Dm, D)),       # w_fc2
            per_layer((1, D)),        # b_fc2
        ],
        out_specs=full2d((M, D)),     # resident across the layer axis
    )
    return pl.pallas_call(
        functools.partial(_encoder_stack_kernel, batch=batch, n_pad=n_pad,
                          n_tok=n_tok, num_heads=num_heads),
        out_shape=jax.ShapeDtypeStruct((M, D), jnp.float32),
        grid_spec=grid_spec,
        compiler_params=pltpu.CompilerParams(
            dimension_semantics=("arbitrary",),
            vmem_limit_bytes=48 * 1024 * 1024),
    )(x2, sp['ln1_g'], sp['ln1_b'], sp['w_qkv'], sp['w_proj'], sp['b_proj'],
      sp['ln2_g'], sp['ln2_b'], sp['w_fc1'], sp['b_fc1'], sp['w_fc2'], sp['b_fc2'])


def pallas_matmul_bias(x, w, b):
    M = x.shape[0]
    N = w.shape[1]
    return pl.pallas_call(
        _mm_bias_kernel,
        out_shape=jax.ShapeDtypeStruct((M, N), jnp.float32),
    )(x, w, b)


def pallas_head(x, g1, b1, g2, b2, w, b):
    B = x.shape[0]
    N = w.shape[1]
    return pl.pallas_call(
        _head_kernel,
        out_shape=jax.ShapeDtypeStruct((B, N), jnp.float32),
    )(x, g1, b1, g2, b2, w, b)


def pallas_conv_pool(pe, po, w):
    B, Lout, CK = pe.shape
    Cout = w.shape[1]
    p_spec = pl.BlockSpec((1, Lout, CK), lambda i: (i, 0, 0))
    return pl.pallas_call(
        _conv_pool_kernel,
        out_shape=jax.ShapeDtypeStruct((B, Lout, Cout), jnp.float32),
        grid=(B,),
        in_specs=[p_spec, p_spec, pl.BlockSpec((CK, Cout), lambda i: (0, 0))],
        out_specs=pl.BlockSpec((1, Lout, Cout), lambda i: (i, 0, 0)),
        compiler_params=pltpu.CompilerParams(dimension_semantics=("parallel",)),
    )(pe, po, w)


# ------------------------------ model (glue + kernels) -----------------------

def conv1_maxpool(x, w_mat):
    """Conv1d(2,64,k7,s2,p3,bias=False) + MaxPool1d(3,2,1) in one fused kernel.
    x: (B, 2, T) NCW;  w_mat: (16, 64) bf16 (K-padded, transposed Conv1d weight).
    Returns (B, T//4, 64) laid out (time, channels)."""
    B, Cin, T = x.shape
    K = 7
    L = (T + 2 * 3 - K) // 2 + 1
    Lout = (L + 2 - 3) // 2 + 1
    assert L == 2 * Lout  # TODO(synk): odd conv-output lengths would need an extra -inf tail window.
    xp = jnp.pad(x, ((0, 0), (0, 0), (3, 3)))
    k = jnp.arange(K)
    idx_e = (4 * jnp.arange(Lout))[:, None] + k[None, :]          # im2col rows for conv pos 2i
    idx_o = (4 * jnp.arange(Lout) + 2)[:, None] + k[None, :]      # im2col rows for conv pos 2i+1

    def gather(idx):
        p = xp[:, :, idx]                                         # (B, Cin, Lout, K)
        p = p.transpose(0, 2, 1, 3).reshape(B, Lout, Cin * K)
        return jnp.pad(p, ((0, 0), (0, 0), (0, 16 - Cin * K)))    # zero-pad contraction 14 -> 16

    # TODO(synk): host-side im2col gather; could be moved in-kernel with pl.ds strided reads.
    return pallas_conv_pool(gather(idx_e), gather(idx_o), w_mat)


def patch_embed(y, w_mat, b, patch=16):
    """PatchEmbed: Conv2d(1, D, k16, s16) + flatten(2).transpose(1,2) as im2col + matmul.
    y: (B, time, channels) from conv1_maxpool (torch sees NCHW (B, 1, channels, time))."""
    B, Wt, Hc = y.shape
    hp, wp = Hc // patch, Wt // patch
    y5 = y.reshape(B, wp, patch, hp, patch)                       # (B, pw, kw, ph, kh)
    patches = y5.transpose(0, 3, 1, 4, 2).reshape(B * hp * wp, patch * patch)
    out = pallas_matmul_bias(patches, w_mat, b)                   # (B*NP, D)
    return out.reshape(B, hp * wp, w_mat.shape[1])                # h-major patch order


def ast_forward(x, params, *, num_heads, label_dim):
    """Full ASTransformer.forward.  x: (B, 2, T) float32 (PyTorch NCW)."""
    B = x.shape[0]
    y = conv1_maxpool(x, params['conv1_w_mat'])                   # (B, T/4, 64)
    # TODO(synk): self.bn1 / self.relu exist in __init__ but are never called in forward(); omitted.
    t = patch_embed(y, params['pe_w_mat'], params['pe_b'])        # (B, NP, D)
    D = t.shape[-1]
    cls = jnp.broadcast_to(params['cls_token'], (B, 1, D))
    t = jnp.concatenate([cls, t], axis=1)                         # (B, NP+1, D)
    n_tok = t.shape[1]
    assert n_tok <= params['pos_embed'].shape[1], "pos_embed table too small for patch count"
    t = t + params['pos_embed'][:, :n_tok, :]
    # Pad tokens per batch to a multiple of 8 (sublane alignment); padded keys are masked
    # inside the fused attention, so results equal the unpadded computation.
    n_pad = -(-n_tok // 8) * 8
    t = jnp.pad(t, ((0, 0), (0, n_pad - n_tok), (0, 0)))
    x2 = t.reshape(B * n_pad, D)
    x2 = pallas_encoder_stack(x2, params['stack'], batch=B, n_pad=n_pad,
                              n_tok=n_tok, num_heads=num_heads)
    # Encoder final LayerNorm is per-row, so norm-then-slice == slice-then-norm for the cls row;
    # both final LNs + head Linear run in one fused, lane-dense kernel.
    cls_rows = x2.reshape(B, n_pad, D)[:, 0]
    logits = pallas_head(cls_rows, params['enc_ln_g'], params['enc_ln_b'],
                         params['head_ln_g'], params['head_ln_b'],
                         params['head_w'], params['head_b'])
    return logits[:, :label_dim]


# ----------------------------- parameter setup ------------------------------

def sinusoidal_pos_embed(num_positions, D):
    position = jnp.arange(num_positions, dtype=jnp.float32)[:, None]
    div_term = jnp.exp(jnp.arange(0, D, 2, dtype=jnp.float32) * (-math.log(10000.0) / D))
    pe = jnp.zeros((num_positions, D), jnp.float32)
    pe = pe.at[:, 0::2].set(jnp.sin(position * div_term))
    pe = pe.at[:, 1::2].set(jnp.cos(position * div_term))
    return pe[None]                                               # (1, P, D)


def init_params(key, *, embed_dim, depth, num_heads, label_dim, input_fdim, input_tdim):
    """Deterministic synthetic init.  Matmul weights stored as (in, out) == torch W.T, bf16,
    stacked over layers; LN/bias params pre-reshaped to (depth, 1, X) f32 once."""
    D = embed_dim
    Dm = int(D * 4.0)
    keys = iter(jax.random.split(key, 8 + 4 * depth))

    def nrm(shape, k, std=0.02):
        return std * jax.random.normal(k, shape, jnp.float32)

    params = {}
    conv1_w = nrm((64, 2, 7), next(keys))                         # Conv1d weight (torch layout)
    conv1_mat = jnp.pad(conv1_w.reshape(64, 14), ((0, 0), (0, 2)))  # contraction pad 14 -> 16
    params['conv1_w_mat'] = conv1_mat.T.astype(jnp.bfloat16)      # (16, 64)
    pe_w = nrm((D, 1, 16, 16), next(keys))                        # PatchEmbed Conv2d weight
    params['pe_w_mat'] = pe_w.reshape(D, 256).T.astype(jnp.bfloat16)  # (256, D)
    params['pe_b'] = jnp.zeros((1, D), jnp.float32)
    params['cls_token'] = 0.02 * jax.random.truncated_normal(
        next(keys), -2.0, 2.0, (1, 1, D), jnp.float32)
    num_patches = input_tdim // 16 * (input_fdim // 16)
    params['pos_embed'] = sinusoidal_pos_embed(num_patches + 1, D)

    wq, wp, w1, w2 = [], [], [], []
    for _ in range(depth):
        wq.append(nrm((D, 3 * D), next(keys)))
        wp.append(nrm((D, D), next(keys)))
        w1.append(nrm((D, Dm), next(keys)))
        w2.append(nrm((Dm, D), next(keys)))
    params['stack'] = dict(
        ln1_g=jnp.ones((depth, 1, D), jnp.float32),
        ln1_b=jnp.zeros((depth, 1, D), jnp.float32),
        w_qkv=jnp.stack(wq).astype(jnp.bfloat16),                 # (depth, D, 3D)
        w_proj=jnp.stack(wp).astype(jnp.bfloat16),                # (depth, D, D)
        b_proj=jnp.zeros((depth, 1, D), jnp.float32),
        ln2_g=jnp.ones((depth, 1, D), jnp.float32),
        ln2_b=jnp.zeros((depth, 1, D), jnp.float32),
        w_fc1=jnp.stack(w1).astype(jnp.bfloat16),                 # (depth, D, 4D)
        b_fc1=jnp.zeros((depth, 1, Dm), jnp.float32),
        w_fc2=jnp.stack(w2).astype(jnp.bfloat16),                 # (depth, 4D, D)
        b_fc2=jnp.zeros((depth, 1, D), jnp.float32),
    )
    params['enc_ln_g'] = jnp.ones((1, D), jnp.float32)
    params['enc_ln_b'] = jnp.zeros((1, D), jnp.float32)
    params['head_ln_g'] = jnp.ones((1, D), jnp.float32)
    params['head_ln_b'] = jnp.zeros((1, D), jnp.float32)
    head_w = nrm((D, label_dim), next(keys))
    lane_pad = -(-label_dim // 128) * 128                         # pad head output to 128 lanes
    params['head_w'] = jnp.pad(head_w, ((0, 0), (0, lane_pad - label_dim))).astype(jnp.bfloat16)
    params['head_b'] = jnp.zeros((1, lane_pad), jnp.float32)
    return params


# ----------------------------------- main -----------------------------------

if __name__ == "__main__":
    # Scaled-down but shape-consistent config (reference hardcodes embed_dim=768, depth=6).
    embed_dim, depth, num_heads, label_dim = 128, 2, 4, 3
    input_fdim, input_tdim = 128, 256      # only sizes the positional-embedding table
    B, T = 2, 256                          # conv1(T=256) -> 128, maxpool -> 64 -> 4x4 = 16 patches

    key = jax.random.PRNGKey(0)
    k_param, k_x = jax.random.split(key)
    params = init_params(k_param, embed_dim=embed_dim, depth=depth,
                         num_heads=num_heads, label_dim=label_dim,
                         input_fdim=input_fdim, input_tdim=input_tdim)
    x = jax.random.normal(k_x, (B, 2, T), jnp.float32)   # (B, channels=2, time) NCW

    fwd = jax.jit(functools.partial(ast_forward, num_heads=num_heads, label_dim=label_dim))
    out = jax.block_until_ready(fwd(x, params))
    assert out.shape == (B, label_dim), out.shape
    assert bool(jnp.all(jnp.isfinite(out)))
    print("KERNEL_OK")
</pallas_src>

<mosaic_0001>
module attributes {stable_mosaic.version = 11 : i64} {
  func.func @_conv_pool_kernel(%arg0: i32, %arg1: memref<1x64x16xf32, #tpu.memory_space<vmem>>, %arg2: memref<1x64x16xf32, #tpu.memory_space<vmem>>, %arg3: memref<16x64xbf16, #tpu.memory_space<vmem>>, %arg4: memref<1x64x64xf32, #tpu.memory_space<vmem>>) attributes {dimension_semantics = [#tpu.dimension_semantics<parallel>], iteration_bounds = array<i64: 2>, scalar_prefetch = 0 : i64, scratch_operands = 0 : i64, tpu.core_type = #tpu.core_type<tc>, window_params = [{transform_indices = @transform_0, window_bounds = array<i64: 1, 64, 16>}, {transform_indices = @transform_1, window_bounds = array<i64: 1, 64, 16>}, {pipeline_mode = #tpu.pipeline_mode<synchronous>, transform_indices = @transform_2, window_bounds = array<i64: 16, 64>}, {transform_indices = @transform_3, window_bounds = array<i64: 1, 64, 64>}]} {
    %c0 = arith.constant 0 : index
    %c0_0 = arith.constant 0 : index
    %0 = vector.load %arg3[%c0, %c0_0] : memref<16x64xbf16, #tpu.memory_space<vmem>>, vector<16x64xbf16>
    %c0_1 = arith.constant 0 : index
    %c0_2 = arith.constant 0 : index
    %c0_3 = arith.constant 0 : index
    %1 = vector.load %arg1[%c0_1, %c0_2, %c0_3] : memref<1x64x16xf32, #tpu.memory_space<vmem>>, vector<1x64x16xf32>
    %2 = vector.shape_cast %1 : vector<1x64x16xf32> to vector<64x16xf32>
    %3 = arith.truncf %2 : vector<64x16xf32> to vector<64x16xbf16>
    %cst = arith.constant dense<0.000000e+00> : vector<64x64xf32>
    %4 = tpu.matmul %3, %0, %cst {dimension_numbers = #tpu.dot_dimension_numbers<[1], [0], [0], [1], [0, 0, 1, 1], [], []>} : vector<64x16xbf16>, vector<16x64xbf16>, vector<64x64xf32> -> vector<64x64xf32>
    %c0_4 = arith.constant 0 : index
    %c0_5 = arith.constant 0 : index
    %c0_6 = arith.constant 0 : index
    %5 = vector.load %arg2[%c0_4, %c0_5, %c0_6] : memref<1x64x16xf32, #tpu.memory_space<vmem>>, vector<1x64x16xf32>
    %6 = vector.shape_cast %5 : vector<1x64x16xf32> to vector<64x16xf32>
    %7 = arith.truncf %6 : vector<64x16xf32> to vector<64x16xbf16>
    %cst_7 = arith.constant dense<0.000000e+00> : vector<64x64xf32>
    %8 = tpu.matmul %7, %0, %cst_7 {dimension_numbers = #tpu.dot_dimension_numbers<[1], [0], [0], [1], [0, 0, 1, 1], [], []>} : vector<64x16xbf16>, vector<16x64xbf16>, vector<64x64xf32> -> vector<64x64xf32>
    %cst_8 = arith.constant -1.000000e+30 : f32
    %9 = vector.broadcast %cst_8 : f32 to vector<1x64xf32>
    %10 = vector.extract_strided_slice %8 {offsets = [0, 0], sizes = [63, 64], strides = [1, 1]} : vector<64x64xf32> to vector<63x64xf32>
    %11 = tpu.concatenate %9, %10 in 0 : vector<1x64xf32>, vector<63x64xf32> -> vector<64x64xf32>
    %12 = arith.maximumf %4, %8 : vector<64x64xf32>
    %13 = arith.maximumf %12, %11 : vector<64x64xf32>
    %c0_9 = arith.constant 0 : index
    %c0_10 = arith.constant 0 : index
    %c0_11 = arith.constant 0 : index
    %14 = vector.load %arg4[%c0_9, %c0_10, %c0_11] : memref<1x64x64xf32, #tpu.memory_space<vmem>>, vector<1x64x64xf32>
    %15 = vector.shape_cast %14 : vector<1x64x64xf32> to vector<64x64xf32>
    %16 = vector.shape_cast %13 : vector<64x64xf32> to vector<1x64x64xf32>
    tpu.vector_store %arg4[%c0_9, %c0_10, %c0_11], %16 {strides = array<i32>} : memref<1x64x64xf32, #tpu.memory_space<vmem>>, vector<1x64x64xf32>,
    return
  }
  func.func @transform_0(%arg0: i32) -> (i32, i32, i32) {
    %c0_i32 = arith.constant 0 : i32
    %c0_i32_0 = arith.constant 0 : i32
    %c0_i32_1 = arith.constant 0 : i32
    return %arg0, %c0_i32, %c0_i32_0 : i32, i32, i32
  }
  func.func @transform_1(%arg0: i32) -> (i32, i32, i32) {
    %c0_i32 = arith.constant 0 : i32
    %c0_i32_0 = arith.constant 0 : i32
    %c0_i32_1 = arith.constant 0 : i32
    return %arg0, %c0_i32, %c0_i32_0 : i32, i32, i32
  }
  func.func @transform_2(%arg0: i32) -> (i32, i32) {
    %c0_i32 = arith.constant 0 : i32
    %c0_i32_0 = arith.constant 0 : i32
    %c0_i32_1 = arith.constant 0 : i32
    return %c0_i32, %c0_i32_0 : i32, i32
  }
  func.func @transform_3(%arg0: i32) -> (i32, i32, i32) {
    %c0_i32 = arith.constant 0 : i32
    %c0_i32_0 = arith.constant 0 : i32
    %c0_i32_1 = arith.constant 0 : i32
    return %arg0, %c0_i32, %c0_i32_0 : i32, i32, i32
  }
}

module attributes {stable_mosaic.version = 11 : i64} {
  func.func @_mm_bias_kernel(%arg0: memref<32x256xf32, #tpu.memory_space<vmem>>, %arg1: memref<256x128xbf16, #tpu.memory_space<vmem>>, %arg2: memref<1x128xf32, #tpu.memory_space<vmem>>, %arg3: memref<32x128xf32, #tpu.memory_space<vmem>>) attributes {dimension_semantics = [], scalar_prefetch = 0 : i64, scratch_operands = 0 : i64, tpu.core_type = #tpu.core_type<tc>} {
    %c0 = arith.constant 0 : index
    %c0_0 = arith.constant 0 : index
    %0 = vector.load %arg0[%c0, %c0_0] : memref<32x256xf32, #tpu.memory_space<vmem>>, vector<32x256xf32>
    %1 = arith.truncf %0 : vector<32x256xf32> to vector<32x256xbf16>
    %c0_1 = arith.constant 0 : index
    %c0_2 = arith.constant 0 : index
    %2 = vector.load %arg1[%c0_1, %c0_2] : memref<256x128xbf16, #tpu.memory_space<vmem>>, vector<256x128xbf16>
    %cst = arith.constant dense<0.000000e+00> : vector<32x128xf32>
    %3 = tpu.matmul %1, %2, %cst {dimension_numbers = #tpu.dot_dimension_numbers<[1], [0], [0], [1], [0, 0, 1, 1], [], []>} : vector<32x256xbf16>, vector<256x128xbf16>, vector<32x128xf32> -> vector<32x128xf32>
    %c0_3 = arith.constant 0 : index
    %c0_4 = arith.constant 0 : index
    %4 = vector.load %arg2[%c0_3, %c0_4] : memref<1x128xf32, #tpu.memory_space<vmem>>, vector<1x128xf32>
    %5 = vector.broadcast %4 : vector<1x128xf32> to vector<32x128xf32>
    %6 = arith.addf %3, %5 : vector<32x128xf32>
    %c0_5 = arith.constant 0 : index
    %c0_6 = arith.constant 0 : index
    %7 = vector.load %arg3[%c0_5, %c0_6] : memref<32x128xf32, #tpu.memory_space<vmem>>, vector<32x128xf32>
    tpu.vector_store %arg3[%c0_5, %c0_6], %6 {strides = array<i32>} : memref<32x128xf32, #tpu.memory_space<vmem>>, vector<32x128xf32>,
    return
  }
}

module attributes {stable_mosaic.version = 11 : i64} {
  func.func @_head_kernel(%arg0: memref<2x128xf32, #tpu.memory_space<vmem>>, %arg1: memref<1x128xf32, #tpu.memory_space<vmem>>, %arg2: memref<1x128xf32, #tpu.memory_space<vmem>>, %arg3: memref<1x128xf32, #tpu.memory_space<vmem>>, %arg4: memref<1x128xf32, #tpu.memory_space<vmem>>, %arg5: memref<128x128xbf16, #tpu.memory_space<vmem>>, %arg6: memref<1x128xf32, #tpu.memory_space<vmem>>, %arg7: memref<2x128xf32, #tpu.memory_space<vmem>>) attributes {dimension_semantics = [], scalar_prefetch = 0 : i64, scratch_operands = 0 : i64, tpu.core_type = #tpu.core_type<tc>} {
    %c0 = arith.constant 0 : index
    %c0_0 = arith.constant 0 : index
    %0 = vector.load %arg0[%c0, %c0_0] : memref<2x128xf32, #tpu.memory_space<vmem>>, vector<2x128xf32>
    %c0_1 = arith.constant 0 : index
    %c0_2 = arith.constant 0 : index
    %1 = vector.load %arg1[%c0_1, %c0_2] : memref<1x128xf32, #tpu.memory_space<vmem>>, vector<1x128xf32>
    %c0_3 = arith.constant 0 : index
    %c0_4 = arith.constant 0 : index
    %2 = vector.load %arg2[%c0_3, %c0_4] : memref<1x128xf32, #tpu.memory_space<vmem>>, vector<1x128xf32>
    %cst = arith.constant dense<0.000000e+00> : vector<2xf32>
    %3 = vector.multi_reduction <add>, %0, %cst [1] : vector<2x128xf32> to vector<2xf32>
    %4 = vector.shape_cast %3 : vector<2xf32> to vector<2x1xf32>
    %cst_5 = arith.constant 1.280000e+02 : f32
    %5 = vector.broadcast %cst_5 : f32 to vector<2x1xf32>
    %6 = arith.divf %4, %5 : vector<2x1xf32>
    %7 = vector.broadcast %6 : vector<2x1xf32> to vector<2x128xf32>
    %8 = arith.subf %0, %7 : vector<2x128xf32>
    %9 = arith.mulf %8, %8 : vector<2x128xf32>
    %cst_6 = arith.constant dense<0.000000e+00> : vector<2xf32>
    %10 = vector.multi_reduction <add>, %9, %cst_6 [1] : vector<2x128xf32> to vector<2xf32>
    %11 = vector.shape_cast %10 : vector<2xf32> to vector<2x1xf32>
    %cst_7 = arith.constant 1.280000e+02 : f32
    %12 = vector.broadcast %cst_7 : f32 to vector<2x1xf32>
    %13 = arith.divf %11, %12 : vector<2x1xf32>
    %14 = vector.broadcast %6 : vector<2x1xf32> to vector<2x128xf32>
    %15 = arith.subf %0, %14 : vector<2x128xf32>
    %cst_8 = arith.constant 9.99999974E-6 : f32
    %16 = vector.broadcast %cst_8 : f32 to vector<2x1xf32>
    %17 = arith.addf %13, %16 : vector<2x1xf32>
    %18 = math.rsqrt %17 : vector<2x1xf32>
    %19 = vector.broadcast %18 : vector<2x1xf32> to vector<2x128xf32>
    %20 = arith.mulf %15, %19 : vector<2x128xf32>
    %21 = vector.broadcast %1 : vector<1x128xf32> to vector<2x128xf32>
    %22 = arith.mulf %20, %21 : vector<2x128xf32>
    %23 = vector.broadcast %2 : vector<1x128xf32> to vector<2x128xf32>
    %24 = arith.addf %22, %23 : vector<2x128xf32>
    %c0_9 = arith.constant 0 : index
    %c0_10 = arith.constant 0 : index
    %25 = vector.load %arg3[%c0_9, %c0_10] : memref<1x128xf32, #tpu.memory_space<vmem>>, vector<1x128xf32>
    %c0_11 = arith.constant 0 : index
    %c0_12 = arith.constant 0 : index
    %26 = vector.load %arg4[%c0_11, %c0_12] : memref<1x128xf32, #tpu.memory_space<vmem>>, vector<1x128xf32>
    %cst_13 = arith.constant dense<0.000000e+00> : vector<2xf32>
    %27 = vector.multi_reduction <add>, %24, %cst_13 [1] : vector<2x128xf32> to vector<2xf32>
    %28 = vector.shape_cast %27 : vector<2xf32> to vector<2x1xf32>
    %cst_14 = arith.constant 1.280000e+02 : f32
    %29 = vector.broadcast %cst_14 : f32 to vector<2x1xf32>
    %30 = arith.divf %28, %29 : vector<2x1xf32>
    %31 = vector.broadcast %30 : vector<2x1xf32> to vector<2x128xf32>
    %32 = arith.subf %24, %31 : vector<2x128xf32>
    %33 = arith.mulf %32, %32 : vector<2x128xf32>
    %cst_15 = arith.constant dense<0.000000e+00> : vector<2xf32>
    %34 = vector.multi_reduction <add>, %33, %cst_15 [1] : vector<2x128xf32> to vector<2xf32>
    %35 = vector.shape_cast %34 : vector<2xf32> to vector<2x1xf32>
    %cst_16 = arith.constant 1.280000e+02 : f32
    %36 = vector.broadcast %cst_16 : f32 to vector<2x1xf32>
    %37 = arith.divf %35, %36 : vector<2x1xf32>
    %38 = vector.broadcast %30 : vector<2x1xf32> to vector<2x128xf32>
    %39 = arith.subf %24, %38 : vector<2x128xf32>
    %cst_17 = arith.constant 9.99999974E-6 : f32
    %40 = vector.broadcast %cst_17 : f32 to vector<2x1xf32>
    %41 = arith.addf %37, %40 : vector<2x1xf32>
    %42 = math.rsqrt %41 : vector<2x1xf32>
    %43 = vector.broadcast %42 : vector<2x1xf32> to vector<2x128xf32>
    %44 = arith.mulf %39, %43 : vector<2x128xf32>
    %45 = vector.broadcast %25 : vector<1x128xf32> to vector<2x128xf32>
    %46 = arith.mulf %44, %45 : vector<2x128xf32>
    %47 = vector.broadcast %26 : vector<1x128xf32> to vector<2x128xf32>
    %48 = arith.addf %46, %47 : vector<2x128xf32>
    %49 = arith.truncf %48 : vector<2x128xf32> to vector<2x128xbf16>
    %c0_18 = arith.constant 0 : index
    %c0_19 = arith.constant 0 : index
    %50 = vector.load %arg5[%c0_18, %c0_19] : memref<128x128xbf16, #tpu.memory_space<vmem>>, vector<128x128xbf16>
    %cst_20 = arith.constant dense<0.000000e+00> : vector<2x128xf32>
    %51 = tpu.matmul %49, %50, %cst_20 {dimension_numbers = #tpu.dot_dimension_numbers<[1], [0], [0], [1], [0, 0, 1, 1], [], []>} : vector<2x128xbf16>, vector<128x128xbf16>, vector<2x128xf32> -> vector<2x128xf32>
    %c0_21 = arith.constant 0 : index
    %c0_22 = arith.constant 0 : index
    %52 = vector.load %arg6[%c0_21, %c0_22] : memref<1x128xf32, #tpu.memory_space<vmem>>, vector<1x128xf32>
    %53 = vector.broadcast %52 : vector<1x128xf32> to vector<2x128xf32>
    %54 = arith.addf %51, %53 : vector<2x128xf32>
    %c0_23 = arith.constant 0 : index
    %c0_24 = arith.constant 0 : index
    %55 = vector.load %arg7[%c0_23, %c0_24] : memref<2x128xf32, #tpu.memory_space<vmem>>, vector<2x128xf32>
    tpu.vector_store %arg7[%c0_23, %c0_24], %54 {strides = array<i32>} : memref<2x128xf32, #tpu.memory_space<vmem>>, vector<2x128xf32>,
    return
  }
}

module attributes {stable_mosaic.version = 11 : i64} {
  func.func @_encoder_stack_kernel(%arg0: i32, %arg1: memref<48x128xf32, #tpu.memory_space<vmem>>, %arg2: memref<1x1x128xf32, #tpu.memory_space<vmem>>, %arg3: memref<1x1x128xf32, #tpu.memory_space<vmem>>, %arg4: memref<1x128x384xbf16, #tpu.memory_space<vmem>>, %arg5: memref<1x128x128xbf16, #tpu.memory_space<vmem>>, %arg6: memref<1x1x128xf32, #tpu.memory_space<vmem>>, %arg7: memref<1x1x128xf32, #tpu.memory_space<vmem>>, %arg8: memref<1x1x128xf32, #tpu.memory_space<vmem>>, %arg9: memref<1x128x512xbf16, #tpu.memory_space<vmem>>, %arg10: memref<1x1x512xf32, #tpu.memory_space<vmem>>, %arg11: memref<1x512x128xbf16, #tpu.memory_space<vmem>>, %arg12: memref<1x1x128xf32, #tpu.memory_space<vmem>>, %arg13: memref<48x128xf32, #tpu.memory_space<vmem>>) attributes {dimension_semantics = [#tpu.dimension_semantics<arbitrary>], iteration_bounds = array<i64: 2>, scalar_prefetch = 0 : i64, scratch_operands = 0 : i64, tpu.core_type = #tpu.core_type<tc>, window_params = [{pipeline_mode = #tpu.pipeline_mode<synchronous>, transform_indices = @transform_0, window_bounds = array<i64: 48, 128>}, {transform_indices = @transform_1, window_bounds = array<i64: 1, 1, 128>}, {transform_indices = @transform_2, window_bounds = array<i64: 1, 1, 128>}, {transform_indices = @transform_3, window_bounds = array<i64: 1, 128, 384>}, {transform_indices = @transform_4, window_bounds = array<i64: 1, 128, 128>}, {transform_indices = @transform_5, window_bounds = array<i64: 1, 1, 128>}, {transform_indices = @transform_6, window_bounds = array<i64: 1, 1, 128>}, {transform_indices = @transform_7, window_bounds = array<i64: 1, 1, 128>}, {transform_indices = @transform_8, window_bounds = array<i64: 1, 128, 512>}, {transform_indices = @transform_9, window_bounds = array<i64: 1, 1, 512>}, {transform_indices = @transform_10, window_bounds = array<i64: 1, 512, 128>}, {transform_indices = @transform_11, window_bounds = array<i64: 1, 1, 128>}, {pipeline_mode = #tpu.pipeline_mode<synchronous>, transform_indices = @transform_12, window_bounds = array<i64: 48, 128>}]} {
    %c0_i32 = arith.constant 0 : i32
    %0 = arith.cmpi eq, %arg0, %c0_i32 : i32
    %1 = arith.extui %0 : i1 to i32
    %c0_i32_0 = arith.constant 0 : i32
    %2 = arith.cmpi ne, %1, %c0_i32_0 : i32
    scf.if %2 {
      %c0_114 = arith.constant 0 : index
      %c0_115 = arith.constant 0 : index
      %320 = vector.load %arg1[%c0_114, %c0_115] : memref<48x128xf32, #tpu.memory_space<vmem>>, vector<48x128xf32>
      %c0_116 = arith.constant 0 : index
      %c0_117 = arith.constant 0 : index
      %321 = vector.load %arg13[%c0_116, %c0_117] : memref<48x128xf32, #tpu.memory_space<vmem>>, vector<48x128xf32>
      tpu.vector_store %arg13[%c0_116, %c0_117], %320 {strides = array<i32>} : memref<48x128xf32, #tpu.memory_space<vmem>>, vector<48x128xf32>,
    } else {
    }
    %c0 = arith.constant 0 : index
    %c0_1 = arith.constant 0 : index
    %3 = vector.load %arg13[%c0, %c0_1] : memref<48x128xf32, #tpu.memory_space<vmem>>, vector<48x128xf32>
    %c0_2 = arith.constant 0 : index
    %c0_3 = arith.constant 0 : index
    %c0_4 = arith.constant 0 : index
    %4 = vector.load %arg2[%c0_2, %c0_3, %c0_4] : memref<1x1x128xf32, #tpu.memory_space<vmem>>, vector<1x1x128xf32>
    %5 = vector.shape_cast %4 : vector<1x1x128xf32> to vector<1x128xf32>
    %c0_5 = arith.constant 0 : index
    %c0_6 = arith.constant 0 : index
    %c0_7 = arith.constant 0 : index
    %6 = vector.load %arg3[%c0_5, %c0_6, %c0_7] : memref<1x1x128xf32, #tpu.memory_space<vmem>>, vector<1x1x128xf32>
    %7 = vector.shape_cast %6 : vector<1x1x128xf32> to vector<1x128xf32>
    %cst = arith.constant dense<0.000000e+00> : vector<48xf32>
    %8 = vector.multi_reduction <add>, %3, %cst [1] : vector<48x128xf32> to vector<48xf32>
    %9 = vector.shape_cast %8 : vector<48xf32> to vector<48x1xf32>
    %cst_8 = arith.constant 1.280000e+02 : f32
    %10 = vector.broadcast %cst_8 : f32 to vector<48x1xf32>
    %11 = arith.divf %9, %10 : vector<48x1xf32>
    %12 = vector.broadcast %11 : vector<48x1xf32> to vector<48x128xf32>
    %13 = arith.subf %3, %12 : vector<48x128xf32>
    %14 = arith.mulf %13, %13 : vector<48x128xf32>
    %cst_9 = arith.constant dense<0.000000e+00> : vector<48xf32>
    %15 = vector.multi_reduction <add>, %14, %cst_9 [1] : vector<48x128xf32> to vector<48xf32>
    %16 = vector.shape_cast %15 : vector<48xf32> to vector<48x1xf32>
    %cst_10 = arith.constant 1.280000e+02 : f32
    %17 = vector.broadcast %cst_10 : f32 to vector<48x1xf32>
    %18 = arith.divf %16, %17 : vector<48x1xf32>
    %19 = vector.broadcast %11 : vector<48x1xf32> to vector<48x128xf32>
    %20 = arith.subf %3, %19 : vector<48x128xf32>
    %cst_11 = arith.constant 9.99999974E-6 : f32
    %21 = vector.broadcast %cst_11 : f32 to vector<48x1xf32>
    %22 = arith.addf %18, %21 : vector<48x1xf32>
    %23 = math.rsqrt %22 : vector<48x1xf32>
    %24 = vector.broadcast %23 : vector<48x1xf32> to vector<48x128xf32>
    %25 = arith.mulf %20, %24 : vector<48x128xf32>
    %26 = vector.broadcast %5 : vector<1x128xf32> to vector<48x128xf32>
    %27 = arith.mulf %25, %26 : vector<48x128xf32>
    %28 = vector.broadcast %7 : vector<1x128xf32> to vector<48x128xf32>
    %29 = arith.addf %27, %28 : vector<48x128xf32>
    %30 = arith.truncf %29 : vector<48x128xf32> to vector<48x128xbf16>
    %c0_12 = arith.constant 0 : index
    %c0_13 = arith.constant 0 : index
    %c0_14 = arith.constant 0 : index
    %31 = vector.load %arg4[%c0_12, %c0_13, %c0_14] : memref<1x128x384xbf16, #tpu.memory_space<vmem>>, vector<1x128x384xbf16>
    %32 = vector.shape_cast %31 : vector<1x128x384xbf16> to vector<128x384xbf16>
    %cst_15 = arith.constant dense<0.000000e+00> : vector<48x384xf32>
    %33 = tpu.matmul %30, %32, %cst_15 {dimension_numbers = #tpu.dot_dimension_numbers<[1], [0], [0], [1], [0, 0, 1, 1], [], []>} : vector<48x128xbf16>, vector<128x384xbf16>, vector<48x384xf32> -> vector<48x384xf32>
    %34 = tpu.iota {dimensions = array<i32: 1>} : vector<24x24xi32>
    %c17_i32 = arith.constant 17 : i32
    %35 = vector.broadcast %c17_i32 : i32 to vector<24x24xi32>
    %36 = arith.cmpi slt, %34, %35 : vector<24x24xi32>
    %37 = vector.extract_strided_slice %33 {offsets = [0, 0], sizes = [24, 384], strides = [1, 1]} : vector<48x384xf32> to vector<24x384xf32>
    %38 = vector.extract_strided_slice %37 {offsets = [0, 0], sizes = [24, 32], strides = [1, 1]} : vector<24x384xf32> to vector<24x32xf32>
    %39 = arith.truncf %38 : vector<24x32xf32> to vector<24x32xbf16>
    %40 = vector.extract_strided_slice %37 {offsets = [0, 128], sizes = [24, 32], strides = [1, 1]} : vector<24x384xf32> to vector<24x32xf32>
    %41 = arith.truncf %40 : vector<24x32xf32> to vector<24x32xbf16>
    %42 = vector.extract_strided_slice %37 {offsets = [0, 256], sizes = [24, 32], strides = [1, 1]} : vector<24x384xf32> to vector<24x32xf32>
    %43 = arith.truncf %42 : vector<24x32xf32> to vector<24x32xbf16>
    %cst_16 = arith.constant dense<0.000000e+00> : vector<24x24xf32>
    %44 = tpu.matmul %39, %41, %cst_16 {dimension_numbers = #tpu.dot_dimension_numbers<[1], [1], [0], [0], [0, 0, 1, 0], [], []>} : vector<24x32xbf16>, vector<24x32xbf16>, vector<24x24xf32> -> vector<24x24xf32>
    %cst_17 = arith.constant 0.176776692 : f32
    %45 = vector.broadcast %cst_17 : f32 to vector<24x24xf32>
    %46 = arith.mulf %44, %45 : vector<24x24xf32>
    %cst_18 = arith.constant -1.000000e+30 : f32
    %47 = vector.broadcast %cst_18 : f32 to vector<24x24xf32>
    %48 = arith.select %36, %46, %47 : vector<24x24xi1>, vector<24x24xf32>
    %cst_19 = arith.constant dense<0xFF800000> : vector<24xf32>
    %49 = vector.multi_reduction <maximumf>, %48, %cst_19 [1] : vector<24x24xf32> to vector<24xf32>
    %50 = vector.shape_cast %49 : vector<24xf32> to vector<24x1xf32>
    %51 = vector.broadcast %50 : vector<24x1xf32> to vector<24x24xf32>
    %52 = arith.subf %48, %51 : vector<24x24xf32>
    %53 = math.exp %52 : vector<24x24xf32>
    %cst_20 = arith.constant dense<0.000000e+00> : vector<24xf32>
    %54 = vector.multi_reduction <add>, %53, %cst_20 [1] : vector<24x24xf32> to vector<24xf32>
    %55 = vector.shape_cast %54 : vector<24xf32> to vector<24x1xf32>
    %56 = tpu.reciprocal %55 {approx = true} : vector<24x1xf32> -> vector<24x1xf32>
    %57 = vector.broadcast %56 : vector<24x1xf32> to vector<24x24xf32>
    %58 = arith.mulf %53, %57 : vector<24x24xf32>
    %59 = arith.truncf %58 : vector<24x24xf32> to vector<24x24xbf16>
    %cst_21 = arith.constant dense<0.000000e+00> : vector<24x32xf32>
    %60 = tpu.matmul %59, %43, %cst_21 {dimension_numbers = #tpu.dot_dimension_numbers<[1], [0], [0], [1], [0, 0, 1, 1], [], []>} : vector<24x24xbf16>, vector<24x32xbf16>, vector<24x32xf32> -> vector<24x32xf32>
    %61 = vector.extract_strided_slice %37 {offsets = [0, 32], sizes = [24, 32], strides = [1, 1]} : vector<24x384xf32> to vector<24x32xf32>
    %62 = arith.truncf %61 : vector<24x32xf32> to vector<24x32xbf16>
    %63 = vector.extract_strided_slice %37 {offsets = [0, 160], sizes = [24, 32], strides = [1, 1]} : vector<24x384xf32> to vector<24x32xf32>
    %64 = arith.truncf %63 : vector<24x32xf32> to vector<24x32xbf16>
    %65 = vector.extract_strided_slice %37 {offsets = [0, 288], sizes = [24, 32], strides = [1, 1]} : vector<24x384xf32> to vector<24x32xf32>
    %66 = arith.truncf %65 : vector<24x32xf32> to vector<24x32xbf16>
    %cst_22 = arith.constant dense<0.000000e+00> : vector<24x24xf32>
    %67 = tpu.matmul %62, %64, %cst_22 {dimension_numbers = #tpu.dot_dimension_numbers<[1], [1], [0], [0], [0, 0, 1, 0], [], []>} : vector<24x32xbf16>, vector<24x32xbf16>, vector<24x24xf32> -> vector<24x24xf32>
    %cst_23 = arith.constant 0.176776692 : f32
    %68 = vector.broadcast %cst_23 : f32 to vector<24x24xf32>
    %69 = arith.mulf %67, %68 : vector<24x24xf32>
    %cst_24 = arith.constant -1.000000e+30 : f32
    %70 = vector.broadcast %cst_24 : f32 to vector<24x24xf32>
    %71 = arith.select %36, %69, %70 : vector<24x24xi1>, vector<24x24xf32>
    %cst_25 = arith.constant dense<0xFF800000> : vector<24xf32>
    %72 = vector.multi_reduction <maximumf>, %71, %cst_25 [1] : vector<24x24xf32> to vector<24xf32>
    %73 = vector.shape_cast %72 : vector<24xf32> to vector<24x1xf32>
    %74 = vector.broadcast %73 : vector<24x1xf32> to vector<24x24xf32>
    %75 = arith.subf %71, %74 : vector<24x24xf32>
    %76 = math.exp %75 : vector<24x24xf32>
    %cst_26 = arith.constant dense<0.000000e+00> : vector<24xf32>
    %77 = vector.multi_reduction <add>, %76, %cst_26 [1] : vector<24x24xf32> to vector<24xf32>
    %78 = vector.shape_cast %77 : vector<24xf32> to vector<24x1xf32>
    %79 = tpu.reciprocal %78 {approx = true} : vector<24x1xf32> -> vector<24x1xf32>
    %80 = vector.broadcast %79 : vector<24x1xf32> to vector<24x24xf32>
    %81 = arith.mulf %76, %80 : vector<24x24xf32>
    %82 = arith.truncf %81 : vector<24x24xf32> to vector<24x24xbf16>
    %cst_27 = arith.constant dense<0.000000e+00> : vector<24x32xf32>
    %83 = tpu.matmul %82, %66, %cst_27 {dimension_numbers = #tpu.dot_dimension_numbers<[1], [0], [0], [1], [0, 0, 1, 1], [], []>} : vector<24x24xbf16>, vector<24x32xbf16>, vector<24x32xf32> -> vector<24x32xf32>
    %84 = vector.extract_strided_slice %37 {offsets = [0, 64], sizes = [24, 32], strides = [1, 1]} : vector<24x384xf32> to vector<24x32xf32>
    %85 = arith.truncf %84 : vector<24x32xf32> to vector<24x32xbf16>
    %86 = vector.extract_strided_slice %37 {offsets = [0, 192], sizes = [24, 32], strides = [1, 1]} : vector<24x384xf32> to vector<24x32xf32>
    %87 = arith.truncf %86 : vector<24x32xf32> to vector<24x32xbf16>
    %88 = vector.extract_strided_slice %37 {offsets = [0, 320], sizes = [24, 32], strides = [1, 1]} : vector<24x384xf32> to vector<24x32xf32>
    %89 = arith.truncf %88 : vector<24x32xf32> to vector<24x32xbf16>
    %cst_28 = arith.constant dense<0.000000e+00> : vector<24x24xf32>
    %90 = tpu.matmul %85, %87, %cst_28 {dimension_numbers = #tpu.dot_dimension_numbers<[1], [1], [0], [0], [0, 0, 1, 0], [], []>} : vector<24x32xbf16>, vector<24x32xbf16>, vector<24x24xf32> -> vector<24x24xf32>
    %cst_29 = arith.constant 0.176776692 : f32
    %91 = vector.broadcast %cst_29 : f32 to vector<24x24xf32>
    %92 = arith.mulf %90, %91 : vector<24x24xf32>
    %cst_30 = arith.constant -1.000000e+30 : f32
    %93 = vector.broadcast %cst_30 : f32 to vector<24x24xf32>
    %94 = arith.select %36, %92, %93 : vector<24x24xi1>, vector<24x24xf32>
    %cst_31 = arith.constant dense<0xFF800000> : vector<24xf32>
    %95 = vector.multi_reduction <maximumf>, %94, %cst_31 [1] : vector<24x24xf32> to vector<24xf32>
    %96 = vector.shape_cast %95 : vector<24xf32> to vector<24x1xf32>
    %97 = vector.broadcast %96 : vector<24x1xf32> to vector<24x24xf32>
    %98 = arith.subf %94, %97 : vector<24x24xf32>
    %99 = math.exp %98 : vector<24x24xf32>
    %cst_32 = arith.constant dense<0.000000e+00> : vector<24xf32>
    %100 = vector.multi_reduction <add>, %99, %cst_32 [1] : vector<24x24xf32> to vector<24xf32>
    %101 = vector.shape_cast %100 : vector<24xf32> to vector<24x1xf32>
    %102 = tpu.reciprocal %101 {approx = true} : vector<24x1xf32> -> vector<24x1xf32>
    %103 = vector.broadcast %102 : vector<24x1xf32> to vector<24x24xf32>
    %104 = arith.mulf %99, %103 : vector<24x24xf32>
    %105 = arith.truncf %104 : vector<24x24xf32> to vector<24x24xbf16>
    %cst_33 = arith.constant dense<0.000000e+00> : vector<24x32xf32>
    %106 = tpu.matmul %105, %89, %cst_33 {dimension_numbers = #tpu.dot_dimension_numbers<[1], [0], [0], [1], [0, 0, 1, 1], [], []>} : vector<24x24xbf16>, vector<24x32xbf16>, vector<24x32xf32> -> vector<24x32xf32>
    %107 = vector.extract_strided_slice %37 {offsets = [0, 96], sizes = [24, 32], strides = [1, 1]} : vector<24x384xf32> to vector<24x32xf32>
    %108 = arith.truncf %107 : vector<24x32xf32> to vector<24x32xbf16>
    %109 = vector.extract_strided_slice %37 {offsets = [0, 224], sizes = [24, 32], strides = [1, 1]} : vector<24x384xf32> to vector<24x32xf32>
    %110 = arith.truncf %109 : vector<24x32xf32> to vector<24x32xbf16>
    %111 = vector.extract_strided_slice %37 {offsets = [0, 352], sizes = [24, 32], strides = [1, 1]} : vector<24x384xf32> to vector<24x32xf32>
    %112 = arith.truncf %111 : vector<24x32xf32> to vector<24x32xbf16>
    %cst_34 = arith.constant dense<0.000000e+00> : vector<24x24xf32>
    %113 = tpu.matmul %108, %110, %cst_34 {dimension_numbers = #tpu.dot_dimension_numbers<[1], [1], [0], [0], [0, 0, 1, 0], [], []>} : vector<24x32xbf16>, vector<24x32xbf16>, vector<24x24xf32> -> vector<24x24xf32>
    %cst_35 = arith.constant 0.176776692 : f32
    %114 = vector.broadcast %cst_35 : f32 to vector<24x24xf32>
    %115 = arith.mulf %113, %114 : vector<24x24xf32>
    %cst_36 = arith.constant -1.000000e+30 : f32
    %116 = vector.broadcast %cst_36 : f32 to vector<24x24xf32>
    %117 = arith.select %36, %115, %116 : vector<24x24xi1>, vector<24x24xf32>
    %cst_37 = arith.constant dense<0xFF800000> : vector<24xf32>
    %118 = vector.multi_reduction <maximumf>, %117, %cst_37 [1] : vector<24x24xf32> to vector<24xf32>
    %119 = vector.shape_cast %118 : vector<24xf32> to vector<24x1xf32>
    %120 = vector.broadcast %119 : vector<24x1xf32> to vector<24x24xf32>
    %121 = arith.subf %117, %120 : vector<24x24xf32>
    %122 = math.exp %121 : vector<24x24xf32>
    %cst_38 = arith.constant dense<0.000000e+00> : vector<24xf32>
    %123 = vector.multi_reduction <add>, %122, %cst_38 [1] : vector<24x24xf32> to vector<24xf32>
    %124 = vector.shape_cast %123 : vector<24xf32> to vector<24x1xf32>
    %125 = tpu.reciprocal %124 {approx = true} : vector<24x1xf32> -> vector<24x1xf32>
    %126 = vector.broadcast %125 : vector<24x1xf32> to vector<24x24xf32>
    %127 = arith.mulf %122, %126 : vector<24x24xf32>
    %128 = arith.truncf %127 : vector<24x24xf32> to vector<24x24xbf16>
    %cst_39 = arith.constant dense<0.000000e+00> : vector<24x32xf32>
    %129 = tpu.matmul %128, %112, %cst_39 {dimension_numbers = #tpu.dot_dimension_numbers<[1], [0], [0], [1], [0, 0, 1, 1], [], []>} : vector<24x24xbf16>, vector<24x32xbf16>, vector<24x32xf32> -> vector<24x32xf32>
    %130 = tpu.concatenate %60, %83, %106, %129 in 1 : vector<24x32xf32>, vector<24x32xf32>, vector<24x32xf32>, vector<24x32xf32> -> vector<24x128xf32>
    %131 = vector.extract_strided_slice %33 {offsets = [24, 0], sizes = [24, 384], strides = [1, 1]} : vector<48x384xf32> to vector<24x384xf32>
    %132 = vector.extract_strided_slice %131 {offsets = [0, 0], sizes = [24, 32], strides = [1, 1]} : vector<24x384xf32> to vector<24x32xf32>
    %133 = arith.truncf %132 : vector<24x32xf32> to vector<24x32xbf16>
    %134 = vector.extract_strided_slice %131 {offsets = [0, 128], sizes = [24, 32], strides = [1, 1]} : vector<24x384xf32> to vector<24x32xf32>
    %135 = arith.truncf %134 : vector<24x32xf32> to vector<24x32xbf16>
    %136 = vector.extract_strided_slice %131 {offsets = [0, 256], sizes = [24, 32], strides = [1, 1]} : vector<24x384xf32> to vector<24x32xf32>
    %137 = arith.truncf %136 : vector<24x32xf32> to vector<24x32xbf16>
    %cst_40 = arith.constant dense<0.000000e+00> : vector<24x24xf32>
    %138 = tpu.matmul %133, %135, %cst_40 {dimension_numbers = #tpu.dot_dimension_numbers<[1], [1], [0], [0], [0, 0, 1, 0], [], []>} : vector<24x32xbf16>, vector<24x32xbf16>, vector<24x24xf32> -> vector<24x24xf32>
    %cst_41 = arith.constant 0.176776692 : f32
    %139 = vector.broadcast %cst_41 : f32 to vector<24x24xf32>
    %140 = arith.mulf %138, %139 : vector<24x24xf32>
    %cst_42 = arith.constant -1.000000e+30 : f32
    %141 = vector.broadcast %cst_42 : f32 to vector<24x24xf32>
    %142 = arith.select %36, %140, %141 : vector<24x24xi1>, vector<24x24xf32>
    %cst_43 = arith.constant dense<0xFF800000> : vector<24xf32>
    %143 = vector.multi_reduction <maximumf>, %142, %cst_43 [1] : vector<24x24xf32> to vector<24xf32>
    %144 = vector.shape_cast %143 : vector<24xf32> to vector<24x1xf32>
    %145 = vector.broadcast %144 : vector<24x1xf32> to vector<24x24xf32>
    %146 = arith.subf %142, %145 : vector<24x24xf32>
    %147 = math.exp %146 : vector<24x24xf32>
    %cst_44 = arith.constant dense<0.000000e+00> : vector<24xf32>
    %148 = vector.multi_reduction <add>, %147, %cst_44 [1] : vector<24x24xf32> to vector<24xf32>
    %149 = vector.shape_cast %148 : vector<24xf32> to vector<24x1xf32>
    %150 = tpu.reciprocal %149 {approx = true} : vector<24x1xf32> -> vector<24x1xf32>
    %151 = vector.broadcast %150 : vector<24x1xf32> to vector<24x24xf32>
    %152 = arith.mulf %147, %151 : vector<24x24xf32>
    %153 = arith.truncf %152 : vector<24x24xf32> to vector<24x24xbf16>
    %cst_45 = arith.constant dense<0.000000e+00> : vector<24x32xf32>
    %154 = tpu.matmul %153, %137, %cst_45 {dimension_numbers = #tpu.dot_dimension_numbers<[1], [0], [0], [1], [0, 0, 1, 1], [], []>} : vector<24x24xbf16>, vector<24x32xbf16>, vector<24x32xf32> -> vector<24x32xf32>
    %155 = vector.extract_strided_slice %131 {offsets = [0, 32], sizes = [24, 32], strides = [1, 1]} : vector<24x384xf32> to vector<24x32xf32>
    %156 = arith.truncf %155 : vector<24x32xf32> to vector<24x32xbf16>
    %157 = vector.extract_strided_slice %131 {offsets = [0, 160], sizes = [24, 32], strides = [1, 1]} : vector<24x384xf32> to vector<24x32xf32>
    %158 = arith.truncf %157 : vector<24x32xf32> to vector<24x32xbf16>
    %159 = vector.extract_strided_slice %131 {offsets = [0, 288], sizes = [24, 32], strides = [1, 1]} : vector<24x384xf32> to vector<24x32xf32>
    %160 = arith.truncf %159 : vector<24x32xf32> to vector<24x32xbf16>
    %cst_46 = arith.constant dense<0.000000e+00> : vector<24x24xf32>
    %161 = tpu.matmul %156, %158, %cst_46 {dimension_numbers = #tpu.dot_dimension_numbers<[1], [1], [0], [0], [0, 0, 1, 0], [], []>} : vector<24x32xbf16>, vector<24x32xbf16>, vector<24x24xf32> -> vector<24x24xf32>
    %cst_47 = arith.constant 0.176776692 : f32
    %162 = vector.broadcast %cst_47 : f32 to vector<24x24xf32>
    %163 = arith.mulf %161, %162 : vector<24x24xf32>
    %cst_48 = arith.constant -1.000000e+30 : f32
    %164 = vector.broadcast %cst_48 : f32 to vector<24x24xf32>
    %165 = arith.select %36, %163, %164 : vector<24x24xi1>, vector<24x24xf32>
    %cst_49 = arith.constant dense<0xFF800000> : vector<24xf32>
    %166 = vector.multi_reduction <maximumf>, %165, %cst_49 [1] : vector<24x24xf32> to vector<24xf32>
    %167 = vector.shape_cast %166 : vector<24xf32> to vector<24x1xf32>
    %168 = vector.broadcast %167 : vector<24x1xf32> to vector<24x24xf32>
    %169 = arith.subf %165, %168 : vector<24x24xf32>
    %170 = math.exp %169 : vector<24x24xf32>
    %cst_50 = arith.constant dense<0.000000e+00> : vector<24xf32>
    %171 = vector.multi_reduction <add>, %170, %cst_50 [1] : vector<24x24xf32> to vector<24xf32>
    %172 = vector.shape_cast %171 : vector<24xf32> to vector<24x1xf32>
    %173 = tpu.reciprocal %172 {approx = true} : vector<24x1xf32> -> vector<24x1xf32>
    %174 = vector.broadcast %173 : vector<24x1xf32> to vector<24x24xf32>
    %175 = arith.mulf %170, %174 : vector<24x24xf32>
    %176 = arith.truncf %175 : vector<24x24xf32> to vector<24x24xbf16>
    %cst_51 = arith.constant dense<0.000000e+00> : vector<24x32xf32>
    %177 = tpu.matmul %176, %160, %cst_51 {dimension_numbers = #tpu.dot_dimension_numbers<[1], [0], [0], [1], [0, 0, 1, 1], [], []>} : vector<24x24xbf16>, vector<24x32xbf16>, vector<24x32xf32> -> vector<24x32xf32>
    %178 = vector.extract_strided_slice %131 {offsets = [0, 64], sizes = [24, 32], strides = [1, 1]} : vector<24x384xf32> to vector<24x32xf32>
    %179 = arith.truncf %178 : vector<24x32xf32> to vector<24x32xbf16>
    %180 = vector.extract_strided_slice %131 {offsets = [0, 192], sizes = [24, 32], strides = [1, 1]} : vector<24x384xf32> to vector<24x32xf32>
    %181 = arith.truncf %180 : vector<24x32xf32> to vector<24x32xbf16>
    %182 = vector.extract_strided_slice %131 {offsets = [0, 320], sizes = [24, 32], strides = [1, 1]} : vector<24x384xf32> to vector<24x32xf32>
    %183 = arith.truncf %182 : vector<24x32xf32> to vector<24x32xbf16>
    %cst_52 = arith.constant dense<0.000000e+00> : vector<24x24xf32>
    %184 = tpu.matmul %179, %181, %cst_52 {dimension_numbers = #tpu.dot_dimension_numbers<[1], [1], [0], [0], [0, 0, 1, 0], [], []>} : vector<24x32xbf16>, vector<24x32xbf16>, vector<24x24xf32> -> vector<24x24xf32>
    %cst_53 = arith.constant 0.176776692 : f32
    %185 = vector.broadcast %cst_53 : f32 to vector<24x24xf32>
    %186 = arith.mulf %184, %185 : vector<24x24xf32>
    %cst_54 = arith.constant -1.000000e+30 : f32
    %187 = vector.broadcast %cst_54 : f32 to vector<24x24xf32>
    %188 = arith.select %36, %186, %187 : vector<24x24xi1>, vector<24x24xf32>
    %cst_55 = arith.constant dense<0xFF800000> : vector<24xf32>
    %189 = vector.multi_reduction <maximumf>, %188, %cst_55 [1] : vector<24x24xf32> to vector<24xf32>
    %190 = vector.shape_cast %189 : vector<24xf32> to vector<24x1xf32>
    %191 = vector.broadcast %190 : vector<24x1xf32> to vector<24x24xf32>
    %192 = arith.subf %188, %191 : vector<24x24xf32>
    %193 = math.exp %192 : vector<24x24xf32>
    %cst_56 = arith.constant dense<0.000000e+00> : vector<24xf32>
    %194 = vector.multi_reduction <add>, %193, %cst_56 [1] : vector<24x24xf32> to vector<24xf32>
    %195 = vector.shape_cast %194 : vector<24xf32> to vector<24x1xf32>
    %196 = tpu.reciprocal %195 {approx = true} : vector<24x1xf32> -> vector<24x1xf32>
    %197 = vector.broadcast %196 : vector<24x1xf32> to vector<24x24xf32>
    %198 = arith.mulf %193, %197 : vector<24x24xf32>
    %199 = arith.truncf %198 : vector<24x24xf32> to vector<24x24xbf16>
    %cst_57 = arith.constant dense<0.000000e+00> : vector<24x32xf32>
    %200 = tpu.matmul %199, %183, %cst_57 {dimension_numbers = #tpu.dot_dimension_numbers<[1], [0], [0], [1], [0, 0, 1, 1], [], []>} : vector<24x24xbf16>, vector<24x32xbf16>, vector<24x32xf32> -> vector<24x32xf32>
    %201 = vector.extract_strided_slice %131 {offsets = [0, 96], sizes = [24, 32], strides = [1, 1]} : vector<24x384xf32> to vector<24x32xf32>
    %202 = arith.truncf %201 : vector<24x32xf32> to vector<24x32xbf16>
    %203 = vector.extract_strided_slice %131 {offsets = [0, 224], sizes = [24, 32], strides = [1, 1]} : vector<24x384xf32> to vector<24x32xf32>
    %204 = arith.truncf %203 : vector<24x32xf32> to vector<24x32xbf16>
    %205 = vector.extract_strided_slice %131 {offsets = [0, 352], sizes = [24, 32], strides = [1, 1]} : vector<24x384xf32> to vector<24x32xf32>
    %206 = arith.truncf %205 : vector<24x32xf32> to vector<24x32xbf16>
    %cst_58 = arith.constant dense<0.000000e+00> : vector<24x24xf32>
    %207 = tpu.matmul %202, %204, %cst_58 {dimension_numbers = #tpu.dot_dimension_numbers<[1], [1], [0], [0], [0, 0, 1, 0], [], []>} : vector<24x32xbf16>, vector<24x32xbf16>, vector<24x24xf32> -> vector<24x24xf32>
    %cst_59 = arith.constant 0.176776692 : f32
    %208 = vector.broadcast %cst_59 : f32 to vector<24x24xf32>
    %209 = arith.mulf %207, %208 : vector<24x24xf32>
    %cst_60 = arith.constant -1.000000e+30 : f32
    %210 = vector.broadcast %cst_60 : f32 to vector<24x24xf32>
    %211 = arith.select %36, %209, %210 : vector<24x24xi1>, vector<24x24xf32>
    %cst_61 = arith.constant dense<0xFF800000> : vector<24xf32>
    %212 = vector.multi_reduction <maximumf>, %211, %cst_61 [1] : vector<24x24xf32> to vector<24xf32>
    %213 = vector.shape_cast %212 : vector<24xf32> to vector<24x1xf32>
    %214 = vector.broadcast %213 : vector<24x1xf32> to vector<24x24xf32>
    %215 = arith.subf %211, %214 : vector<24x24xf32>
    %216 = math.exp %215 : vector<24x24xf32>
    %cst_62 = arith.constant dense<0.000000e+00> : vector<24xf32>
    %217 = vector.multi_reduction <add>, %216, %cst_62 [1] : vector<24x24xf32> to vector<24xf32>
    %218 = vector.shape_cast %217 : vector<24xf32> to vector<24x1xf32>
    %219 = tpu.reciprocal %218 {approx = true} : vector<24x1xf32> -> vector<24x1xf32>
    %220 = vector.broadcast %219 : vector<24x1xf32> to vector<24x24xf32>
    %221 = arith.mulf %216, %220 : vector<24x24xf32>
    %222 = arith.truncf %221 : vector<24x24xf32> to vector<24x24xbf16>
    %cst_63 = arith.constant dense<0.000000e+00> : vector<24x32xf32>
    %223 = tpu.matmul %222, %206, %cst_63 {dimension_numbers = #tpu.dot_dimension_numbers<[1], [0], [0], [1], [0, 0, 1, 1], [], []>} : vector<24x24xbf16>, vector<24x32xbf16>, vector<24x32xf32> -> vector<24x32xf32>
    %224 = tpu.concatenate %154, %177, %200, %223 in 1 : vector<24x32xf32>, vector<24x32xf32>, vector<24x32xf32>, vector<24x32xf32> -> vector<24x128xf32>
    %225 = tpu.concatenate %130, %224 in 0 : vector<24x128xf32>, vector<24x128xf32> -> vector<48x128xf32>
    %226 = arith.truncf %225 : vector<48x128xf32> to vector<48x128xbf16>
    %c0_64 = arith.constant 0 : index
    %c0_65 = arith.constant 0 : index
    %c0_66 = arith.constant 0 : index
    %227 = vector.load %arg5[%c0_64, %c0_65, %c0_66] : memref<1x128x128xbf16, #tpu.memory_space<vmem>>, vector<1x128x128xbf16>
    %228 = vector.shape_cast %227 : vector<1x128x128xbf16> to vector<128x128xbf16>
    %cst_67 = arith.constant dense<0.000000e+00> : vector<48x128xf32>
    %229 = tpu.matmul %226, %228, %cst_67 {dimension_numbers = #tpu.dot_dimension_numbers<[1], [0], [0], [1], [0, 0, 1, 1], [], []>} : vector<48x128xbf16>, vector<128x128xbf16>, vector<48x128xf32> -> vector<48x128xf32>
    %230 = arith.addf %3, %229 : vector<48x128xf32>
    %c0_68 = arith.constant 0 : index
    %c0_69 = arith.constant 0 : index
    %c0_70 = arith.constant 0 : index
    %231 = vector.load %arg6[%c0_68, %c0_69, %c0_70] : memref<1x1x128xf32, #tpu.memory_space<vmem>>, vector<1x1x128xf32>
    %232 = vector.shape_cast %231 : vector<1x1x128xf32> to vector<1x128xf32>
    %233 = vector.broadcast %232 : vector<1x128xf32> to vector<48x128xf32>
    %234 = arith.addf %230, %233 : vector<48x128xf32>
    %c0_71 = arith.constant 0 : index
    %c0_72 = arith.constant 0 : index
    %c0_73 = arith.constant 0 : index
    %235 = vector.load %arg7[%c0_71, %c0_72, %c0_73] : memref<1x1x128xf32, #tpu.memory_space<vmem>>, vector<1x1x128xf32>
    %236 = vector.shape_cast %235 : vector<1x1x128xf32> to vector<1x128xf32>
    %c0_74 = arith.constant 0 : index
    %c0_75 = arith.constant 0 : index
    %c0_76 = arith.constant 0 : index
    %237 = vector.load %arg8[%c0_74, %c0_75, %c0_76] : memref<1x1x128xf32, #tpu.memory_space<vmem>>, vector<1x1x128xf32>
    %238 = vector.shape_cast %237 : vector<1x1x128xf32> to vector<1x128xf32>
    %cst_77 = arith.constant dense<0.000000e+00> : vector<48xf32>
    %239 = vector.multi_reduction <add>, %234, %cst_77 [1] : vector<48x128xf32> to vector<48xf32>
    %240 = vector.shape_cast %239 : vector<48xf32> to vector<48x1xf32>
    %cst_78 = arith.constant 1.280000e+02 : f32
    %241 = vector.broadcast %cst_78 : f32 to vector<48x1xf32>
    %242 = arith.divf %240, %241 : vector<48x1xf32>
    %243 = vector.broadcast %242 : vector<48x1xf32> to vector<48x128xf32>
    %244 = arith.subf %234, %243 : vector<48x128xf32>
    %245 = arith.mulf %244, %244 : vector<48x128xf32>
    %cst_79 = arith.constant dense<0.000000e+00> : vector<48xf32>
    %246 = vector.multi_reduction <add>, %245, %cst_79 [1] : vector<48x128xf32> to vector<48xf32>
    %247 = vector.shape_cast %246 : vector<48xf32> to vector<48x1xf32>
    %cst_80 = arith.constant 1.280000e+02 : f32
    %248 = vector.broadcast %cst_80 : f32 to vector<48x1xf32>
    %249 = arith.divf %247, %248 : vector<48x1xf32>
    %250 = vector.broadcast %242 : vector<48x1xf32> to vector<48x128xf32>
    %251 = arith.subf %234, %250 : vector<48x128xf32>
    %cst_81 = arith.constant 9.99999974E-6 : f32
    %252 = vector.broadcast %cst_81 : f32 to vector<48x1xf32>
    %253 = arith.addf %249, %252 : vector<48x1xf32>
    %254 = math.rsqrt %253 : vector<48x1xf32>
    %255 = vector.broadcast %254 : vector<48x1xf32> to vector<48x128xf32>
    %256 = arith.mulf %251, %255 : vector<48x128xf32>
    %257 = vector.broadcast %236 : vector<1x128xf32> to vector<48x128xf32>
    %258 = arith.mulf %256, %257 : vector<48x128xf32>
    %259 = vector.broadcast %238 : vector<1x128xf32> to vector<48x128xf32>
    %260 = arith.addf %258, %259 : vector<48x128xf32>
    %261 = arith.truncf %260 : vector<48x128xf32> to vector<48x128xbf16>
    %c0_82 = arith.constant 0 : index
    %c0_83 = arith.constant 0 : index
    %c0_84 = arith.constant 0 : index
    %262 = vector.load %arg9[%c0_82, %c0_83, %c0_84] : memref<1x128x512xbf16, #tpu.memory_space<vmem>>, vector<1x128x512xbf16>
    %263 = vector.shape_cast %262 : vector<1x128x512xbf16> to vector<128x512xbf16>
    %cst_85 = arith.constant dense<0.000000e+00> : vector<48x512xf32>
    %264 = tpu.matmul %261, %263, %cst_85 {dimension_numbers = #tpu.dot_dimension_numbers<[1], [0], [0], [1], [0, 0, 1, 1], [], []>} : vector<48x128xbf16>, vector<128x512xbf16>, vector<48x512xf32> -> vector<48x512xf32>
    %c0_86 = arith.constant 0 : index
    %c0_87 = arith.constant 0 : index
    %c0_88 = arith.constant 0 : index
    %265 = vector.load %arg10[%c0_86, %c0_87, %c0_88] : memref<1x1x512xf32, #tpu.memory_space<vmem>>, vector<1x1x512xf32>
    %266 = vector.shape_cast %265 : vector<1x1x512xf32> to vector<1x512xf32>
    %267 = vector.broadcast %266 : vector<1x512xf32> to vector<48x512xf32>
    %268 = arith.addf %264, %267 : vector<48x512xf32>
    %cst_89 = arith.constant 5.000000e-01 : f32
    %269 = vector.broadcast %cst_89 : f32 to vector<48x512xf32>
    %270 = arith.mulf %269, %268 : vector<48x512xf32>
    %cst_90 = arith.constant 0.707106769 : f32
    %271 = vector.broadcast %cst_90 : f32 to vector<48x512xf32>
    %272 = arith.mulf %268, %271 : vector<48x512xf32>
    %cst_91 = arith.constant 0.000000e+00 : f32
    %273 = vector.broadcast %cst_91 : f32 to vector<48x512xf32>
    %274 = arith.cmpf oge, %272, %273 : vector<48x512xf32>
    %cst_92 = arith.constant 1.000000e+00 : f32
    %cst_93 = arith.constant -1.000000e+00 : f32
    %275 = vector.broadcast %cst_92 : f32 to vector<48x512xf32>
    %276 = vector.broadcast %cst_93 : f32 to vector<48x512xf32>
    %277 = arith.select %274, %275, %276 : vector<48x512xi1>, vector<48x512xf32>
    %278 = math.absf %272 : vector<48x512xf32>
    %cst_94 = arith.constant 0.327591091 : f32
    %279 = vector.broadcast %cst_94 : f32 to vector<48x512xf32>
    %280 = arith.mulf %279, %278 : vector<48x512xf32>
    %cst_95 = arith.constant 1.000000e+00 : f32
    %281 = vector.broadcast %cst_95 : f32 to vector<48x512xf32>
    %282 = arith.addf %281, %280 : vector<48x512xf32>
    %cst_96 = arith.constant 1.000000e+00 : f32
    %283 = vector.broadcast %cst_96 : f32 to vector<48x512xf32>
    %284 = arith.divf %283, %282 : vector<48x512xf32>
    %cst_97 = arith.constant 1.06140542 : f32
    %285 = vector.broadcast %cst_97 : f32 to vector<48x512xf32>
    %286 = arith.mulf %285, %284 : vector<48x512xf32>
    %cst_98 = arith.constant -1.45315206 : f32
    %287 = vector.broadcast %cst_98 : f32 to vector<48x512xf32>
    %288 = arith.addf %286, %287 : vector<48x512xf32>
    %289 = arith.mulf %288, %284 : vector<48x512xf32>
    %cst_99 = arith.constant 1.42141378 : f32
    %290 = vector.broadcast %cst_99 : f32 to vector<48x512xf32>
    %291 = arith.addf %289, %290 : vector<48x512xf32>
    %292 = arith.mulf %291, %284 : vector<48x512xf32>
    %cst_100 = arith.constant -0.284496725 : f32
    %293 = vector.broadcast %cst_100 : f32 to vector<48x512xf32>
    %294 = arith.addf %292, %293 : vector<48x512xf32>
    %295 = arith.mulf %294, %284 : vector<48x512xf32>
    %cst_101 = arith.constant 0.254829586 : f32
    %296 = vector.broadcast %cst_101 : f32 to vector<48x512xf32>
    %297 = arith.addf %295, %296 : vector<48x512xf32>
    %298 = arith.mulf %297, %284 : vector<48x512xf32>
    %cst_102 = arith.constant 0.000000e+00 : f32
    %299 = vector.broadcast %cst_102 : f32 to vector<48x512xf32>
    %300 = arith.subf %299, %278 : vector<48x512xf32>
    %301 = arith.mulf %300, %278 : vector<48x512xf32>
    %302 = math.exp %301 : vector<48x512xf32>
    %303 = arith.mulf %298, %302 : vector<48x512xf32>
    %cst_103 = arith.constant 1.000000e+00 : f32
    %304 = vector.broadcast %cst_103 : f32 to vector<48x512xf32>
    %305 = arith.subf %304, %303 : vector<48x512xf32>
    %306 = arith.mulf %277, %305 : vector<48x512xf32>
    %cst_104 = arith.constant 1.000000e+00 : f32
    %307 = vector.broadcast %cst_104 : f32 to vector<48x512xf32>
    %308 = arith.addf %307, %306 : vector<48x512xf32>
    %309 = arith.mulf %270, %308 : vector<48x512xf32>
    %310 = arith.truncf %309 : vector<48x512xf32> to vector<48x512xbf16>
    %c0_105 = arith.constant 0 : index
    %c0_106 = arith.constant 0 : index
    %c0_107 = arith.constant 0 : index
    %311 = vector.load %arg11[%c0_105, %c0_106, %c0_107] : memref<1x512x128xbf16, #tpu.memory_space<vmem>>, vector<1x512x128xbf16>
    %312 = vector.shape_cast %311 : vector<1x512x128xbf16> to vector<512x128xbf16>
    %cst_108 = arith.constant dense<0.000000e+00> : vector<48x128xf32>
    %313 = tpu.matmul %310, %312, %cst_108 {dimension_numbers = #tpu.dot_dimension_numbers<[1], [0], [0], [1], [0, 0, 1, 1], [], []>} : vector<48x512xbf16>, vector<512x128xbf16>, vector<48x128xf32> -> vector<48x128xf32>
    %314 = arith.addf %234, %313 : vector<48x128xf32>
    %c0_109 = arith.constant 0 : index
    %c0_110 = arith.constant 0 : index
    %c0_111 = arith.constant 0 : index
    %315 = vector.load %arg12[%c0_109, %c0_110, %c0_111] : memref<1x1x128xf32, #tpu.memory_space<vmem>>, vector<1x1x128xf32>
    %316 = vector.shape_cast %315 : vector<1x1x128xf32> to vector<1x128xf32>
    %317 = vector.broadcast %316 : vector<1x128xf32> to vector<48x128xf32>
    %318 = arith.addf %314, %317 : vector<48x128xf32>
    %c0_112 = arith.constant 0 : index
    %c0_113 = arith.constant 0 : index
    %319 = vector.load %arg13[%c0_112, %c0_113] : memref<48x128xf32, #tpu.memory_space<vmem>>, vector<48x128xf32>
    tpu.vector_store %arg13[%c0_112, %c0_113], %318 {strides = array<i32>} : memref<48x128xf32, #tpu.memory_space<vmem>>, vector<48x128xf32>,
    return
  }
  func.func @transform_0(%arg0: i32) -> (i32, i32) {
    %c0_i32 = arith.constant 0 : i32
    %c0_i32_0 = arith.constant 0 : i32
    %c0_i32_1 = arith.constant 0 : i32
    return %c0_i32, %c0_i32_0 : i32, i32
  }
  func.func @transform_1(%arg0: i32) -> (i32, i32, i32) {
    %c0_i32 = arith.constant 0 : i32
    %c0_i32_0 = arith.constant 0 : i32
    %c0_i32_1 = arith.constant 0 : i32
    return %arg0, %c0_i32, %c0_i32_0 : i32, i32, i32
  }
  func.func @transform_2(%arg0: i32) -> (i32, i32, i32) {
    %c0_i32 = arith.constant 0 : i32
    %c0_i32_0 = arith.constant 0 : i32
    %c0_i32_1 = arith.constant 0 : i32
    return %arg0, %c0_i32, %c0_i32_0 : i32, i32, i32
  }
  func.func @transform_3(%arg0: i32) -> (i32, i32, i32) {
    %c0_i32 = arith.constant 0 : i32
    %c0_i32_0 = arith.constant 0 : i32
    %c0_i32_1 = arith.constant 0 : i32
    return %arg0, %c0_i32, %c0_i32_0 : i32, i32, i32
  }
  func.func @transform_4(%arg0: i32) -> (i32, i32, i32) {
    %c0_i32 = arith.constant 0 : i32
    %c0_i32_0 = arith.constant 0 : i32
    %c0_i32_1 = arith.constant 0 : i32
    return %arg0, %c0_i32, %c0_i32_0 : i32, i32, i32
  }
  func.func @transform_5(%arg0: i32) -> (i32, i32, i32) {
    %c0_i32 = arith.constant 0 : i32
    %c0_i32_0 = arith.constant 0 : i32
    %c0_i32_1 = arith.constant 0 : i32
    return %arg0, %c0_i32, %c0_i32_0 : i32, i32, i32
  }
  func.func @transform_6(%arg0: i32) -> (i32, i32, i32) {
    %c0_i32 = arith.constant 0 : i32
    %c0_i32_0 = arith.constant 0 : i32
    %c0_i32_1 = arith.constant 0 : i32
    return %arg0, %c0_i32, %c0_i32_0 : i32, i32, i32
  }
  func.func @transform_7(%arg0: i32) -> (i32, i32, i32) {
    %c0_i32 = arith.constant 0 : i32
    %c0_i32_0 = arith.constant 0 : i32
    %c0_i32_1 = arith.constant 0 : i32
    return %arg0, %c0_i32, %c0_i32_0 : i32, i32, i32
  }
  func.func @transform_8(%arg0: i32) -> (i32, i32, i32) {
    %c0_i32 = arith.constant 0 : i32
    %c0_i32_0 = arith.constant 0 : i32
    %c0_i32_1 = arith.constant 0 : i32
    return %arg0, %c0_i32, %c0_i32_0 : i32, i32, i32
  }
  func.func @transform_9(%arg0: i32) -> (i32, i32, i32) {
    %c0_i32 = arith.constant 0 : i32
    %c0_i32_0 = arith.constant 0 : i32
    %c0_i32_1 = arith.constant 0 : i32
    return %arg0, %c0_i32, %c0_i32_0 : i32, i32, i32
  }
  func.func @transform_10(%arg0: i32) -> (i32, i32, i32) {
    %c0_i32 = arith.constant 0 : i32
    %c0_i32_0 = arith.constant 0 : i32
    %c0_i32_1 = arith.constant 0 : i32
    return %arg0, %c0_i32, %c0_i32_0 : i32, i32, i32
  }
  func.func @transform_11(%arg0: i32) -> (i32, i32, i32) {
    %c0_i32 = arith.constant 0 : i32
    %c0_i32_0 = arith.constant 0 : i32
    %c0_i32_1 = arith.constant 0 : i32
    return %arg0, %c0_i32, %c0_i32_0 : i32, i32, i32
  }
  func.func @transform_12(%arg0: i32) -> (i32, i32) {
    %c0_i32 = arith.constant 0 : i32
    %c0_i32_0 = arith.constant 0 : i32
    %c0_i32_1 = arith.constant 0 : i32
    return %c0_i32, %c0_i32_0 : i32, i32
  }
}

</mosaic_0001>

<llo_original>
// kernel: ast_forward.4
$region0: #{ast_forward.4}
  #allocation0 [shape = 'u32[]', space=smem, size = 0x4, offset = 0x4, fixed_abs, tag = 'smem constant byte address 0x4 - core index']
  #allocation1 [shape = 'u32[72,128]{1,0:T(1,128)}', space=vmem, size = 0x9000, scoped, tag = 'internal scratch']
  %s0 = inlined_call_operand.vmem [shape: f32[2,64,16], index: 0, kind: input, shape index: {}]
  %s1 = inlined_call_operand.vmem [shape: f32[2,64,16], index: 1, kind: input, shape index: {}]
  %s2 = inlined_call_operand.vmem [shape: bf16[16,64], index: 2, kind: input, shape index: {}]
  %s3 = inlined_call_operand.vmem [shape: f32[2,64,64], index: 3, kind: output, shape index: {}]
  %s4 = sld [smem:[#allocation0]]
  $region45: #{ast_forward.4} parent=0
    _
  %s6 = ssub.s32 1, %s4
  %s7 = scalar_select 0, %s6, %s4
  loop: start=0, step=1, limit=4
  $region2: #{ast_forward.4} parent=0 // loop_pre_header
    _
  $region3: #{ast_forward.4} parent=0 // loop_header
    %s9 = sphi 0, %s13
    %p10 = scmp.ge.s32.totalorder %s9, 4
    %s19 = sphi 0, %s21
    %s22 = sphi 0, %s19
    %s23 = sphi 0, %s22
    %s39 = sphi 0, %s23
    %s45 = sphi 0, %s47
    %s48 = sphi 0, %s45
    %s49 = sphi 0, %s48
    %s65 = sphi 0, %s49
    %s69 = sphi 0, %s69
    %s71 = sphi 0, %s69
    %s72 = sphi 0, %s71
    %s86 = sphi 0, %s72
    %s92 = sphi 0, %s94
    %s95 = sphi 0, %s92
    %s96 = sphi 0, %s95
    %s112 = sphi 0, %s96
  $region4: #{ast_forward.4} parent=0 // loop_header_branch
    %12 = sbr.rel (%p10) target = $region8
  $region5: #{ast_forward.4} parent=0 // loop_body
    %s14 = ssub.s32 %s9, 1
    %s15 = ssub.s32 %s9, 2
    %s16 = sadd.s32 %s9, 1
    %s17 = ssub.s32 %s9, %s16
    %p18 = scmp.eq.s32.totalorder %s17, 0
    %s20 = sadd.s32 %s19, 1
    %s21 = scalar_select %p18, %s19, %s20
    %p24 = pneg %p18
    %p25 = scmp.eq.s32.totalorder %s9, 1
    %p26 = por %p24, %p25
    %p27 = scmp.ne.s32.totalorder %s19, %s22
    %p28 = scmp.eq.s32.totalorder %s9, 0
    %p29 = por %p27, %p28
    %p30 = scmp.ne.s32.totalorder %s19, %s22
    %p31 = scmp.eq.s32.totalorder %s14, 1
    %p32 = por %p30, %p31
    %p33 = scmp.ne.s32.totalorder %s22, %s23
    %p34 = scmp.eq.s32.totalorder %s14, 0
    %p35 = por %p33, %p34
    %p36 = scmp.ne.s32.totalorder %s22, %s23
    %p37 = scmp.eq.s32.totalorder %s15, 1
    %p38 = por %p36, %p37
    %p40 = scmp.ne.s32.totalorder %s23, %s39
    %p41 = scmp.eq.s32.totalorder %s15, 0
    %p42 = por %p40, %p41
    %s43 = ssub.s32 %s9, %s16
    %p44 = scmp.eq.s32.totalorder %s43, 0
    %s46 = sadd.s32 %s45, 1
    %s47 = scalar_select %p44, %s45, %s46
    %p50 = pneg %p44
    %p51 = scmp.eq.s32.totalorder %s9, 1
    %p52 = por %p50, %p51
    %p53 = scmp.ne.s32.totalorder %s45, %s48
    %p54 = scmp.eq.s32.totalorder %s9, 0
    %p55 = por %p53, %p54
    %p56 = scmp.ne.s32.totalorder %s45, %s48
    %p57 = scmp.eq.s32.totalorder %s14, 1
    %p58 = por %p56, %p57
    %p59 = scmp.ne.s32.totalorder %s48, %s49
    %p60 = scmp.eq.s32.totalorder %s14, 0
    %p61 = por %p59, %p60
    %p62 = scmp.ne.s32.totalorder %s48, %s49
    %p63 = scmp.eq.s32.totalorder %s15, 1
    %p64 = por %p62, %p63
    %p66 = scmp.ne.s32.totalorder %s49, %s65
    %p67 = scmp.eq.s32.totalorder %s15, 0
    %p68 = por %p66, %p67
    %s70 = sadd.s32 %s69, 1
    %p73 = scmp.eq.s32.totalorder %s9, 1
    %p74 = scmp.ne.s32.totalorder %s69, %s71
    %p75 = scmp.eq.s32.totalorder %s9, 0
    %p76 = por %p74, %p75
    %p77 = scmp.ne.s32.totalorder %s69, %s71
    %p78 = scmp.eq.s32.totalorder %s14, 1
    %p79 = por %p77, %p78
    %p80 = scmp.ne.s32.totalorder %s71, %s72
    %p81 = scmp.eq.s32.totalorder %s14, 0
    %p82 = por %p80, %p81
    %p83 = scmp.ne.s32.totalorder %s71, %s72
    %p84 = scmp.eq.s32.totalorder %s15, 1
    %p85 = por %p83, %p84
    %p87 = scmp.ne.s32.totalorder %s72, %s86
    %p88 = scmp.eq.s32.totalorder %s15, 0
    %p89 = por %p87, %p88
    %s90 = ssub.s32 %s9, %s16
    %p91 = scmp.eq.s32.totalorder %s90, 0
    %s93 = sadd.s32 %s92, 1
    %s94 = scalar_select %p91, %s92, %s93
    %p97 = pneg %p91
    %p98 = scmp.eq.s32.totalorder %s9, 1
    %p99 = por %p97, %p98
    %p100 = scmp.ne.s32.totalorder %s92, %s95
    %p101 = scmp.eq.s32.totalorder %s9, 0
    %p102 = por %p100, %p101
    %p103 = scmp.ne.s32.totalorder %s92, %s95
    %p104 = scmp.eq.s32.totalorder %s14, 1
    %p105 = por %p103, %p104
    %p106 = scmp.ne.s32.totalorder %s95, %s96
    %p107 = scmp.eq.s32.totalorder %s14, 0
    %p108 = por %p106, %p107
    %p109 = scmp.ne.s32.totalorder %s95, %s96
    %p110 = scmp.eq.s32.totalorder %s15, 1
    %p111 = por %p109, %p110
    %p113 = scmp.ne.s32.totalorder %s96, %s112
    %p114 = scmp.eq.s32.totalorder %s15, 0
    %p115 = por %p113, %p114
    %p116 = scmp.le.s32.totalorder 1, %s9
    %p117 = scmp.lt.s32.totalorder %s9, 3
    %p118 = pnand %p116, %p117
    %p119 = pneg %p118
    // Predicated region
    $region9: #{ast_forward.4} parent=5 // pred_check
      _
    $region10: #{ast_forward.4} parent=5 // pred_check_branch
      %121 = sbr.rel (%p118) target = $region12
    $region11: #{ast_forward.4} parent=5 // pred_region
      %s122 = ssub.s32 %s9, 1
      // Predicated region
      $region13: #{ast_forward.4} parent=11 // pred_check
        %p123 = pneg %p82
      $region14: #{ast_forward.4} parent=11 // pred_check_branch
        %125 = sbr.rel (%p123) target = $region16
      $region15: #{ast_forward.4} parent=11 // pred_region
        _
      $region16: #{ast_forward.4} parent=11 // pred_fallthru
        _
    $region12: #{ast_forward.4} parent=5 // pred_fallthru
      _
    %p126 = scmp.lt.s32.totalorder %s9, 2
    // Predicated region
    $region17: #{ast_forward.4} parent=5 // pred_check
      %p127 = pneg %p126
    $region18: #{ast_forward.4} parent=5 // pred_check_branch
      %129 = sbr.rel (%p127) target = $region20
    $region19: #{ast_forward.4} parent=5 // pred_region
      // Predicated region
      $region21: #{ast_forward.4} parent=19 // pred_check
        %p130 = pneg %p29
      $region22: #{ast_forward.4} parent=19 // pred_check_branch
        %132 = sbr.rel (%p130) target = $region24
      $region23: #{ast_forward.4} parent=19 // pred_region
        %p133 = scmp.lt.s32.totalorder %s9, 1
        %s134 = scalar_select %p133, %s9, 1
        %s135 = smul.addr %s134, 8
        %s136 = smul.addr %s135, 8
        %s137 = scalar_lea.vmem %s0, %s136
      $region24: #{ast_forward.4} parent=19 // pred_fallthru
        _
      // Predicated region
      $region25: #{ast_forward.4} parent=19 // pred_check
        %p138 = pneg %p55
      $region26: #{ast_forward.4} parent=19 // pred_check_branch
        %140 = sbr.rel (%p138) target = $region28
      $region27: #{ast_forward.4} parent=19 // pred_region
        %p141 = scmp.lt.s32.totalorder %s9, 1
        %s142 = scalar_select %p141, %s9, 1
        %s143 = smul.addr %s142, 8
        %s144 = smul.addr %s143, 8
        %s145 = scalar_lea.vmem %s1, %s144
      $region28: #{ast_forward.4} parent=19 // pred_fallthru
        _
    $region20: #{ast_forward.4} parent=5 // pred_fallthru
      _
    %p146 = scmp.le.s32.totalorder 1, %s9
    %p147 = scmp.lt.s32.totalorder %s9, 3
    %p148 = pnand %p146, %p147
    %p149 = pneg %p148
    // Predicated region
    $region29: #{ast_forward.4} parent=5 // pred_check
      _
    $region30: #{ast_forward.4} parent=5 // pred_check_branch
      %151 = sbr.rel (%p148) target = $region32
    $region31: #{ast_forward.4} parent=5 // pred_region
      %s152 = ssub.s32 %s9, 1
      %p153 = scmp.lt.s32.totalorder %s14, 1
      %s154 = scalar_select %p153, %s14, 1
      %s155 = smul.addr %s154, 8
      %s156 = smul.addr %s155, 8
      %s157 = scalar_lea.vmem %s0, %s156
      %p158 = pneg %p35
      %p159 = pneg %p32
      %p160 = scmp.lt.s32.totalorder %s14, 1
      %s161 = scalar_select %p160, %s14, 1
      %s162 = smul.addr %s161, 8
      %s163 = smul.addr %s162, 8
      %s164 = scalar_lea.vmem %s1, %s163
      %p165 = pneg %p61
      %p166 = pneg %p58
      %p167 = pneg %p82
      %p168 = pneg %p79
      %p169 = pneg %p108
      %p170 = pneg %p105
      %p171 = scmp.lt.s32.totalorder %s14, 1
      %s172 = scalar_select %p171, %s14, 1
      %s173 = smul.addr %s172, 8
      %s174 = smul.addr %s173, 8
      %s175 = scalar_lea.vmem %s3, %s174
      %p176 = scmp.lt.s32.totalorder %s14, 1
      %s177 = scalar_select %p176, %s14, 1
      %s178 = smul.addr %s177, 8
      %s179 = smul.addr %s178, 8
      %s180 = scalar_lea.vmem %s0, %s179
      %p181 = scmp.lt.s32.totalorder %s14, 1
      %s182 = scalar_select %p181, %s14, 1
      %s183 = smul.addr %s182, 8
      %s184 = smul.addr %s183, 8
      %s185 = scalar_lea.vmem %s1, %s184
      %p186 = scmp.lt.s32.totalorder %s14, 1
      %s187 = scalar_select %p186, %s14, 1
      %s188 = smul.addr %s187, 8
      %s189 = smul.addr %s188, 8
      %s190 = scalar_lea.vmem %s3, %s189
      %v192 = vld [vmem:[%s2] sm:$0xf]
      %v193 = vld [vmem:[%s2 + $0x4] sm:$0xf]
      %v194 = vld [vmem:[%s180] sm:$0xff]
      %v195 = vld [vmem:[%s180 + $0x8] sm:$0xff]
      %v196 = vld [vmem:[%s180 + $0x10] sm:$0xff]
      %v197 = vld [vmem:[%s180 + $0x18] sm:$0xff]
      %v198 = vld [vmem:[%s180 + $0x20] sm:$0xff]
      %v199 = vld [vmem:[%s180 + $0x28] sm:$0xff]
      %v200 = vld [vmem:[%s180 + $0x30] sm:$0xff]
      %v201 = vld [vmem:[%s180 + $0x38] sm:$0xff]
      %v202 = vpack.c.bf16 %v195, %v194
      %v203 = vpack.c.bf16 %v197, %v196
      %v204 = vpack.c.bf16 %v199, %v198
      %v205 = vpack.c.bf16 %v201, %v200
      %v208 = vunpack.c.l.b16 %v192
      %v209 = vunpack.c.l.b16 %v193
      %v210 = vpack.c.b16 %v209, %v208
      %vm212 = vcmask 130048
      %v214 = vsel %vm212, %v202, 0
      %v217 = vsel %vm212, %v203, 0
      %v220 = vsel %vm212, %v204, 0
      %v223 = vsel %vm212, %v205, 0
      %225 = vmatpush.bf16.msra.mxu0 0
      %226 = vmatpush.bf16.msra.mxu0 0
      %227 = vmatpush.bf16.msra.mxu0 0
      %228 = vmatpush.bf16.msra.mxu0 0
      %229 = vmatpush.bf16.msra.mxu0 0
      %230 = vmatpush.bf16.msra.mxu0 0
      %231 = vmatpush.bf16.msra.mxu0 0
      %232 = vmatpush.bf16.msra.mxu0 %v210
      %233 = vmatmul.bf16.gmra.mxu0 %v214
      %v234 = vpop.f32.mrf.mxu0
      %v235 = vadd.f32 0.0, %v234
      %v236 = vpop.f32.mrf.mxu0
      %v237 = vadd.f32 0.0, %v236
      %238 = vmatmul.bf16.gmra.mxu0 %v217
      %v239 = vpop.f32.mrf.mxu0
      %v240 = vadd.f32 0.0, %v239
      %v241 = vpop.f32.mrf.mxu0
      %v242 = vadd.f32 0.0, %v241
      %243 = vmatmul.bf16.gmra.mxu0 %v220
      %v244 = vpop.f32.mrf.mxu0
      %v245 = vadd.f32 0.0, %v244
      %v246 = vpop.f32.mrf.mxu0
      %v247 = vadd.f32 0.0, %v246
      %248 = vmatmul.bf16.gmra.mxu0 %v223
      %v249 = vpop.f32.mrf.mxu0
      %v250 = vadd.f32 0.0, %v249
      %v251 = vpop.f32.mrf.mxu0
      %v252 = vadd.f32 0.0, %v251
      %253 = vdwg.mxu0
      %v254 = vld [vmem:[%s185] sm:$0xff]
      %v255 = vld [vmem:[%s185 + $0x8] sm:$0xff]
      %v256 = vld [vmem:[%s185 + $0x10] sm:$0xff]
      %v257 = vld [vmem:[%s185 + $0x18] sm:$0xff]
      %v258 = vld [vmem:[%s185 + $0x20] sm:$0xff]
      %v259 = vld [vmem:[%s185 + $0x28] sm:$0xff]
      %v260 = vld [vmem:[%s185 + $0x30] sm:$0xff]
      %v261 = vld [vmem:[%s185 + $0x38] sm:$0xff]
      %v262 = vpack.c.bf16 %v255, %v254
      %v263 = vpack.c.bf16 %v257, %v256
      %v264 = vpack.c.bf16 %v259, %v258
      %v265 = vpack.c.bf16 %v261, %v260
      %v267 = vsel %vm212, %v262, 0
      %v270 = vsel %vm212, %v263, 0
      %v273 = vsel %vm212, %v264, 0
      %v276 = vsel %vm212, %v265, 0
      %278 = vmatpush.bf16.msra.mxu0 0
      %279 = vmatpush.bf16.msra.mxu0 0
      %280 = vmatpush.bf16.msra.mxu0 0
      %281 = vmatpush.bf16.msra.mxu0 0
      %282 = vmatpush.bf16.msra.mxu0 0
      %283 = vmatpush.bf16.msra.mxu0 0
      %284 = vmatpush.bf16.msra.mxu0 0
      %285 = vmatpush.bf16.msra.mxu0 %v210
      %286 = vmatmul.bf16.gmra.mxu0 %v267
      %v287 = vpop.f32.mrf.mxu0
      %v288 = vadd.f32 0.0, %v287
      %v289 = vpop.f32.mrf.mxu0
      %v290 = vadd.f32 0.0, %v289
      %291 = vmatmul.bf16.gmra.mxu0 %v270
      %v292 = vpop.f32.mrf.mxu0
      %v293 = vadd.f32 0.0, %v292
      %v294 = vpop.f32.mrf.mxu0
      %v295 = vadd.f32 0.0, %v294
      %296 = vmatmul.bf16.gmra.mxu0 %v273
      %v297 = vpop.f32.mrf.mxu0
      %v298 = vadd.f32 0.0, %v297
      %v299 = vpop.f32.mrf.mxu0
      %v300 = vadd.f32 0.0, %v299
      %301 = vmatmul.bf16.gmra.mxu0 %v276
      %v302 = vpop.f32.mrf.mxu0
      %v303 = vadd.f32 0.0, %v302
      %v304 = vpop.f32.mrf.mxu0
      %v305 = vadd.f32 0.0, %v304
      %306 = vdwg.mxu0
      %vm315 = vcmask 1040384
      %v316 = vrot.slane %v288, 7
      %v317 = vrot.slane %v290, 7
      %v318 = vsel %vm315, %v316, %v317
      %v319 = vrot.slane %v293, 7
      %v320 = vsel %vm315, %v317, %v319
      %v321 = vrot.slane %v295, 7
      %v322 = vsel %vm315, %v319, %v321
      %v323 = vrot.slane %v298, 7
      %v324 = vsel %vm315, %v321, %v323
      %v325 = vrot.slane %v300, 7
      %v326 = vsel %vm315, %v323, %v325
      %v327 = vrot.slane %v303, 7
      %v328 = vsel %vm315, %v325, %v327
      %v329 = vrot.slane %v305, 7
      %v330 = vsel %vm315, %v327, %v329
      %v339 = vsel %vm315, -1e+30, %v316
      %v340 = vmax.f32 %v235, %v288
      %v341 = vmax.f32 %v237, %v290
      %v342 = vmax.f32 %v240, %v293
      %v343 = vmax.f32 %v242, %v295
      %v344 = vmax.f32 %v245, %v298
      %v345 = vmax.f32 %v247, %v300
      %v346 = vmax.f32 %v250, %v303
      %v347 = vmax.f32 %v252, %v305
      %v348 = vmax.f32 %v340, %v339
      %v349 = vmax.f32 %v341, %v318
      %v350 = vmax.f32 %v342, %v320
      %v351 = vmax.f32 %v343, %v322
      %v352 = vmax.f32 %v344, %v324
      %v353 = vmax.f32 %v345, %v326
      %v354 = vmax.f32 %v346, %v328
      %v355 = vmax.f32 %v347, %v330
      %vm356 = vcmask 523264
      %357 = vst.msk [vmem:[%s190] sm:$0xff] %vm356, %v348
      %358 = vst.msk [vmem:[%s190 + $0x8] sm:$0xff] %vm356, %v349
      %359 = vst.msk [vmem:[%s190 + $0x10] sm:$0xff] %vm356, %v350
      %360 = vst.msk [vmem:[%s190 + $0x18] sm:$0xff] %vm356, %v351
      %361 = vst.msk [vmem:[%s190 + $0x20] sm:$0xff] %vm356, %v352
      %362 = vst.msk [vmem:[%s190 + $0x28] sm:$0xff] %vm356, %v353
      %363 = vst.msk [vmem:[%s190 + $0x30] sm:$0xff] %vm356, %v354
      %364 = vst.msk [vmem:[%s190 + $0x38] sm:$0xff] %vm356, %v355
      %p365 = scmp.lt.s32.totalorder %s14, 1
      %s366 = scalar_select %p365, %s14, 1
      %s367 = smul.addr %s366, 8
      %s368 = smul.addr %s367, 8
      %s369 = scalar_lea.vmem %s3, %s368
      // Predicated region
      $region33: #{ast_forward.4} parent=31 // pred_check
        %p370 = pneg %p105
      $region34: #{ast_forward.4} parent=31 // pred_check_branch
        %372 = sbr.rel (%p370) target = $region36
      $region35: #{ast_forward.4} parent=31 // pred_region
        _
      $region36: #{ast_forward.4} parent=31 // pred_fallthru
        _
    $region32: #{ast_forward.4} parent=5 // pred_fallthru
      _
    %p373 = scmp.le.s32.totalorder 2, %s9
    // Predicated region
    $region37: #{ast_forward.4} parent=5 // pred_check
      %p374 = pneg %p373
    $region38: #{ast_forward.4} parent=5 // pred_check_branch
      %376 = sbr.rel (%p374) target = $region40
    $region39: #{ast_forward.4} parent=5 // pred_region
      %s377 = ssub.s32 %s9, 2
      // Predicated region
      $region41: #{ast_forward.4} parent=39 // pred_check
        %p378 = pneg %p111
      $region42: #{ast_forward.4} parent=39 // pred_check_branch
        %380 = sbr.rel (%p378) target = $region44
      $region43: #{ast_forward.4} parent=39 // pred_region
        %p381 = scmp.lt.s32.totalorder %s15, 1
        %s382 = scalar_select %p381, %s15, 1
        %s383 = smul.addr %s382, 8
        %s384 = smul.addr %s383, 8
        %s385 = scalar_lea.vmem %s3, %s384
      $region44: #{ast_forward.4} parent=39 // pred_fallthru
        _
    $region40: #{ast_forward.4} parent=5 // pred_fallthru
      _
  $region6: #{ast_forward.4} parent=0 // loop_footer
    %s13 = sadd.s32 1, %s9
  $region7: #{ast_forward.4} parent=0 // loop_footer_branch
    %8 = sbr.rel target = $region3
  $region8: #{ast_forward.4} parent=0 // loop_exit
    _

// kernel: ast_forward.5
$region0: #{ast_forward.5}
  #allocation0 [shape = 'u32[]', space=smem, size = 0x4, offset = 0x4, fixed_abs, tag = 'smem constant byte address 0x4 - core index']
  #allocation1 [shape = 'u32[72,128]{1,0:T(1,128)}', space=vmem, size = 0x9000, scoped, tag = 'internal scratch']
  %s0 = inlined_call_operand.vmem [shape: f32[32,256], index: 0, kind: input, shape index: {}]
  %s1 = inlined_call_operand.vmem [shape: bf16[256,128], index: 1, kind: input, shape index: {}]
  %s2 = inlined_call_operand.vmem [shape: f32[1,128], index: 2, kind: input, shape index: {}]
  %s3 = inlined_call_operand.vmem [shape: f32[32,128], index: 3, kind: output, shape index: {}]
  %s4 = sld [smem:[#allocation0]]
  $region22: #{ast_forward.5} parent=0
    _
  %s6 = ssub.s32 1, %s4
  %s7 = scalar_select 0, %s6, %s4
  // Predicated region
  $region2: #{ast_forward.5} parent=0 // pred_check
    _
  $region3: #{ast_forward.5} parent=0 // pred_check_branch
    %9 = sbr.rel (0) target = $region5
  $region4: #{ast_forward.5} parent=0 // pred_region
    _
  $region5: #{ast_forward.5} parent=0 // pred_fallthru
    _
  // Predicated region
  $region6: #{ast_forward.5} parent=0 // pred_check
    _
  $region7: #{ast_forward.5} parent=0 // pred_check_branch
    %11 = sbr.rel (0) target = $region9
  $region8: #{ast_forward.5} parent=0 // pred_region
    _
  $region9: #{ast_forward.5} parent=0 // pred_fallthru
    _
  // Predicated region
  $region10: #{ast_forward.5} parent=0 // pred_check
    _
  $region11: #{ast_forward.5} parent=0 // pred_check_branch
    %13 = sbr.rel (0) target = $region13
  $region12: #{ast_forward.5} parent=0 // pred_region
    _
  $region13: #{ast_forward.5} parent=0 // pred_fallthru
    _
  %v14 = vld [vmem:[%s0] sm:$0xff]
  %v15 = vld [vmem:[%s0 + $0x8] sm:$0xff]
  %v16 = vld [vmem:[%s0 + $0x10] sm:$0xff]
  %v17 = vld [vmem:[%s0 + $0x18] sm:$0xff]
  %v18 = vld [vmem:[%s0 + $0x20] sm:$0xff]
  %v19 = vld [vmem:[%s0 + $0x28] sm:$0xff]
  %v20 = vld [vmem:[%s0 + $0x30] sm:$0xff]
  %v21 = vld [vmem:[%s0 + $0x38] sm:$0xff]
  %v22 = vpack.c.bf16 %v16, %v14
  %v23 = vpack.c.bf16 %v17, %v15
  %v24 = vpack.c.bf16 %v20, %v18
  %v25 = vpack.c.bf16 %v21, %v19
  %v26 = vld [vmem:[%s1] sm:$0xf]
  %v27 = vld [vmem:[%s1 + $0x4] sm:$0xf]
  %v28 = vld [vmem:[%s1 + $0x8] sm:$0xf]
  %v29 = vld [vmem:[%s1 + $0xc] sm:$0xf]
  %v30 = vld [vmem:[%s1 + $0x10] sm:$0xf]
  %v31 = vld [vmem:[%s1 + $0x14] sm:$0xf]
  %v32 = vld [vmem:[%s1 + $0x18] sm:$0xf]
  %v33 = vld [vmem:[%s1 + $0x1c] sm:$0xf]
  %v34 = vld [vmem:[%s1 + $0x20] sm:$0xf]
  %v35 = vld [vmem:[%s1 + $0x24] sm:$0xf]
  %v36 = vld [vmem:[%s1 + $0x28] sm:$0xf]
  %v37 = vld [vmem:[%s1 + $0x2c] sm:$0xf]
  %v38 = vld [vmem:[%s1 + $0x30] sm:$0xf]
  %v39 = vld [vmem:[%s1 + $0x34] sm:$0xf]
  %v40 = vld [vmem:[%s1 + $0x38] sm:$0xf]
  %v41 = vld [vmem:[%s1 + $0x3c] sm:$0xf]
  %v42 = vld [vmem:[%s1 + $0x40] sm:$0xf]
  %v43 = vld [vmem:[%s1 + $0x44] sm:$0xf]
  %v44 = vld [vmem:[%s1 + $0x48] sm:$0xf]
  %v45 = vld [vmem:[%s1 + $0x4c] sm:$0xf]
  %v46 = vld [vmem:[%s1 + $0x50] sm:$0xf]
  %v47 = vld [vmem:[%s1 + $0x54] sm:$0xf]
  %v48 = vld [vmem:[%s1 + $0x58] sm:$0xf]
  %v49 = vld [vmem:[%s1 + $0x5c] sm:$0xf]
  %v50 = vld [vmem:[%s1 + $0x60] sm:$0xf]
  %v51 = vld [vmem:[%s1 + $0x64] sm:$0xf]
  %v52 = vld [vmem:[%s1 + $0x68] sm:$0xf]
  %v53 = vld [vmem:[%s1 + $0x6c] sm:$0xf]
  %v54 = vld [vmem:[%s1 + $0x70] sm:$0xf]
  %v55 = vld [vmem:[%s1 + $0x74] sm:$0xf]
  %v56 = vld [vmem:[%s1 + $0x78] sm:$0xf]
  %v57 = vld [vmem:[%s1 + $0x7c] sm:$0xf]
  %v58 = vld [vmem:[%s2] sm:$0x1]
  %v60 = vperm.slane %v58, 0
  %v94 = vunpack.c.l.b16 %v26
  %v95 = vunpack.c.l.b16 %v27
  %v96 = vunpack.c.l.b16 %v28
  %v97 = vunpack.c.l.b16 %v29
  %v98 = vunpack.c.l.b16 %v30
  %v99 = vunpack.c.l.b16 %v31
  %v100 = vunpack.c.l.b16 %v32
  %v101 = vunpack.c.l.b16 %v33
  %v102 = vunpack.c.l.b16 %v34
  %v103 = vunpack.c.l.b16 %v35
  %v104 = vunpack.c.l.b16 %v36
  %v105 = vunpack.c.l.b16 %v37
  %v106 = vunpack.c.l.b16 %v38
  %v107 = vunpack.c.l.b16 %v39
  %v108 = vunpack.c.l.b16 %v40
  %v109 = vunpack.c.l.b16 %v41
  %v110 = vunpack.c.l.b16 %v42
  %v111 = vunpack.c.l.b16 %v43
  %v112 = vunpack.c.l.b16 %v44
  %v113 = vunpack.c.l.b16 %v45
  %v114 = vunpack.c.l.b16 %v46
  %v115 = vunpack.c.l.b16 %v47
  %v116 = vunpack.c.l.b16 %v48
  %v117 = vunpack.c.l.b16 %v49
  %v118 = vunpack.c.l.b16 %v50
  %v119 = vunpack.c.l.b16 %v51
  %v120 = vunpack.c.l.b16 %v52
  %v121 = vunpack.c.l.b16 %v53
  %v122 = vunpack.c.l.b16 %v54
  %v123 = vunpack.c.l.b16 %v55
  %v124 = vunpack.c.l.b16 %v56
  %v125 = vunpack.c.l.b16 %v57
  %v126 = vpack.c.b16 %v95, %v94
  %v127 = vpack.c.b16 %v97, %v96
  %v128 = vpack.c.b16 %v99, %v98
  %v129 = vpack.c.b16 %v101, %v100
  %v130 = vpack.c.b16 %v103, %v102
  %v131 = vpack.c.b16 %v105, %v104
  %v132 = vpack.c.b16 %v107, %v106
  %v133 = vpack.c.b16 %v109, %v108
  %v134 = vpack.c.b16 %v111, %v110
  %v135 = vpack.c.b16 %v113, %v112
  %v136 = vpack.c.b16 %v115, %v114
  %v137 = vpack.c.b16 %v117, %v116
  %v138 = vpack.c.b16 %v119, %v118
  %v139 = vpack.c.b16 %v121, %v120
  %v140 = vpack.c.b16 %v123, %v122
  %v141 = vpack.c.b16 %v125, %v124
  %158 = vmatpush.bf16.msra.mxu0 %v133
  %159 = vmatpush.bf16.msra.mxu0 %v132
  %160 = vmatpush.bf16.msra.mxu0 %v131
  %161 = vmatpush.bf16.msra.mxu0 %v130
  %162 = vmatpush.bf16.msra.mxu0 %v129
  %163 = vmatpush.bf16.msra.mxu0 %v128
  %164 = vmatpush.bf16.msra.mxu0 %v127
  %165 = vmatpush.bf16.msra.mxu0 %v126
  %166 = vmatmul.bf16.gmra.mxu0 %v22
  %v167 = vpop.f32.mrf.mxu0
  %v168 = vadd.f32 %v60, %v167
  %v169 = vpop.f32.mrf.mxu0
  %v170 = vadd.f32 %v60, %v169
  %171 = vmatmul.bf16.gmra.mxu0 %v24
  %v172 = vpop.f32.mrf.mxu0
  %v173 = vadd.f32 %v60, %v172
  %v174 = vpop.f32.mrf.mxu0
  %v175 = vadd.f32 %v60, %v174
  %176 = vdwg.mxu0
  %177 = vmatpush.bf16.msra.mxu0 %v141
  %178 = vmatpush.bf16.msra.mxu0 %v140
  %179 = vmatpush.bf16.msra.mxu0 %v139
  %180 = vmatpush.bf16.msra.mxu0 %v138
  %181 = vmatpush.bf16.msra.mxu0 %v137
  %182 = vmatpush.bf16.msra.mxu0 %v136
  %183 = vmatpush.bf16.msra.mxu0 %v135
  %184 = vmatpush.bf16.msra.mxu0 %v134
  %185 = vmatmul.bf16.gmra.mxu0 %v23
  %v186 = vpop.f32.mrf.mxu0
  %v187 = vadd.f32 %v168, %v186
  %v188 = vpop.f32.mrf.mxu0
  %v189 = vadd.f32 %v170, %v188
  %190 = vmatmul.bf16.gmra.mxu0 %v25
  %v191 = vpop.f32.mrf.mxu0
  %v192 = vadd.f32 %v173, %v191
  %v193 = vpop.f32.mrf.mxu0
  %v194 = vadd.f32 %v175, %v193
  %195 = vdwg.mxu0
  %196 = vst [vmem:[%s3] sm:$0xff] %v187
  %197 = vst [vmem:[%s3 + $0x8] sm:$0xff] %v189
  %198 = vst [vmem:[%s3 + $0x10] sm:$0xff] %v192
  %199 = vst [vmem:[%s3 + $0x18] sm:$0xff] %v194
  // Predicated region
  $region14: #{ast_forward.5} parent=0 // pred_check
    _
  $region15: #{ast_forward.5} parent=0 // pred_check_branch
    %201 = sbr.rel (0) target = $region17
  $region16: #{ast_forward.5} parent=0 // pred_region
    _
  $region17: #{ast_forward.5} parent=0 // pred_fallthru
    _
  // Predicated region
  $region18: #{ast_forward.5} parent=0 // pred_check
    _
  $region19: #{ast_forward.5} parent=0 // pred_check_branch
    %203 = sbr.rel (0) target = $region21
  $region20: #{ast_forward.5} parent=0 // pred_region
    _
  $region21: #{ast_forward.5} parent=0 // pred_fallthru
    _

// kernel: ast_forward.7
$region0: #{ast_forward.7}
  #allocation0 [shape = 'u32[]', space=smem, size = 0x4, offset = 0x4, fixed_abs, tag = 'smem constant byte address 0x4 - core index']
  #allocation1 [shape = 'u32[72,128]{1,0:T(1,128)}', space=vmem, size = 0x9000, scoped, tag = 'internal scratch']
  %s0 = inlined_call_operand.vmem [shape: f32[2,128], index: 0, kind: input, shape index: {}]
  %s1 = inlined_call_operand.vmem [shape: f32[1,128], index: 1, kind: input, shape index: {}]
  %s2 = inlined_call_operand.vmem [shape: f32[1,128], index: 2, kind: input, shape index: {}]
  %s3 = inlined_call_operand.vmem [shape: f32[1,128], index: 3, kind: input, shape index: {}]
  %s4 = inlined_call_operand.vmem [shape: f32[1,128], index: 4, kind: input, shape index: {}]
  %s5 = inlined_call_operand.vmem [shape: bf16[128,128], index: 5, kind: input, shape index: {}]
  %s6 = inlined_call_operand.vmem [shape: f32[1,128], index: 6, kind: input, shape index: {}]
  %s7 = inlined_call_operand.hbm [shape: f32[2,128], index: 7, kind: output, shape index: {}]
  %s8 = sld [smem:[#allocation0]]
  $region38: #{ast_forward.7} parent=0
    _
  %s10 = ssub.s32 1, %s8
  %s11 = scalar_select 0, %s10, %s8
  $region1: #{ast_forward.7} parent=0
    #allocation2 [shape = 'u8[1024]{0}', space=vmem, size = 0x400, scoped, tag = 'output window, operand 0, single buffered']
    #allocation3 [shape = 's32[1]{0}', space=sflag, size = 0x4, scoped, tag = 'scoped memory for ast_forward.7']
    %12 = vsyncpa [#allocation3], 0
    // Predicated region
    $region2: #{ast_forward.7} parent=1 // pred_check
      _
    $region3: #{ast_forward.7} parent=1 // pred_check_branch
      %14 = sbr.rel (0) target = $region5
    $region4: #{ast_forward.7} parent=1 // pred_region
      _
    $region5: #{ast_forward.7} parent=1 // pred_fallthru
      _
    // Predicated region
    $region6: #{ast_forward.7} parent=1 // pred_check
      _
    $region7: #{ast_forward.7} parent=1 // pred_check_branch
      %16 = sbr.rel (0) target = $region9
    $region8: #{ast_forward.7} parent=1 // pred_region
      _
    $region9: #{ast_forward.7} parent=1 // pred_fallthru
      _
    // Predicated region
    $region10: #{ast_forward.7} parent=1 // pred_check
      _
    $region11: #{ast_forward.7} parent=1 // pred_check_branch
      %18 = sbr.rel (0) target = $region13
    $region12: #{ast_forward.7} parent=1 // pred_region
      _
    $region13: #{ast_forward.7} parent=1 // pred_fallthru
      _
    // Predicated region
    $region14: #{ast_forward.7} parent=1 // pred_check
      _
    $region15: #{ast_forward.7} parent=1 // pred_check_branch
      %20 = sbr.rel (0) target = $region17
    $region16: #{ast_forward.7} parent=1 // pred_region
      _
    $region17: #{ast_forward.7} parent=1 // pred_fallthru
      _
    // Predicated region
    $region18: #{ast_forward.7} parent=1 // pred_check
      _
    $region19: #{ast_forward.7} parent=1 // pred_check_branch
      %22 = sbr.rel (0) target = $region21
    $region20: #{ast_forward.7} parent=1 // pred_region
      _
    $region21: #{ast_forward.7} parent=1 // pred_fallthru
      _
    // Predicated region
    $region22: #{ast_forward.7} parent=1 // pred_check
      _
    $region23: #{ast_forward.7} parent=1 // pred_check_branch
      %24 = sbr.rel (0) target = $region25
    $region24: #{ast_forward.7} parent=1 // pred_region
      _
    $region25: #{ast_forward.7} parent=1 // pred_fallthru
      _
    // Predicated region
    $region26: #{ast_forward.7} parent=1 // pred_check
      _
    $region27: #{ast_forward.7} parent=1 // pred_check_branch
      %26 = sbr.rel (0) target = $region29
    $region28: #{ast_forward.7} parent=1 // pred_region
      _
    $region29: #{ast_forward.7} parent=1 // pred_fallthru
      _
    %v27 = vld [vmem:[%s0] sm:$0x3]
    %v28 = vld [vmem:[%s1] sm:$0x1]
    %v29 = vld [vmem:[%s2] sm:$0x1]
    %vm30 = vcmask 1041408
    %v31 = vsel %vm30, %v27, 0.0
    %32 = vadd.xlane.f32.xlu0 %v31
    %v33 = vpop.xlane.xlu0 %32
    %v34 = vrcp.pop 128.0
    %v35 = vmul.f32 128.0, %v34
    %v36 = vsub.f32 1.0, %v35
    %v37 = vmul.f32 %v34, %v36
    %v38 = vadd.f32 %v34, %v37
    %vm39 = vweird.f32 %v34
    %v40 = vsel %vm39, %v34, %v38
    %v41 = vmul.f32 %v33, %v40
    %v42 = vsub.f32 %v27, %v41
    %v43 = vmul.f32 %v42, %v42
    %v44 = vsel %vm30, %v43, 0.0
    %45 = vadd.xlane.f32.xlu0 %v44
    %v46 = vpop.xlane.xlu0 %45
    %v47 = vmul.f32 %v46, %v40
    %v48 = vadd.f32 %v47, 1e-05
    %v49 = vrsqrt.pop %v48
    %v50 = vmul.f32 %v49, %v48
    %v51 = vmul.f32 %v50, %v49
    %v52 = vmul.f32 0.5, %v51
    %v53 = vsub.f32 1.5, %v52
    %v54 = vmul.f32 %v49, %v53
    %vm55 = vweird.f32 %v48
    %vm56 = vweird.f32 %v49
    %vm57 = vmor %vm55, %vm56
    %v58 = vsel %vm57, %v49, %v54
    %v59 = vmul.f32 %v42, %v58
    %v61 = vperm.slane %v28, 0
    %v63 = vmul.f32 %v59, %v61
    %v65 = vperm.slane %v29, 0
    %v67 = vadd.f32 %v63, %v65
    %v68 = vld [vmem:[%s3] sm:$0x1]
    %v69 = vld [vmem:[%s4] sm:$0x1]
    %v70 = vsel %vm30, %v67, 0.0
    %71 = vadd.xlane.f32.xlu0 %v70
    %v72 = vpop.xlane.xlu0 %71
    %v73 = vmul.f32 %v72, %v40
    %v74 = vsub.f32 %v67, %v73
    %v75 = vmul.f32 %v74, %v74
    %v76 = vsel %vm30, %v75, 0.0
    %77 = vadd.xlane.f32.xlu0 %v76
    %v78 = vpop.xlane.xlu0 %77
    %v79 = vmul.f32 %v78, %v40
    %v80 = vadd.f32 %v79, 1e-05
    %v81 = vrsqrt.pop %v80
    %v82 = vmul.f32 %v81, %v80
    %v83 = vmul.f32 %v82, %v81
    %v84 = vmul.f32 0.5, %v83
    %v85 = vsub.f32 1.5, %v84
    %v86 = vmul.f32 %v81, %v85
    %vm87 = vweird.f32 %v80
    %vm88 = vweird.f32 %v81
    %vm89 = vmor %vm87, %vm88
    %v90 = vsel %vm89, %v81, %v86
    %v91 = vmul.f32 %v74, %v90
    %v93 = vperm.slane %v68, 0
    %v95 = vmul.f32 %v91, %v93
    %v97 = vperm.slane %v69, 0
    %v99 = vadd.f32 %v95, %v97
    %v100 = vpack.c.bf16 %v99, %v99
    %v101 = vld [vmem:[%s5] sm:$0xf]
    %v102 = vld [vmem:[%s5 + $0x4] sm:$0xf]
    %v103 = vld [vmem:[%s5 + $0x8] sm:$0xf]
    %v104 = vld [vmem:[%s5 + $0xc] sm:$0xf]
    %v105 = vld [vmem:[%s5 + $0x10] sm:$0xf]
    %v106 = vld [vmem:[%s5 + $0x14] sm:$0xf]
    %v107 = vld [vmem:[%s5 + $0x18] sm:$0xf]
    %v108 = vld [vmem:[%s5 + $0x1c] sm:$0xf]
    %v109 = vld [vmem:[%s5 + $0x20] sm:$0xf]
    %v110 = vld [vmem:[%s5 + $0x24] sm:$0xf]
    %v111 = vld [vmem:[%s5 + $0x28] sm:$0xf]
    %v112 = vld [vmem:[%s5 + $0x2c] sm:$0xf]
    %v113 = vld [vmem:[%s5 + $0x30] sm:$0xf]
    %v114 = vld [vmem:[%s5 + $0x34] sm:$0xf]
    %v115 = vld [vmem:[%s5 + $0x38] sm:$0xf]
    %v116 = vld [vmem:[%s5 + $0x3c] sm:$0xf]
    %v117 = vld [vmem:[%s6] sm:$0x1]
    %v119 = vperm.slane %v117, 0
    %v137 = vunpack.c.l.b16 %v101
    %v138 = vunpack.c.l.b16 %v102
    %v139 = vunpack.c.l.b16 %v103
    %v140 = vunpack.c.l.b16 %v104
    %v141 = vunpack.c.l.b16 %v105
    %v142 = vunpack.c.l.b16 %v106
    %v143 = vunpack.c.l.b16 %v107
    %v144 = vunpack.c.l.b16 %v108
    %v145 = vunpack.c.l.b16 %v109
    %v146 = vunpack.c.l.b16 %v110
    %v147 = vunpack.c.l.b16 %v111
    %v148 = vunpack.c.l.b16 %v112
    %v149 = vunpack.c.l.b16 %v113
    %v150 = vunpack.c.l.b16 %v114
    %v151 = vunpack.c.l.b16 %v115
    %v152 = vunpack.c.l.b16 %v116
    %v153 = vpack.c.b16 %v138, %v137
    %v154 = vpack.c.b16 %v140, %v139
    %v155 = vpack.c.b16 %v142, %v141
    %v156 = vpack.c.b16 %v144, %v143
    %v157 = vpack.c.b16 %v146, %v145
    %v158 = vpack.c.b16 %v148, %v147
    %v159 = vpack.c.b16 %v150, %v149
    %v160 = vpack.c.b16 %v152, %v151
    %169 = vmatpush.bf16.msra.mxu0 %v160
    %170 = vmatpush.bf16.msra.mxu0 %v159
    %171 = vmatpush.bf16.msra.mxu0 %v158
    %172 = vmatpush.bf16.msra.mxu0 %v157
    %173 = vmatpush.bf16.msra.mxu0 %v156
    %174 = vmatpush.bf16.msra.mxu0 %v155
    %175 = vmatpush.bf16.msra.mxu0 %v154
    %176 = vmatpush.bf16.msra.mxu0 %v153
    %177 = vmatmul.bf16.gmra.mxu0 %v100
    %v178 = vpop.f32.mrf.mxu0
    %v179 = vadd.f32 %v119, %v178
    %v180 = vpop.f32.mrf.mxu0
    %181 = vdwg.mxu0
    %182 = vst [vmem:[#allocation2] sm:$0x3] %v179
    // Predicated region
    $region30: #{ast_forward.7} parent=1 // pred_check
      _
    $region31: #{ast_forward.7} parent=1 // pred_check_branch
      %184 = sbr.rel (0) target = $region33
    $region32: #{ast_forward.7} parent=1 // pred_region
      %186 = vsyncadd [#allocation3], 0
      %s188 = sshll.u32 [#allocation2], 4
      %s189 = int_to_ptr.vmem [resolvable:$true] %s188
      %s190 = sshll.u32 %s7, 4
      %s191 = int_to_ptr.hbm [resolvable:$true] %s190
      %193 = dma.vmem_to_hbm [thread:$0]  %s189, 32, %s191, [#allocation3]
    $region33: #{ast_forward.7} parent=1 // pred_fallthru
      _
    // Predicated region
    $region34: #{ast_forward.7} parent=1 // pred_check
      _
    $region35: #{ast_forward.7} parent=1 // pred_check_branch
      %195 = sbr.rel (0) target = $region37
    $region36: #{ast_forward.7} parent=1 // pred_region
      %197 = dma.done [#allocation3], 32
    $region37: #{ast_forward.7} parent=1 // pred_fallthru
      _
    %198 = vsyncpa [#allocation3], 1

// kernel: ast_forward.6
$region0: #{ast_forward.6}
  #allocation0 [shape = 'u32[]', space=smem, size = 0x4, offset = 0x4, fixed_abs, tag = 'smem constant byte address 0x4 - core index']
  #allocation1 [shape = 'u32[72,128]{1,0:T(1,128)}', space=vmem, size = 0x9000, scoped, tag = 'internal scratch']
  %s0 = inlined_call_operand.vmem [shape: f32[48,128], index: 0, kind: input, shape index: {}]
  %s1 = inlined_call_operand.vmem [shape: f32[2,1,128], index: 1, kind: input, shape index: {}]
  %s2 = inlined_call_operand.vmem [shape: f32[2,1,128], index: 2, kind: input, shape index: {}]
  %s3 = inlined_call_operand.vmem [shape: bf16[2,128,384], index: 3, kind: input, shape index: {}]
  %s4 = inlined_call_operand.vmem [shape: bf16[2,128,128], index: 4, kind: input, shape index: {}]
  %s5 = inlined_call_operand.vmem [shape: f32[2,1,128], index: 5, kind: input, shape index: {}]
  %s6 = inlined_call_operand.vmem [shape: f32[2,1,128], index: 6, kind: input, shape index: {}]
  %s7 = inlined_call_operand.vmem [shape: f32[2,1,128], index: 7, kind: input, shape index: {}]
  %s8 = inlined_call_operand.vmem [shape: bf16[2,128,512], index: 8, kind: input, shape index: {}]
  %s9 = inlined_call_operand.vmem [shape: f32[2,1,512], index: 9, kind: input, shape index: {}]
  %s10 = inlined_call_operand.vmem [shape: bf16[2,512,128], index: 10, kind: input, shape index: {}]
  %s11 = inlined_call_operand.vmem [shape: f32[2,1,128], index: 11, kind: input, shape index: {}]
  %s12 = inlined_call_operand.vmem [shape: f32[48,128], index: 12, kind: output, shape index: {}]
  %s13 = sld [smem:[#allocation0]]
  $region85: #{ast_forward.6} parent=0
    _
  %s15 = ssub.s32 1, %s13
  %s16 = scalar_select 0, %s15, %s13
  loop: start=0, step=1, limit=4
  $region2: #{ast_forward.6} parent=0 // loop_pre_header
    _
  $region3: #{ast_forward.6} parent=0 // loop_header
    %s18 = sphi 0, %s22
    %p19 = scmp.ge.s32.totalorder %s18, 4
    %s26 = sphi 0, %s26
    %s28 = sphi 0, %s26
    %s29 = sphi 0, %s28
    %s43 = sphi 0, %s29
    %s49 = sphi 0, %s51
    %s52 = sphi 0, %s49
    %s53 = sphi 0, %s52
    %s69 = sphi 0, %s53
    %s75 = sphi 0, %s77
    %s78 = sphi 0, %s75
    %s79 = sphi 0, %s78
    %s95 = sphi 0, %s79
    %s101 = sphi 0, %s103
    %s104 = sphi 0, %s101
    %s105 = sphi 0, %s104
    %s121 = sphi 0, %s105
    %s127 = sphi 0, %s129
    %s130 = sphi 0, %s127
    %s131 = sphi 0, %s130
    %s147 = sphi 0, %s131
    %s153 = sphi 0, %s155
    %s156 = sphi 0, %s153
    %s157 = sphi 0, %s156
    %s173 = sphi 0, %s157
    %s179 = sphi 0, %s181
    %s182 = sphi 0, %s179
    %s183 = sphi 0, %s182
    %s199 = sphi 0, %s183
    %s205 = sphi 0, %s207
    %s208 = sphi 0, %s205
    %s209 = sphi 0, %s208
    %s225 = sphi 0, %s209
    %s231 = sphi 0, %s233
    %s234 = sphi 0, %s231
    %s235 = sphi 0, %s234
    %s251 = sphi 0, %s235
    %s257 = sphi 0, %s259
    %s260 = sphi 0, %s257
    %s261 = sphi 0, %s260
    %s277 = sphi 0, %s261
    %s283 = sphi 0, %s285
    %s286 = sphi 0, %s283
    %s287 = sphi 0, %s286
    %s303 = sphi 0, %s287
    %s309 = sphi 0, %s311
    %s312 = sphi 0, %s309
    %s313 = sphi 0, %s312
    %s329 = sphi 0, %s313
    %s333 = sphi 0, %s333
    %s335 = sphi 0, %s333
    %s336 = sphi 0, %s335
    %s350 = sphi 0, %s336
  $region4: #{ast_forward.6} parent=0 // loop_header_branch
    %21 = sbr.rel (%p19) target = $region8
  $region5: #{ast_forward.6} parent=0 // loop_body
    %s23 = ssub.s32 %s18, 1
    %s24 = ssub.s32 %s18, 2
    %s25 = sadd.s32 %s18, 1
    %s27 = sadd.s32 %s26, 1
    %p30 = scmp.eq.s32.totalorder %s18, 1
    %p31 = scmp.ne.s32.totalorder %s26, %s28
    %p32 = scmp.eq.s32.totalorder %s18, 0
    %p33 = por %p31, %p32
    %p34 = scmp.ne.s32.totalorder %s26, %s28
    %p35 = scmp.eq.s32.totalorder %s23, 1
    %p36 = por %p34, %p35
    %p37 = scmp.ne.s32.totalorder %s28, %s29
    %p38 = scmp.eq.s32.totalorder %s23, 0
    %p39 = por %p37, %p38
    %p40 = scmp.ne.s32.totalorder %s28, %s29
    %p41 = scmp.eq.s32.totalorder %s24, 1
    %p42 = por %p40, %p41
    %p44 = scmp.ne.s32.totalorder %s29, %s43
    %p45 = scmp.eq.s32.totalorder %s24, 0
    %p46 = por %p44, %p45
    %s47 = ssub.s32 %s18, %s25
    %p48 = scmp.eq.s32.totalorder %s47, 0
    %s50 = sadd.s32 %s49, 1
    %s51 = scalar_select %p48, %s49, %s50
    %p54 = pneg %p48
    %p55 = scmp.eq.s32.totalorder %s18, 1
    %p56 = por %p54, %p55
    %p57 = scmp.ne.s32.totalorder %s49, %s52
    %p58 = scmp.eq.s32.totalorder %s18, 0
    %p59 = por %p57, %p58
    %p60 = scmp.ne.s32.totalorder %s49, %s52
    %p61 = scmp.eq.s32.totalorder %s23, 1
    %p62 = por %p60, %p61
    %p63 = scmp.ne.s32.totalorder %s52, %s53
    %p64 = scmp.eq.s32.totalorder %s23, 0
    %p65 = por %p63, %p64
    %p66 = scmp.ne.s32.totalorder %s52, %s53
    %p67 = scmp.eq.s32.totalorder %s24, 1
    %p68 = por %p66, %p67
    %p70 = scmp.ne.s32.totalorder %s53, %s69
    %p71 = scmp.eq.s32.totalorder %s24, 0
    %p72 = por %p70, %p71
    %s73 = ssub.s32 %s18, %s25
    %p74 = scmp.eq.s32.totalorder %s73, 0
    %s76 = sadd.s32 %s75, 1
    %s77 = scalar_select %p74, %s75, %s76
    %p80 = pneg %p74
    %p81 = scmp.eq.s32.totalorder %s18, 1
    %p82 = por %p80, %p81
    %p83 = scmp.ne.s32.totalorder %s75, %s78
    %p84 = scmp.eq.s32.totalorder %s18, 0
    %p85 = por %p83, %p84
    %p86 = scmp.ne.s32.totalorder %s75, %s78
    %p87 = scmp.eq.s32.totalorder %s23, 1
    %p88 = por %p86, %p87
    %p89 = scmp.ne.s32.totalorder %s78, %s79
    %p90 = scmp.eq.s32.totalorder %s23, 0
    %p91 = por %p89, %p90
    %p92 = scmp.ne.s32.totalorder %s78, %s79
    %p93 = scmp.eq.s32.totalorder %s24, 1
    %p94 = por %p92, %p93
    %p96 = scmp.ne.s32.totalorder %s79, %s95
    %p97 = scmp.eq.s32.totalorder %s24, 0
    %p98 = por %p96, %p97
    %s99 = ssub.s32 %s18, %s25
    %p100 = scmp.eq.s32.totalorder %s99, 0
    %s102 = sadd.s32 %s101, 1
    %s103 = scalar_select %p100, %s101, %s102
    %p106 = pneg %p100
    %p107 = scmp.eq.s32.totalorder %s18, 1
    %p108 = por %p106, %p107
    %p109 = scmp.ne.s32.totalorder %s101, %s104
    %p110 = scmp.eq.s32.totalorder %s18, 0
    %p111 = por %p109, %p110
    %p112 = scmp.ne.s32.totalorder %s101, %s104
    %p113 = scmp.eq.s32.totalorder %s23, 1
    %p114 = por %p112, %p113
    %p115 = scmp.ne.s32.totalorder %s104, %s105
    %p116 = scmp.eq.s32.totalorder %s23, 0
    %p117 = por %p115, %p116
    %p118 = scmp.ne.s32.totalorder %s104, %s105
    %p119 = scmp.eq.s32.totalorder %s24, 1
    %p120 = por %p118, %p119
    %p122 = scmp.ne.s32.totalorder %s105, %s121
    %p123 = scmp.eq.s32.totalorder %s24, 0
    %p124 = por %p122, %p123
    %s125 = ssub.s32 %s18, %s25
    %p126 = scmp.eq.s32.totalorder %s125, 0
    %s128 = sadd.s32 %s127, 1
    %s129 = scalar_select %p126, %s127, %s128
    %p132 = pneg %p126
    %p133 = scmp.eq.s32.totalorder %s18, 1
    %p134 = por %p132, %p133
    %p135 = scmp.ne.s32.totalorder %s127, %s130
    %p136 = scmp.eq.s32.totalorder %s18, 0
    %p137 = por %p135, %p136
    %p138 = scmp.ne.s32.totalorder %s127, %s130
    %p139 = scmp.eq.s32.totalorder %s23, 1
    %p140 = por %p138, %p139
    %p141 = scmp.ne.s32.totalorder %s130, %s131
    %p142 = scmp.eq.s32.totalorder %s23, 0
    %p143 = por %p141, %p142
    %p144 = scmp.ne.s32.totalorder %s130, %s131
    %p145 = scmp.eq.s32.totalorder %s24, 1
    %p146 = por %p144, %p145
    %p148 = scmp.ne.s32.totalorder %s131, %s147
    %p149 = scmp.eq.s32.totalorder %s24, 0
    %p150 = por %p148, %p149
    %s151 = ssub.s32 %s18, %s25
    %p152 = scmp.eq.s32.totalorder %s151, 0
    %s154 = sadd.s32 %s153, 1
    %s155 = scalar_select %p152, %s153, %s154
    %p158 = pneg %p152
    %p159 = scmp.eq.s32.totalorder %s18, 1
    %p160 = por %p158, %p159
    %p161 = scmp.ne.s32.totalorder %s153, %s156
    %p162 = scmp.eq.s32.totalorder %s18, 0
    %p163 = por %p161, %p162
    %p164 = scmp.ne.s32.totalorder %s153, %s156
    %p165 = scmp.eq.s32.totalorder %s23, 1
    %p166 = por %p164, %p165
    %p167 = scmp.ne.s32.totalorder %s156, %s157
    %p168 = scmp.eq.s32.totalorder %s23, 0
    %p169 = por %p167, %p168
    %p170 = scmp.ne.s32.totalorder %s156, %s157
    %p171 = scmp.eq.s32.totalorder %s24, 1
    %p172 = por %p170, %p171
    %p174 = scmp.ne.s32.totalorder %s157, %s173
    %p175 = scmp.eq.s32.totalorder %s24, 0
    %p176 = por %p174, %p175
    %s177 = ssub.s32 %s18, %s25
    %p178 = scmp.eq.s32.totalorder %s177, 0
    %s180 = sadd.s32 %s179, 1
    %s181 = scalar_select %p178, %s179, %s180
    %p184 = pneg %p178
    %p185 = scmp.eq.s32.totalorder %s18, 1
    %p186 = por %p184, %p185
    %p187 = scmp.ne.s32.totalorder %s179, %s182
    %p188 = scmp.eq.s32.totalorder %s18, 0
    %p189 = por %p187, %p188
    %p190 = scmp.ne.s32.totalorder %s179, %s182
    %p191 = scmp.eq.s32.totalorder %s23, 1
    %p192 = por %p190, %p191
    %p193 = scmp.ne.s32.totalorder %s182, %s183
    %p194 = scmp.eq.s32.totalorder %s23, 0
    %p195 = por %p193, %p194
    %p196 = scmp.ne.s32.totalorder %s182, %s183
    %p197 = scmp.eq.s32.totalorder %s24, 1
    %p198 = por %p196, %p197
    %p200 = scmp.ne.s32.totalorder %s183, %s199
    %p201 = scmp.eq.s32.totalorder %s24, 0
    %p202 = por %p200, %p201
    %s203 = ssub.s32 %s18, %s25
    %p204 = scmp.eq.s32.totalorder %s203, 0
    %s206 = sadd.s32 %s205, 1
    %s207 = scalar_select %p204, %s205, %s206
    %p210 = pneg %p204
    %p211 = scmp.eq.s32.totalorder %s18, 1
    %p212 = por %p210, %p211
    %p213 = scmp.ne.s32.totalorder %s205, %s208
    %p214 = scmp.eq.s32.totalorder %s18, 0
    %p215 = por %p213, %p214
    %p216 = scmp.ne.s32.totalorder %s205, %s208
    %p217 = scmp.eq.s32.totalorder %s23, 1
    %p218 = por %p216, %p217
    %p219 = scmp.ne.s32.totalorder %s208, %s209
    %p220 = scmp.eq.s32.totalorder %s23, 0
    %p221 = por %p219, %p220
    %p222 = scmp.ne.s32.totalorder %s208, %s209
    %p223 = scmp.eq.s32.totalorder %s24, 1
    %p224 = por %p222, %p223
    %p226 = scmp.ne.s32.totalorder %s209, %s225
    %p227 = scmp.eq.s32.totalorder %s24, 0
    %p228 = por %p226, %p227
    %s229 = ssub.s32 %s18, %s25
    %p230 = scmp.eq.s32.totalorder %s229, 0
    %s232 = sadd.s32 %s231, 1
    %s233 = scalar_select %p230, %s231, %s232
    %p236 = pneg %p230
    %p237 = scmp.eq.s32.totalorder %s18, 1
    %p238 = por %p236, %p237
    %p239 = scmp.ne.s32.totalorder %s231, %s234
    %p240 = scmp.eq.s32.totalorder %s18, 0
    %p241 = por %p239, %p240
    %p242 = scmp.ne.s32.totalorder %s231, %s234
    %p243 = scmp.eq.s32.totalorder %s23, 1
    %p244 = por %p242, %p243
    %p245 = scmp.ne.s32.totalorder %s234, %s235
    %p246 = scmp.eq.s32.totalorder %s23, 0
    %p247 = por %p245, %p246
    %p248 = scmp.ne.s32.totalorder %s234, %s235
    %p249 = scmp.eq.s32.totalorder %s24, 1
    %p250 = por %p248, %p249
    %p252 = scmp.ne.s32.totalorder %s235, %s251
    %p253 = scmp.eq.s32.totalorder %s24, 0
    %p254 = por %p252, %p253
    %s255 = ssub.s32 %s18, %s25
    %p256 = scmp.eq.s32.totalorder %s255, 0
    %s258 = sadd.s32 %s257, 1
    %s259 = scalar_select %p256, %s257, %s258
    %p262 = pneg %p256
    %p263 = scmp.eq.s32.totalorder %s18, 1
    %p264 = por %p262, %p263
    %p265 = scmp.ne.s32.totalorder %s257, %s260
    %p266 = scmp.eq.s32.totalorder %s18, 0
    %p267 = por %p265, %p266
    %p268 = scmp.ne.s32.totalorder %s257, %s260
    %p269 = scmp.eq.s32.totalorder %s23, 1
    %p270 = por %p268, %p269
    %p271 = scmp.ne.s32.totalorder %s260, %s261
    %p272 = scmp.eq.s32.totalorder %s23, 0
    %p273 = por %p271, %p272
    %p274 = scmp.ne.s32.totalorder %s260, %s261
    %p275 = scmp.eq.s32.totalorder %s24, 1
    %p276 = por %p274, %p275
    %p278 = scmp.ne.s32.totalorder %s261, %s277
    %p279 = scmp.eq.s32.totalorder %s24, 0
    %p280 = por %p278, %p279
    %s281 = ssub.s32 %s18, %s25
    %p282 = scmp.eq.s32.totalorder %s281, 0
    %s284 = sadd.s32 %s283, 1
    %s285 = scalar_select %p282, %s283, %s284
    %p288 = pneg %p282
    %p289 = scmp.eq.s32.totalorder %s18, 1
    %p290 = por %p288, %p289
    %p291 = scmp.ne.s32.totalorder %s283, %s286
    %p292 = scmp.eq.s32.totalorder %s18, 0
    %p293 = por %p291, %p292
    %p294 = scmp.ne.s32.totalorder %s283, %s286
    %p295 = scmp.eq.s32.totalorder %s23, 1
    %p296 = por %p294, %p295
    %p297 = scmp.ne.s32.totalorder %s286, %s287
    %p298 = scmp.eq.s32.totalorder %s23, 0
    %p299 = por %p297, %p298
    %p300 = scmp.ne.s32.totalorder %s286, %s287
    %p301 = scmp.eq.s32.totalorder %s24, 1
    %p302 = por %p300, %p301
    %p304 = scmp.ne.s32.totalorder %s287, %s303
    %p305 = scmp.eq.s32.totalorder %s24, 0
    %p306 = por %p304, %p305
    %s307 = ssub.s32 %s18, %s25
    %p308 = scmp.eq.s32.totalorder %s307, 0
    %s310 = sadd.s32 %s309, 1
    %s311 = scalar_select %p308, %s309, %s310
    %p314 = pneg %p308
    %p315 = scmp.eq.s32.totalorder %s18, 1
    %p316 = por %p314, %p315
    %p317 = scmp.ne.s32.totalorder %s309, %s312
    %p318 = scmp.eq.s32.totalorder %s18, 0
    %p319 = por %p317, %p318
    %p320 = scmp.ne.s32.totalorder %s309, %s312
    %p321 = scmp.eq.s32.totalorder %s23, 1
    %p322 = por %p320, %p321
    %p323 = scmp.ne.s32.totalorder %s312, %s313
    %p324 = scmp.eq.s32.totalorder %s23, 0
    %p325 = por %p323, %p324
    %p326 = scmp.ne.s32.totalorder %s312, %s313
    %p327 = scmp.eq.s32.totalorder %s24, 1
    %p328 = por %p326, %p327
    %p330 = scmp.ne.s32.totalorder %s313, %s329
    %p331 = scmp.eq.s32.totalorder %s24, 0
    %p332 = por %p330, %p331
    %s334 = sadd.s32 %s333, 1
    %p337 = scmp.eq.s32.totalorder %s18, 1
    %p338 = scmp.ne.s32.totalorder %s333, %s335
    %p339 = scmp.eq.s32.totalorder %s18, 0
    %p340 = por %p338, %p339
    %p341 = scmp.ne.s32.totalorder %s333, %s335
    %p342 = scmp.eq.s32.totalorder %s23, 1
    %p343 = por %p341, %p342
    %p344 = scmp.ne.s32.totalorder %s335, %s336
    %p345 = scmp.eq.s32.totalorder %s23, 0
    %p346 = por %p344, %p345
    %p347 = scmp.ne.s32.totalorder %s335, %s336
    %p348 = scmp.eq.s32.totalorder %s24, 1
    %p349 = por %p347, %p348
    %p351 = scmp.ne.s32.totalorder %s336, %s350
    %p352 = scmp.eq.s32.totalorder %s24, 0
    %p353 = por %p351, %p352
    %p354 = scmp.le.s32.totalorder 1, %s18
    %p355 = scmp.lt.s32.totalorder %s18, 3
    %p356 = pnand %p354, %p355
    %p357 = pneg %p356
    // Predicated region
    $region9: #{ast_forward.6} parent=5 // pred_check
      _
    $region10: #{ast_forward.6} parent=5 // pred_check_branch
      %359 = sbr.rel (%p356) target = $region12
    $region11: #{ast_forward.6} parent=5 // pred_region
      %s360 = ssub.s32 %s18, 1
      // Predicated region
      $region13: #{ast_forward.6} parent=11 // pred_check
        %p361 = pneg %p39
      $region14: #{ast_forward.6} parent=11 // pred_check_branch
        %363 = sbr.rel (%p361) target = $region16
      $region15: #{ast_forward.6} parent=11 // pred_region
        _
      $region16: #{ast_forward.6} parent=11 // pred_fallthru
        _
    $region12: #{ast_forward.6} parent=5 // pred_fallthru
      _
    %p364 = scmp.lt.s32.totalorder %s18, 2
    // Predicated region
    $region17: #{ast_forward.6} parent=5 // pred_check
      %p365 = pneg %p364
    $region18: #{ast_forward.6} parent=5 // pred_check_branch
      %367 = sbr.rel (%p365) target = $region20
    $region19: #{ast_forward.6} parent=5 // pred_region
      // Predicated region
      $region21: #{ast_forward.6} parent=19 // pred_check
        %p368 = pneg %p59
      $region22: #{ast_forward.6} parent=19 // pred_check_branch
        %370 = sbr.rel (%p368) target = $region24
      $region23: #{ast_forward.6} parent=19 // pred_region
        %p371 = scmp.lt.s32.totalorder %s18, 1
        %s372 = scalar_select %p371, %s18, 1
        %s373 = scalar_lea.vmem %s1, %s372
      $region24: #{ast_forward.6} parent=19 // pred_fallthru
        _
      // Predicated region
      $region25: #{ast_forward.6} parent=19 // pred_check
        %p374 = pneg %p85
      $region26: #{ast_forward.6} parent=19 // pred_check_branch
        %376 = sbr.rel (%p374) target = $region28
      $region27: #{ast_forward.6} parent=19 // pred_region
        %p377 = scmp.lt.s32.totalorder %s18, 1
        %s378 = scalar_select %p377, %s18, 1
        %s379 = scalar_lea.vmem %s2, %s378
      $region28: #{ast_forward.6} parent=19 // pred_fallthru
        _
      // Predicated region
      $region29: #{ast_forward.6} parent=19 // pred_check
        %p380 = pneg %p111
      $region30: #{ast_forward.6} parent=19 // pred_check_branch
        %382 = sbr.rel (%p380) target = $region32
      $region31: #{ast_forward.6} parent=19 // pred_region
        %p383 = scmp.lt.s32.totalorder %s18, 1
        %s384 = scalar_select %p383, %s18, 1
        %s385 = smul.addr %s384, 48
        %s386 = smul.addr %s385, 4
        %s387 = scalar_lea.vmem %s3, %s386
      $region32: #{ast_forward.6} parent=19 // pred_fallthru
        _
      // Predicated region
      $region33: #{ast_forward.6} parent=19 // pred_check
        %p388 = pneg %p137
      $region34: #{ast_forward.6} parent=19 // pred_check_branch
        %390 = sbr.rel (%p388) target = $region36
      $region35: #{ast_forward.6} parent=19 // pred_region
        %p391 = scmp.lt.s32.totalorder %s18, 1
        %s392 = scalar_select %p391, %s18, 1
        %s393 = smul.addr %s392, 16
        %s394 = smul.addr %s393, 4
        %s395 = scalar_lea.vmem %s4, %s394
      $region36: #{ast_forward.6} parent=19 // pred_fallthru
        _
      // Predicated region
      $region37: #{ast_forward.6} parent=19 // pred_check
        %p396 = pneg %p163
      $region38: #{ast_forward.6} parent=19 // pred_check_branch
        %398 = sbr.rel (%p396) target = $region40
      $region39: #{ast_forward.6} parent=19 // pred_region
        %p399 = scmp.lt.s32.totalorder %s18, 1
        %s400 = scalar_select %p399, %s18, 1
        %s401 = scalar_lea.vmem %s5, %s400
      $region40: #{ast_forward.6} parent=19 // pred_fallthru
        _
      // Predicated region
      $region41: #{ast_forward.6} parent=19 // pred_check
        %p402 = pneg %p189
      $region42: #{ast_forward.6} parent=19 // pred_check_branch
        %404 = sbr.rel (%p402) target = $region44
      $region43: #{ast_forward.6} parent=19 // pred_region
        %p405 = scmp.lt.s32.totalorder %s18, 1
        %s406 = scalar_select %p405, %s18, 1
        %s407 = scalar_lea.vmem %s6, %s406
      $region44: #{ast_forward.6} parent=19 // pred_fallthru
        _
      // Predicated region
      $region45: #{ast_forward.6} parent=19 // pred_check
        %p408 = pneg %p215
      $region46: #{ast_forward.6} parent=19 // pred_check_branch
        %410 = sbr.rel (%p408) target = $region48
      $region47: #{ast_forward.6} parent=19 // pred_region
        %p411 = scmp.lt.s32.totalorder %s18, 1
        %s412 = scalar_select %p411, %s18, 1
        %s413 = scalar_lea.vmem %s7, %s412
      $region48: #{ast_forward.6} parent=19 // pred_fallthru
        _
      // Predicated region
      $region49: #{ast_forward.6} parent=19 // pred_check
        %p414 = pneg %p241
      $region50: #{ast_forward.6} parent=19 // pred_check_branch
        %416 = sbr.rel (%p414) target = $region52
      $region51: #{ast_forward.6} parent=19 // pred_region
        %p417 = scmp.lt.s32.totalorder %s18, 1
        %s418 = scalar_select %p417, %s18, 1
        %s419 = smul.addr %s418, 64
        %s420 = smul.addr %s419, 4
        %s421 = scalar_lea.vmem %s8, %s420
      $region52: #{ast_forward.6} parent=19 // pred_fallthru
        _
      // Predicated region
      $region53: #{ast_forward.6} parent=19 // pred_check
        %p422 = pneg %p267
      $region54: #{ast_forward.6} parent=19 // pred_check_branch
        %424 = sbr.rel (%p422) target = $region56
      $region55: #{ast_forward.6} parent=19 // pred_region
        %p425 = scmp.lt.s32.totalorder %s18, 1
        %s426 = scalar_select %p425, %s18, 1
        %s427 = smul.addr %s426, 4
        %s428 = scalar_lea.vmem %s9, %s427
      $region56: #{ast_forward.6} parent=19 // pred_fallthru
        _
      // Predicated region
      $region57: #{ast_forward.6} parent=19 // pred_check
        %p429 = pneg %p293
      $region58: #{ast_forward.6} parent=19 // pred_check_branch
        %431 = sbr.rel (%p429) target = $region60
      $region59: #{ast_forward.6} parent=19 // pred_region
        %p432 = scmp.lt.s32.totalorder %s18, 1
        %s433 = scalar_select %p432, %s18, 1
        %s434 = smul.addr %s433, 64
        %s435 = smul.addr %s434, 4
        %s436 = scalar_lea.vmem %s10, %s435
      $region60: #{ast_forward.6} parent=19 // pred_fallthru
        _
      // Predicated region
      $region61: #{ast_forward.6} parent=19 // pred_check
        %p437 = pneg %p319
      $region62: #{ast_forward.6} parent=19 // pred_check_branch
        %439 = sbr.rel (%p437) target = $region64
      $region63: #{ast_forward.6} parent=19 // pred_region
        %p440 = scmp.lt.s32.totalorder %s18, 1
        %s441 = scalar_select %p440, %s18, 1
        %s442 = scalar_lea.vmem %s11, %s441
      $region64: #{ast_forward.6} parent=19 // pred_fallthru
        _
    $region20: #{ast_forward.6} parent=5 // pred_fallthru
      _
    %p443 = scmp.le.s32.totalorder 1, %s18
    %p444 = scmp.lt.s32.totalorder %s18, 3
    %p445 = pnand %p443, %p444
    %p446 = pneg %p445
    // Predicated region
    $region65: #{ast_forward.6} parent=5 // pred_check
      _
    $region66: #{ast_forward.6} parent=5 // pred_check_branch
      %448 = sbr.rel (%p445) target = $region68
    $region67: #{ast_forward.6} parent=5 // pred_region
      %s449 = ssub.s32 %s18, 1
      %p450 = pneg %p39
      %p451 = pneg %p36
      %p452 = scmp.lt.s32.totalorder %s23, 1
      %s453 = scalar_select %p452, %s23, 1
      %s454 = scalar_lea.vmem %s1, %s453
      %p455 = pneg %p65
      %p456 = pneg %p62
      %p457 = scmp.lt.s32.totalorder %s23, 1
      %s458 = scalar_select %p457, %s23, 1
      %s459 = scalar_lea.vmem %s2, %s458
      %p460 = pneg %p91
      %p461 = pneg %p88
      %p462 = scmp.lt.s32.totalorder %s23, 1
      %s463 = scalar_select %p462, %s23, 1
      %s464 = smul.addr %s463, 48
      %s465 = smul.addr %s464, 4
      %s466 = scalar_lea.vmem %s3, %s465
      %p467 = pneg %p117
      %p468 = pneg %p114
      %p469 = scmp.lt.s32.totalorder %s23, 1
      %s470 = scalar_select %p469, %s23, 1
      %s471 = smul.addr %s470, 16
      %s472 = smul.addr %s471, 4
      %s473 = scalar_lea.vmem %s4, %s472
      %p474 = pneg %p143
      %p475 = pneg %p140
      %p476 = scmp.lt.s32.totalorder %s23, 1
      %s477 = scalar_select %p476, %s23, 1
      %s478 = scalar_lea.vmem %s5, %s477
      %p479 = pneg %p169
      %p480 = pneg %p166
      %p481 = scmp.lt.s32.totalorder %s23, 1
      %s482 = scalar_select %p481, %s23, 1
      %s483 = scalar_lea.vmem %s6, %s482
      %p484 = pneg %p195
      %p485 = pneg %p192
      %p486 = scmp.lt.s32.totalorder %s23, 1
      %s487 = scalar_select %p486, %s23, 1
      %s488 = scalar_lea.vmem %s7, %s487
      %p489 = pneg %p221
      %p490 = pneg %p218
      %p491 = scmp.lt.s32.totalorder %s23, 1
      %s492 = scalar_select %p491, %s23, 1
      %s493 = smul.addr %s492, 64
      %s494 = smul.addr %s493, 4
      %s495 = scalar_lea.vmem %s8, %s494
      %p496 = pneg %p247
      %p497 = pneg %p244
      %p498 = scmp.lt.s32.totalorder %s23, 1
      %s499 = scalar_select %p498, %s23, 1
      %s500 = smul.addr %s499, 4
      %s501 = scalar_lea.vmem %s9, %s500
      %p502 = pneg %p273
      %p503 = pneg %p270
      %p504 = scmp.lt.s32.totalorder %s23, 1
      %s505 = scalar_select %p504, %s23, 1
      %s506 = smul.addr %s505, 64
      %s507 = smul.addr %s506, 4
      %s508 = scalar_lea.vmem %s10, %s507
      %p509 = pneg %p299
      %p510 = pneg %p296
      %p511 = scmp.lt.s32.totalorder %s23, 1
      %s512 = scalar_select %p511, %s23, 1
      %s513 = scalar_lea.vmem %s11, %s512
      %p514 = pneg %p325
      %p515 = pneg %p322
      %p516 = pneg %p346
      %p517 = pneg %p343
      %p518 = scmp.lt.s32.totalorder %s23, 1
      %s519 = scalar_select %p518, %s23, 1
      %s520 = scalar_lea.vmem %s1, %s519
      %p521 = scmp.lt.s32.totalorder %s23, 1
      %s522 = scalar_select %p521, %s23, 1
      %s523 = scalar_lea.vmem %s2, %s522
      %p524 = scmp.lt.s32.totalorder %s23, 1
      %s525 = scalar_select %p524, %s23, 1
      %s526 = smul.addr %s525, 48
      %s527 = smul.addr %s526, 4
      %s528 = scalar_lea.vmem %s3, %s527
      %p529 = scmp.lt.s32.totalorder %s23, 1
      %s530 = scalar_select %p529, %s23, 1
      %s531 = smul.addr %s530, 16
      %s532 = smul.addr %s531, 4
      %s533 = scalar_lea.vmem %s4, %s532
      %p534 = scmp.lt.s32.totalorder %s23, 1
      %s535 = scalar_select %p534, %s23, 1
      %s536 = scalar_lea.vmem %s5, %s535
      %p537 = scmp.lt.s32.totalorder %s23, 1
      %s538 = scalar_select %p537, %s23, 1
      %s539 = scalar_lea.vmem %s6, %s538
      %p540 = scmp.lt.s32.totalorder %s23, 1
      %s541 = scalar_select %p540, %s23, 1
      %s542 = scalar_lea.vmem %s7, %s541
      %p543 = scmp.lt.s32.totalorder %s23, 1
      %s544 = scalar_select %p543, %s23, 1
      %s545 = smul.addr %s544, 64
      %s546 = smul.addr %s545, 4
      %s547 = scalar_lea.vmem %s8, %s546
      %p548 = scmp.lt.s32.totalorder %s23, 1
      %s549 = scalar_select %p548, %s23, 1
      %s550 = smul.addr %s549, 4
      %s551 = scalar_lea.vmem %s9, %s550
      %p552 = scmp.lt.s32.totalorder %s23, 1
      %s553 = scalar_select %p552, %s23, 1
      %s554 = smul.addr %s553, 64
      %s555 = smul.addr %s554, 4
      %s556 = scalar_lea.vmem %s10, %s555
      %p557 = scmp.lt.s32.totalorder %s23, 1
      %s558 = scalar_select %p557, %s23, 1
      %s559 = scalar_lea.vmem %s11, %s558
      %p561 = scmp.eq.s32.totalorder %s23, 0
      // Predicated region
      $region69: #{ast_forward.6} parent=67 // pred_check
        %p562 = pneg %p561
      $region70: #{ast_forward.6} parent=67 // pred_check_branch
        %564 = sbr.rel (%p562) target = $region72
      $region71: #{ast_forward.6} parent=67 // pred_region
        %v565 = vld [vmem:[%s0] sm:$0xff]
        %v566 = vld [vmem:[%s0 + $0x8] sm:$0xff]
        %v567 = vld [vmem:[%s0 + $0x10] sm:$0xff]
        %v568 = vld [vmem:[%s0 + $0x18] sm:$0xff]
        %v569 = vld [vmem:[%s0 + $0x20] sm:$0xff]
        %v570 = vld [vmem:[%s0 + $0x28] sm:$0xff]
        %571 = vst [vmem:[%s12] sm:$0xff] %v565
        %572 = vst [vmem:[%s12 + $0x8] sm:$0xff] %v566
        %573 = vst [vmem:[%s12 + $0x10] sm:$0xff] %v567
        %574 = vst [vmem:[%s12 + $0x18] sm:$0xff] %v568
        %575 = vst [vmem:[%s12 + $0x20] sm:$0xff] %v569
        %576 = vst [vmem:[%s12 + $0x28] sm:$0xff] %v570
      $region72: #{ast_forward.6} parent=67 // pred_fallthru
        _
      %v577 = vld [vmem:[%s12] sm:$0xff]
      %v578 = vld [vmem:[%s12 + $0x8] sm:$0xff]
      %v579 = vld [vmem:[%s12 + $0x10] sm:$0xff]
      %v580 = vld [vmem:[%s12 + $0x18] sm:$0xff]
      %v581 = vld [vmem:[%s12 + $0x20] sm:$0xff]
      %v582 = vld [vmem:[%s12 + $0x28] sm:$0xff]
      %v583 = vld [vmem:[%s520] sm:$0x1]
      %v584 = vld [vmem:[%s523] sm:$0x1]
      %585 = vadd.xlane.f32.xlu0 %v577
      %v586 = vpop.xlane.xlu0 %585
      %587 = vadd.xlane.f32.xlu0 %v578
      %v588 = vpop.xlane.xlu0 %587
      %589 = vadd.xlane.f32.xlu0 %v579
      %v590 = vpop.xlane.xlu0 %589
      %591 = vadd.xlane.f32.xlu0 %v580
      %v592 = vpop.xlane.xlu0 %591
      %593 = vadd.xlane.f32.xlu0 %v581
      %v594 = vpop.xlane.xlu0 %593
      %595 = vadd.xlane.f32.xlu0 %v582
      %v596 = vpop.xlane.xlu0 %595
      %v597 = vrcp.pop 128.0
      %v598 = vmul.f32 128.0, %v597
      %v599 = vsub.f32 1.0, %v598
      %v600 = vmul.f32 %v597, %v599
      %v601 = vadd.f32 %v597, %v600
      %vm602 = vweird.f32 %v597
      %v603 = vsel %vm602, %v597, %v601
      %v604 = vmul.f32 %v586, %v603
      %v605 = vmul.f32 %v588, %v603
      %v606 = vmul.f32 %v590, %v603
      %v607 = vmul.f32 %v592, %v603
      %v608 = vmul.f32 %v594, %v603
      %v609 = vmul.f32 %v596, %v603
      %v610 = vsub.f32 %v577, %v604
      %v611 = vsub.f32 %v578, %v605
      %v612 = vsub.f32 %v579, %v606
      %v613 = vsub.f32 %v580, %v607
      %v614 = vsub.f32 %v581, %v608
      %v615 = vsub.f32 %v582, %v609
      %v616 = vmul.f32 %v610, %v610
      %v617 = vmul.f32 %v611, %v611
      %v618 = vmul.f32 %v612, %v612
      %v619 = vmul.f32 %v613, %v613
      %v620 = vmul.f32 %v614, %v614
      %v621 = vmul.f32 %v615, %v615
      %622 = vadd.xlane.f32.xlu0 %v616
      %v623 = vpop.xlane.xlu0 %622
      %624 = vadd.xlane.f32.xlu0 %v617
      %v625 = vpop.xlane.xlu0 %624
      %626 = vadd.xlane.f32.xlu0 %v618
      %v627 = vpop.xlane.xlu0 %626
      %628 = vadd.xlane.f32.xlu0 %v619
      %v629 = vpop.xlane.xlu0 %628
      %630 = vadd.xlane.f32.xlu0 %v620
      %v631 = vpop.xlane.xlu0 %630
      %632 = vadd.xlane.f32.xlu0 %v621
      %v633 = vpop.xlane.xlu0 %632
      %v634 = vmul.f32 %v623, %v603
      %v635 = vmul.f32 %v625, %v603
      %v636 = vmul.f32 %v627, %v603
      %v637 = vmul.f32 %v629, %v603
      %v638 = vmul.f32 %v631, %v603
      %v639 = vmul.f32 %v633, %v603
      %v640 = vadd.f32 %v634, 1e-05
      %v641 = vadd.f32 %v635, 1e-05
      %v642 = vadd.f32 %v636, 1e-05
      %v643 = vadd.f32 %v637, 1e-05
      %v644 = vadd.f32 %v638, 1e-05
      %v645 = vadd.f32 %v639, 1e-05
      %v646 = vrsqrt.pop %v640
      %v647 = vmul.f32 %v646, %v640
      %v648 = vmul.f32 %v647, %v646
      %v649 = vmul.f32 0.5, %v648
      %v650 = vsub.f32 1.5, %v649
      %v651 = vmul.f32 %v646, %v650
      %vm652 = vweird.f32 %v640
      %vm653 = vweird.f32 %v646
      %vm654 = vmor %vm652, %vm653
      %v655 = vsel %vm654, %v646, %v651
      %v656 = vrsqrt.pop %v641
      %v657 = vmul.f32 %v656, %v641
      %v658 = vmul.f32 %v657, %v656
      %v659 = vmul.f32 0.5, %v658
      %v660 = vsub.f32 1.5, %v659
      %v661 = vmul.f32 %v656, %v660
      %vm662 = vweird.f32 %v641
      %vm663 = vweird.f32 %v656
      %vm664 = vmor %vm662, %vm663
      %v665 = vsel %vm664, %v656, %v661
      %v666 = vrsqrt.pop %v642
      %v667 = vmul.f32 %v666, %v642
      %v668 = vmul.f32 %v667, %v666
      %v669 = vmul.f32 0.5, %v668
      %v670 = vsub.f32 1.5, %v669
      %v671 = vmul.f32 %v666, %v670
      %vm672 = vweird.f32 %v642
      %vm673 = vweird.f32 %v666
      %vm674 = vmor %vm672, %vm673
      %v675 = vsel %vm674, %v666, %v671
      %v676 = vrsqrt.pop %v643
      %v677 = vmul.f32 %v676, %v643
      %v678 = vmul.f32 %v677, %v676
      %v679 = vmul.f32 0.5, %v678
      %v680 = vsub.f32 1.5, %v679
      %v681 = vmul.f32 %v676, %v680
      %vm682 = vweird.f32 %v643
      %vm683 = vweird.f32 %v676
      %vm684 = vmor %vm682, %vm683
      %v685 = vsel %vm684, %v676, %v681
      %v686 = vrsqrt.pop %v644
      %v687 = vmul.f32 %v686, %v644
      %v688 = vmul.f32 %v687, %v686
      %v689 = vmul.f32 0.5, %v688
      %v690 = vsub.f32 1.5, %v689
      %v691 = vmul.f32 %v686, %v690
      %vm692 = vweird.f32 %v644
      %vm693 = vweird.f32 %v686
      %vm694 = vmor %vm692, %vm693
      %v695 = vsel %vm694, %v686, %v691
      %v696 = vrsqrt.pop %v645
      %v697 = vmul.f32 %v696, %v645
      %v698 = vmul.f32 %v697, %v696
      %v699 = vmul.f32 0.5, %v698
      %v700 = vsub.f32 1.5, %v699
      %v701 = vmul.f32 %v696, %v700
      %vm702 = vweird.f32 %v645
      %vm703 = vweird.f32 %v696
      %vm704 = vmor %vm702, %vm703
      %v705 = vsel %vm704, %v696, %v701
      %v706 = vmul.f32 %v610, %v655
      %v707 = vmul.f32 %v611, %v665
      %v708 = vmul.f32 %v612, %v675
      %v709 = vmul.f32 %v613, %v685
      %v710 = vmul.f32 %v614, %v695
      %v711 = vmul.f32 %v615, %v705
      %v713 = vperm.slane %v583, 0
      %v715 = vmul.f32 %v706, %v713
      %v716 = vmul.f32 %v707, %v713
      %v717 = vmul.f32 %v708, %v713
      %v718 = vmul.f32 %v709, %v713
      %v719 = vmul.f32 %v710, %v713
      %v720 = vmul.f32 %v711, %v713
      %v722 = vperm.slane %v584, 0
      %v724 = vadd.f32 %v715, %v722
      %v725 = vadd.f32 %v716, %v722
      %v726 = vadd.f32 %v717, %v722
      %v727 = vadd.f32 %v718, %v722
      %v728 = vadd.f32 %v719, %v722
      %v729 = vadd.f32 %v720, %v722
      %v730 = vpack.c.bf16 %v725, %v724
      %v731 = vpack.c.bf16 %v727, %v726
      %v732 = vpack.c.bf16 %v729, %v728
      %v733 = vld [vmem:[%s528] sm:$0xff]
      %v734 = vld [vmem:[%s528 + $0x8] sm:$0xf]
      %v735 = vld [vmem:[%s528 + $0xc] sm:$0xff]
      %v736 = vld [vmem:[%s528 + $0x14] sm:$0xf]
      %v737 = vld [vmem:[%s528 + $0x18] sm:$0xff]
      %v738 = vld [vmem:[%s528 + $0x20] sm:$0xf]
      %v739 = vld [vmem:[%s528 + $0x24] sm:$0xff]
      %v740 = vld [vmem:[%s528 + $0x2c] sm:$0xf]
      %v741 = vld [vmem:[%s528 + $0x30] sm:$0xff]
      %v742 = vld [vmem:[%s528 + $0x38] sm:$0xf]
      %v743 = vld [vmem:[%s528 + $0x3c] sm:$0xff]
      %v744 = vld [vmem:[%s528 + $0x44] sm:$0xf]
      %v745 = vld [vmem:[%s528 + $0x48] sm:$0xff]
      %v746 = vld [vmem:[%s528 + $0x50] sm:$0xf]
      %v747 = vld [vmem:[%s528 + $0x54] sm:$0xff]
      %v748 = vld [vmem:[%s528 + $0x5c] sm:$0xf]
      %v749 = vld [vmem:[%s528 + $0x60] sm:$0xff]
      %v750 = vld [vmem:[%s528 + $0x68] sm:$0xf]
      %v751 = vld [vmem:[%s528 + $0x6c] sm:$0xff]
      %v752 = vld [vmem:[%s528 + $0x74] sm:$0xf]
      %v753 = vld [vmem:[%s528 + $0x78] sm:$0xff]
      %v754 = vld [vmem:[%s528 + $0x80] sm:$0xf]
      %v755 = vld [vmem:[%s528 + $0x84] sm:$0xff]
      %v756 = vld [vmem:[%s528 + $0x8c] sm:$0xf]
      %v757 = vld [vmem:[%s528 + $0x90] sm:$0xff]
      %v758 = vld [vmem:[%s528 + $0x98] sm:$0xf]
      %v759 = vld [vmem:[%s528 + $0x9c] sm:$0xff]
      %v760 = vld [vmem:[%s528 + $0xa4] sm:$0xf]
      %v761 = vld [vmem:[%s528 + $0xa8] sm:$0xff]
      %v762 = vld [vmem:[%s528 + $0xb0] sm:$0xf]
      %v763 = vld [vmem:[%s528 + $0xb4] sm:$0xff]
      %v764 = vld [vmem:[%s528 + $0xbc] sm:$0xf]
      %v797 = vunpack.c.l.b16 %v733
      %v798 = vunpack.c.h.b16 %v733
      %v799 = vunpack.c.l.b16 %v734
      %v800 = vunpack.c.l.b16 %v735
      %v801 = vunpack.c.h.b16 %v735
      %v802 = vunpack.c.l.b16 %v736
      %v803 = vunpack.c.l.b16 %v737
      %v804 = vunpack.c.h.b16 %v737
      %v805 = vunpack.c.l.b16 %v738
      %v806 = vunpack.c.l.b16 %v739
      %v807 = vunpack.c.h.b16 %v739
      %v808 = vunpack.c.l.b16 %v740
      %v809 = vunpack.c.l.b16 %v741
      %v810 = vunpack.c.h.b16 %v741
      %v811 = vunpack.c.l.b16 %v742
      %v812 = vunpack.c.l.b16 %v743
      %v813 = vunpack.c.h.b16 %v743
      %v814 = vunpack.c.l.b16 %v744
      %v815 = vunpack.c.l.b16 %v745
      %v816 = vunpack.c.h.b16 %v745
      %v817 = vunpack.c.l.b16 %v746
      %v818 = vunpack.c.l.b16 %v747
      %v819 = vunpack.c.h.b16 %v747
      %v820 = vunpack.c.l.b16 %v748
      %v821 = vunpack.c.l.b16 %v749
      %v822 = vunpack.c.h.b16 %v749
      %v823 = vunpack.c.l.b16 %v750
      %v824 = vunpack.c.l.b16 %v751
      %v825 = vunpack.c.h.b16 %v751
      %v826 = vunpack.c.l.b16 %v752
      %v827 = vunpack.c.l.b16 %v753
      %v828 = vunpack.c.h.b16 %v753
      %v829 = vunpack.c.l.b16 %v754
      %v830 = vunpack.c.l.b16 %v755
      %v831 = vunpack.c.h.b16 %v755
      %v832 = vunpack.c.l.b16 %v756
      %v833 = vunpack.c.l.b16 %v757
      %v834 = vunpack.c.h.b16 %v757
      %v835 = vunpack.c.l.b16 %v758
      %v836 = vunpack.c.l.b16 %v759
      %v837 = vunpack.c.h.b16 %v759
      %v838 = vunpack.c.l.b16 %v760
      %v839 = vunpack.c.l.b16 %v761
      %v840 = vunpack.c.h.b16 %v761
      %v841 = vunpack.c.l.b16 %v762
      %v842 = vunpack.c.l.b16 %v763
      %v843 = vunpack.c.h.b16 %v763
      %v844 = vunpack.c.l.b16 %v764
      %v845 = vpack.c.b16 %v800, %v797
      %v846 = vpack.c.b16 %v801, %v798
      %v847 = vpack.c.b16 %v802, %v799
      %v848 = vpack.c.b16 %v806, %v803
      %v849 = vpack.c.b16 %v807, %v804
      %v850 = vpack.c.b16 %v808, %v805
      %v851 = vpack.c.b16 %v812, %v809
      %v852 = vpack.c.b16 %v813, %v810
      %v853 = vpack.c.b16 %v814, %v811
      %v854 = vpack.c.b16 %v818, %v815
      %v855 = vpack.c.b16 %v819, %v816
      %v856 = vpack.c.b16 %v820, %v817
      %v857 = vpack.c.b16 %v824, %v821
      %v858 = vpack.c.b16 %v825, %v822
      %v859 = vpack.c.b16 %v826, %v823
      %v860 = vpack.c.b16 %v830, %v827
      %v861 = vpack.c.b16 %v831, %v828
      %v862 = vpack.c.b16 %v832, %v829
      %v863 = vpack.c.b16 %v836, %v833
      %v864 = vpack.c.b16 %v837, %v834
      %v865 = vpack.c.b16 %v838, %v835
      %v866 = vpack.c.b16 %v842, %v839
      %v867 = vpack.c.b16 %v843, %v840
      %v868 = vpack.c.b16 %v844, %v841
      %893 = vmatpush.bf16.msra.mxu0 %v866
      %894 = vmatpush.bf16.msra.mxu0 %v863
      %895 = vmatpush.bf16.msra.mxu0 %v860
      %896 = vmatpush.bf16.msra.mxu0 %v857
      %897 = vmatpush.bf16.msra.mxu0 %v854
      %898 = vmatpush.bf16.msra.mxu0 %v851
      %899 = vmatpush.bf16.msra.mxu0 %v848
      %900 = vmatpush.bf16.msra.mxu0 %v845
      %901 = vmatmul.bf16.gmra.mxu0 %v730
      %v902 = vpop.f32.mrf.mxu0
      %v903 = vadd.f32 0.0, %v902
      %v904 = vpop.f32.mrf.mxu0
      %v905 = vadd.f32 0.0, %v904
      %906 = vmatmul.bf16.gmra.mxu0 %v731
      %v907 = vpop.f32.mrf.mxu0
      %v908 = vadd.f32 0.0, %v907
      %v909 = vpop.f32.mrf.mxu0
      %v910 = vadd.f32 0.0, %v909
      %911 = vmatmul.bf16.gmra.mxu0 %v732
      %v912 = vpop.f32.mrf.mxu0
      %v913 = vadd.f32 0.0, %v912
      %v914 = vpop.f32.mrf.mxu0
      %v915 = vadd.f32 0.0, %v914
      %916 = vdwg.mxu0
      %917 = vmatpush.bf16.msra.mxu0 %v867
      %918 = vmatpush.bf16.msra.mxu0 %v864
      %919 = vmatpush.bf16.msra.mxu0 %v861
      %920 = vmatpush.bf16.msra.mxu0 %v858
      %921 = vmatpush.bf16.msra.mxu0 %v855
      %922 = vmatpush.bf16.msra.mxu0 %v852
      %923 = vmatpush.bf16.msra.mxu0 %v849
      %924 = vmatpush.bf16.msra.mxu0 %v846
      %925 = vmatmul.bf16.gmra.mxu0 %v730
      %v926 = vpop.f32.mrf.mxu0
      %v927 = vadd.f32 0.0, %v926
      %v928 = vpop.f32.mrf.mxu0
      %v929 = vadd.f32 0.0, %v928
      %930 = vmatmul.bf16.gmra.mxu0 %v731
      %v931 = vpop.f32.mrf.mxu0
      %v932 = vadd.f32 0.0, %v931
      %v933 = vpop.f32.mrf.mxu0
      %v934 = vadd.f32 0.0, %v933
      %935 = vmatmul.bf16.gmra.mxu0 %v732
      %v936 = vpop.f32.mrf.mxu0
      %v937 = vadd.f32 0.0, %v936
      %v938 = vpop.f32.mrf.mxu0
      %v939 = vadd.f32 0.0, %v938
      %940 = vdwg.mxu0
      %941 = vmatpush.bf16.msra.mxu0 %v868
      %942 = vmatpush.bf16.msra.mxu0 %v865
      %943 = vmatpush.bf16.msra.mxu0 %v862
      %944 = vmatpush.bf16.msra.mxu0 %v859
      %945 = vmatpush.bf16.msra.mxu0 %v856
      %946 = vmatpush.bf16.msra.mxu0 %v853
      %947 = vmatpush.bf16.msra.mxu0 %v850
      %948 = vmatpush.bf16.msra.mxu0 %v847
      %949 = vmatmul.bf16.gmra.mxu0 %v730
      %v950 = vpop.f32.mrf.mxu0
      %v951 = vadd.f32 0.0, %v950
      %v952 = vpop.f32.mrf.mxu0
      %v953 = vadd.f32 0.0, %v952
      %954 = vmatmul.bf16.gmra.mxu0 %v731
      %v955 = vpop.f32.mrf.mxu0
      %v956 = vadd.f32 0.0, %v955
      %v957 = vpop.f32.mrf.mxu0
      %v958 = vadd.f32 0.0, %v957
      %959 = vmatmul.bf16.gmra.mxu0 %v732
      %v960 = vpop.f32.mrf.mxu0
      %v961 = vadd.f32 0.0, %v960
      %v962 = vpop.f32.mrf.mxu0
      %v963 = vadd.f32 0.0, %v962
      %964 = vdwg.mxu0
      %v965 = vlaneseq
      %v966 = vand.u32 %v965, 127
      %vm967 = vcmp.lt.s32.totalorder %v966, 17
      %v968 = vpack.c.bf16 %v905, %v903
      %v969 = vpack.c.bf16 %v908, %v908
      %v970 = vpack.c.bf16 %v929, %v927
      %v971 = vpack.c.bf16 %v932, %v932
      %v972 = vpack.c.bf16 %v953, %v951
      %v973 = vpack.c.bf16 %v956, %v956
      %vm974 = vcmask 261120
      %v976 = vsel %vm974, %v968, 0
      %v979 = vsel %vm974, %v969, 0
      %v982 = vsel %vm974, %v970, 0
      %v985 = vsel %vm974, %v971, 0
      %987 = vmatpush.bf16.xpose.msra.mxu0 0
      %988 = vmatpush.bf16.xpose.msra.mxu0 0
      %989 = vmatpush.bf16.xpose.msra.mxu0 0
      %990 = vmatpush.bf16.xpose.msra.mxu0 0
      %991 = vmatpush.bf16.xpose.msra.mxu0 0
      %992 = vmatpush.bf16.xpose.msra.mxu0 0
      %993 = vmatpush.bf16.xpose.msra.mxu0 %v985
      %994 = vmatpush.bf16.xpose.msra.mxu0 %v982
      %995 = vmatmul.bf16.gmra.mxu0 %v976
      %v996 = vpop.f32.mrf.mxu0
      %v997 = vadd.f32 0.0, %v996
      %v998 = vpop.f32.mrf.mxu0
      %v999 = vadd.f32 0.0, %v998
      %1000 = vmatmul.bf16.gmra.mxu0 %v979
      %v1001 = vpop.f32.mrf.mxu0
      %v1002 = vadd.f32 0.0, %v1001
      %v1003 = vpop.f32.mrf.mxu0
      %1004 = vdwg.mxu0
      %v1005 = vmul.f32 %v997, 0.17677669
      %v1006 = vmul.f32 %v999, 0.17677669
      %v1007 = vmul.f32 %v1002, 0.17677669
      %v1008 = vsel %vm967, %v1005, -1e+30
      %v1009 = vsel %vm967, %v1006, -1e+30
      %v1010 = vsel %vm967, %v1007, -1e+30
      %vm1011 = vcmask 195584
      %v1012 = vsel %vm1011, %v1008, -inf
      %1013 = vmax.xlane.f32.xlu0 %v1012
      %v1014 = vpop.xlane.xlu0 %1013
      %v1015 = vsel %vm1011, %v1009, -inf
      %1016 = vmax.xlane.f32.xlu0 %v1015
      %v1017 = vpop.xlane.xlu0 %1016
      %v1018 = vsel %vm1011, %v1010, -inf
      %1019 = vmax.xlane.f32.xlu0 %v1018
      %v1020 = vpop.xlane.xlu0 %1019
      %v1021 = vsub.f32 %v1008, %v1014
      %v1022 = vsub.f32 %v1009, %v1017
      %v1023 = vsub.f32 %v1010, %v1020
      %v1024 = vmul.f32 %v1021, 1.442695
      %v1025 = vpow.pop %v1024
      %v1026 = vmul.f32 %v1022, 1.442695
      %v1027 = vpow.pop %v1026
      %v1028 = vmul.f32 %v1023, 1.442695
      %v1029 = vpow.pop %v1028
      %v1030 = vsel %vm1011, %v1025, 0.0
      %1031 = vadd.xlane.f32.xlu0 %v1030
      %v1032 = vpop.xlane.xlu0 %1031
      %v1033 = vsel %vm1011, %v1027, 0.0
      %1034 = vadd.xlane.f32.xlu0 %v1033
      %v1035 = vpop.xlane.xlu0 %1034
      %v1036 = vsel %vm1011, %v1029, 0.0
      %1037 = vadd.xlane.f32.xlu0 %v1036
      %v1038 = vpop.xlane.xlu0 %1037
      %v1039 = vrcp.pop %v1032
      %v1040 = vrcp.pop %v1035
      %v1041 = vrcp.pop %v1038
      %v1042 = vmul.f32 %v1025, %v1039
      %v1043 = vmul.f32 %v1027, %v1040
      %v1044 = vmul.f32 %v1029, %v1041
      %v1045 = vpack.c.bf16 %v1043, %v1042
      %v1046 = vpack.c.bf16 %v1044, %v1044
      %v1048 = vsel %vm1011, %v1045, 0
      %v1051 = vsel %vm1011, %v1046, 0
      %vm1053 = vcmask 1043456
      %v1055 = vsel %vm1053, %v973, 0
      %1057 = vmatpush.bf16.msra.mxu0 0
      %1058 = vmatpush.bf16.msra.mxu0 0
      %1059 = vmatpush.bf16.msra.mxu0 0
      %1060 = vmatpush.bf16.msra.mxu0 0
      %1061 = vmatpush.bf16.msra.mxu0 0
      %1062 = vmatpush.bf16.msra.mxu0 0
      %1063 = vmatpush.bf16.msra.mxu0 %v1055
      %1064 = vmatpush.bf16.msra.mxu0 %v972
      %1065 = vmatmul.bf16.gmra.mxu0 %v1048
      %v1066 = vpop.f32.mrf.mxu0
      %v1067 = vadd.f32 0.0, %v1066
      %v1068 = vpop.f32.mrf.mxu0
      %v1069 = vadd.f32 0.0, %v1068
      %1070 = vmatmul.bf16.gmra.mxu0 %v1051
      %v1071 = vpop.f32.mrf.mxu0
      %v1072 = vadd.f32 0.0, %v1071
      %v1073 = vpop.f32.mrf.mxu0
      %1074 = vdwg.mxu0
      %1077 = vrot.lane.b32.xlu0 %v968, 96
      %v1078 = vpop.permute.xlu0 %1077
      %1079 = vrot.lane.b32.xlu0 %v969, 96
      %v1080 = vpop.permute.xlu0 %1079
      %1083 = vrot.lane.b32.xlu0 %v970, 96
      %v1084 = vpop.permute.xlu0 %1083
      %1085 = vrot.lane.b32.xlu0 %v971, 96
      %v1086 = vpop.permute.xlu0 %1085
      %v1088 = vsel %vm974, %v1078, 0
      %v1091 = vsel %vm974, %v1080, 0
      %v1094 = vsel %vm974, %v1084, 0
      %v1097 = vsel %vm974, %v1086, 0
      %1099 = vmatpush.bf16.xpose.msra.mxu0 0
      %1100 = vmatpush.bf16.xpose.msra.mxu0 0
      %1101 = vmatpush.bf16.xpose.msra.mxu0 0
      %1102 = vmatpush.bf16.xpose.msra.mxu0 0
      %1103 = vmatpush.bf16.xpose.msra.mxu0 0
      %1104 = vmatpush.bf16.xpose.msra.mxu0 0
      %1105 = vmatpush.bf16.xpose.msra.mxu0 %v1097
      %1106 = vmatpush.bf16.xpose.msra.mxu0 %v1094
      %1107 = vmatmul.bf16.gmra.mxu0 %v1088
      %v1108 = vpop.f32.mrf.mxu0
      %v1109 = vadd.f32 0.0, %v1108
      %v1110 = vpop.f32.mrf.mxu0
      %v1111 = vadd.f32 0.0, %v1110
      %1112 = vmatmul.bf16.gmra.mxu0 %v1091
      %v1113 = vpop.f32.mrf.mxu0
      %v1114 = vadd.f32 0.0, %v1113
      %v1115 = vpop.f32.mrf.mxu0
      %1116 = vdwg.mxu0
      %v1117 = vmul.f32 %v1109, 0.17677669
      %v1118 = vmul.f32 %v1111, 0.17677669
      %v1119 = vmul.f32 %v1114, 0.17677669
      %v1120 = vsel %vm967, %v1117, -1e+30
      %v1121 = vsel %vm967, %v1118, -1e+30
      %v1122 = vsel %vm967, %v1119, -1e+30
      %v1123 = vsel %vm1011, %v1120, -inf
      %1124 = vmax.xlane.f32.xlu0 %v1123
      %v1125 = vpop.xlane.xlu0 %1124
      %v1126 = vsel %vm1011, %v1121, -inf
      %1127 = vmax.xlane.f32.xlu0 %v1126
      %v1128 = vpop.xlane.xlu0 %1127
      %v1129 = vsel %vm1011, %v1122, -inf
      %1130 = vmax.xlane.f32.xlu0 %v1129
      %v1131 = vpop.xlane.xlu0 %1130
      %v1132 = vsub.f32 %v1120, %v1125
      %v1133 = vsub.f32 %v1121, %v1128
      %v1134 = vsub.f32 %v1122, %v1131
      %v1135 = vmul.f32 %v1132, 1.442695
      %v1136 = vpow.pop %v1135
      %v1137 = vmul.f32 %v1133, 1.442695
      %v1138 = vpow.pop %v1137
      %v1139 = vmul.f32 %v1134, 1.442695
      %v1140 = vpow.pop %v1139
      %v1141 = vsel %vm1011, %v1136, 0.0
      %1142 = vadd.xlane.f32.xlu0 %v1141
      %v1143 = vpop.xlane.xlu0 %1142
      %v1144 = vsel %vm1011, %v1138, 0.0
      %1145 = vadd.xlane.f32.xlu0 %v1144
      %v1146 = vpop.xlane.xlu0 %1145
      %v1147 = vsel %vm1011, %v1140, 0.0
      %1148 = vadd.xlane.f32.xlu0 %v1147
      %v1149 = vpop.xlane.xlu0 %1148
      %v1150 = vrcp.pop %v1143
      %v1151 = vrcp.pop %v1146
      %v1152 = vrcp.pop %v1149
      %v1153 = vmul.f32 %v1136, %v1150
      %v1154 = vmul.f32 %v1138, %v1151
      %v1155 = vmul.f32 %v1140, %v1152
      %v1156 = vpack.c.bf16 %v1154, %v1153
      %v1157 = vpack.c.bf16 %v1155, %v1155
      %1160 = vrot.lane.b32.xlu0 %v972, 96
      %v1161 = vpop.permute.xlu0 %1160
      %1162 = vrot.lane.b32.xlu0 %v973, 96
      %v1163 = vpop.permute.xlu0 %1162
      %v1166 = vsel %vm1011, %v1156, 0
      %v1169 = vsel %vm1011, %v1157, 0
      %v1172 = vsel %vm1053, %v1163, 0
      %1174 = vmatpush.bf16.msra.mxu0 0
      %1175 = vmatpush.bf16.msra.mxu0 0
      %1176 = vmatpush.bf16.msra.mxu0 0
      %1177 = vmatpush.bf16.msra.mxu0 0
      %1178 = vmatpush.bf16.msra.mxu0 0
      %1179 = vmatpush.bf16.msra.mxu0 0
      %1180 = vmatpush.bf16.msra.mxu0 %v1172
      %1181 = vmatpush.bf16.msra.mxu0 %v1161
      %1182 = vmatmul.bf16.gmra.mxu0 %v1166
      %v1183 = vpop.f32.mrf.mxu0
      %v1184 = vadd.f32 0.0, %v1183
      %v1185 = vpop.f32.mrf.mxu0
      %v1186 = vadd.f32 0.0, %v1185
      %1187 = vmatmul.bf16.gmra.mxu0 %v1169
      %v1188 = vpop.f32.mrf.mxu0
      %v1189 = vadd.f32 0.0, %v1188
      %v1190 = vpop.f32.mrf.mxu0
      %1191 = vdwg.mxu0
      %1192 = vrot.lane.b32.xlu0 %v968, 64
      %v1193 = vpop.permute.xlu0 %1192
      %1194 = vrot.lane.b32.xlu0 %v969, 64
      %v1195 = vpop.permute.xlu0 %1194
      %1196 = vrot.lane.b32.xlu0 %v970, 64
      %v1197 = vpop.permute.xlu0 %1196
      %1198 = vrot.lane.b32.xlu0 %v971, 64
      %v1199 = vpop.permute.xlu0 %1198
      %v1201 = vsel %vm974, %v1193, 0
      %v1204 = vsel %vm974, %v1195, 0
      %v1207 = vsel %vm974, %v1197, 0
      %v1210 = vsel %vm974, %v1199, 0
      %1212 = vmatpush.bf16.xpose.msra.mxu0 0
      %1213 = vmatpush.bf16.xpose.msra.mxu0 0
      %1214 = vmatpush.bf16.xpose.msra.mxu0 0
      %1215 = vmatpush.bf16.xpose.msra.mxu0 0
      %1216 = vmatpush.bf16.xpose.msra.mxu0 0
      %1217 = vmatpush.bf16.xpose.msra.mxu0 0
      %1218 = vmatpush.bf16.xpose.msra.mxu0 %v1210
      %1219 = vmatpush.bf16.xpose.msra.mxu0 %v1207
      %1220 = vmatmul.bf16.gmra.mxu0 %v1201
      %v1221 = vpop.f32.mrf.mxu0
      %v1222 = vadd.f32 0.0, %v1221
      %v1223 = vpop.f32.mrf.mxu0
      %v1224 = vadd.f32 0.0, %v1223
      %1225 = vmatmul.bf16.gmra.mxu0 %v1204
      %v1226 = vpop.f32.mrf.mxu0
      %v1227 = vadd.f32 0.0, %v1226
      %v1228 = vpop.f32.mrf.mxu0
      %1229 = vdwg.mxu0
      %v1230 = vmul.f32 %v1222, 0.17677669
      %v1231 = vmul.f32 %v1224, 0.17677669
      %v1232 = vmul.f32 %v1227, 0.17677669
      %v1233 = vsel %vm967, %v1230, -1e+30
      %v1234 = vsel %vm967, %v1231, -1e+30
      %v1235 = vsel %vm967, %v1232, -1e+30
      %v1236 = vsel %vm1011, %v1233, -inf
      %1237 = vmax.xlane.f32.xlu0 %v1236
      %v1238 = vpop.xlane.xlu0 %1237
      %v1239 = vsel %vm1011, %v1234, -inf
      %1240 = vmax.xlane.f32.xlu0 %v1239
      %v1241 = vpop.xlane.xlu0 %1240
      %v1242 = vsel %vm1011, %v1235, -inf
      %1243 = vmax.xlane.f32.xlu0 %v1242
      %v1244 = vpop.xlane.xlu0 %1243
      %v1245 = vsub.f32 %v1233, %v1238
      %v1246 = vsub.f32 %v1234, %v1241
      %v1247 = vsub.f32 %v1235, %v1244
      %v1248 = vmul.f32 %v1245, 1.442695
      %v1249 = vpow.pop %v1248
      %v1250 = vmul.f32 %v1246, 1.442695
      %v1251 = vpow.pop %v1250
      %v1252 = vmul.f32 %v1247, 1.442695
      %v1253 = vpow.pop %v1252
      %v1254 = vsel %vm1011, %v1249, 0.0
      %1255 = vadd.xlane.f32.xlu0 %v1254
      %v1256 = vpop.xlane.xlu0 %1255
      %v1257 = vsel %vm1011, %v1251, 0.0
      %1258 = vadd.xlane.f32.xlu0 %v1257
      %v1259 = vpop.xlane.xlu0 %1258
      %v1260 = vsel %vm1011, %v1253, 0.0
      %1261 = vadd.xlane.f32.xlu0 %v1260
      %v1262 = vpop.xlane.xlu0 %1261
      %v1263 = vrcp.pop %v1256
      %v1264 = vrcp.pop %v1259
      %v1265 = vrcp.pop %v1262
      %v1266 = vmul.f32 %v1249, %v1263
      %v1267 = vmul.f32 %v1251, %v1264
      %v1268 = vmul.f32 %v1253, %v1265
      %v1269 = vpack.c.bf16 %v1267, %v1266
      %v1270 = vpack.c.bf16 %v1268, %v1268
      %1271 = vrot.lane.b32.xlu0 %v972, 64
      %v1272 = vpop.permute.xlu0 %1271
      %1273 = vrot.lane.b32.xlu0 %v973, 64
      %v1274 = vpop.permute.xlu0 %1273
      %v1277 = vsel %vm1011, %v1269, 0
      %v1280 = vsel %vm1011, %v1270, 0
      %v1283 = vsel %vm1053, %v1274, 0
      %1285 = vmatpush.bf16.msra.mxu0 0
      %1286 = vmatpush.bf16.msra.mxu0 0
      %1287 = vmatpush.bf16.msra.mxu0 0
      %1288 = vmatpush.bf16.msra.mxu0 0
      %1289 = vmatpush.bf16.msra.mxu0 0
      %1290 = vmatpush.bf16.msra.mxu0 0
      %1291 = vmatpush.bf16.msra.mxu0 %v1283
      %1292 = vmatpush.bf16.msra.mxu0 %v1272
      %1293 = vmatmul.bf16.gmra.mxu0 %v1277
      %v1294 = vpop.f32.mrf.mxu0
      %v1295 = vadd.f32 0.0, %v1294
      %v1296 = vpop.f32.mrf.mxu0
      %v1297 = vadd.f32 0.0, %v1296
      %1298 = vmatmul.bf16.gmra.mxu0 %v1280
      %v1299 = vpop.f32.mrf.mxu0
      %v1300 = vadd.f32 0.0, %v1299
      %v1301 = vpop.f32.mrf.mxu0
      %1302 = vdwg.mxu0
      %1303 = vrot.lane.b32.xlu0 %v968, 32
      %v1304 = vpop.permute.xlu0 %1303
      %1305 = vrot.lane.b32.xlu0 %v969, 32
      %v1306 = vpop.permute.xlu0 %1305
      %1307 = vrot.lane.b32.xlu0 %v970, 32
      %v1308 = vpop.permute.xlu0 %1307
      %1309 = vrot.lane.b32.xlu0 %v971, 32
      %v1310 = vpop.permute.xlu0 %1309
      %v1312 = vsel %vm974, %v1304, 0
      %v1315 = vsel %vm974, %v1306, 0
      %v1318 = vsel %vm974, %v1308, 0
      %v1321 = vsel %vm974, %v1310, 0
      %1323 = vmatpush.bf16.xpose.msra.mxu0 0
      %1324 = vmatpush.bf16.xpose.msra.mxu0 0
      %1325 = vmatpush.bf16.xpose.msra.mxu0 0
      %1326 = vmatpush.bf16.xpose.msra.mxu0 0
      %1327 = vmatpush.bf16.xpose.msra.mxu0 0
      %1328 = vmatpush.bf16.xpose.msra.mxu0 0
      %1329 = vmatpush.bf16.xpose.msra.mxu0 %v1321
      %1330 = vmatpush.bf16.xpose.msra.mxu0 %v1318
      %1331 = vmatmul.bf16.gmra.mxu0 %v1312
      %v1332 = vpop.f32.mrf.mxu0
      %v1333 = vadd.f32 0.0, %v1332
      %v1334 = vpop.f32.mrf.mxu0
      %v1335 = vadd.f32 0.0, %v1334
      %1336 = vmatmul.bf16.gmra.mxu0 %v1315
      %v1337 = vpop.f32.mrf.mxu0
      %v1338 = vadd.f32 0.0, %v1337
      %v1339 = vpop.f32.mrf.mxu0
      %1340 = vdwg.mxu0
      %v1341 = vmul.f32 %v1333, 0.17677669
      %v1342 = vmul.f32 %v1335, 0.17677669
      %v1343 = vmul.f32 %v1338, 0.17677669
      %v1344 = vsel %vm967, %v1341, -1e+30
      %v1345 = vsel %vm967, %v1342, -1e+30
      %v1346 = vsel %vm967, %v1343, -1e+30
      %v1347 = vsel %vm1011, %v1344, -inf
      %1348 = vmax.xlane.f32.xlu0 %v1347
      %v1349 = vpop.xlane.xlu0 %1348
      %v1350 = vsel %vm1011, %v1345, -inf
      %1351 = vmax.xlane.f32.xlu0 %v1350
      %v1352 = vpop.xlane.xlu0 %1351
      %v1353 = vsel %vm1011, %v1346, -inf
      %1354 = vmax.xlane.f32.xlu0 %v1353
      %v1355 = vpop.xlane.xlu0 %1354
      %v1356 = vsub.f32 %v1344, %v1349
      %v1357 = vsub.f32 %v1345, %v1352
      %v1358 = vsub.f32 %v1346, %v1355
      %v1359 = vmul.f32 %v1356, 1.442695
      %v1360 = vpow.pop %v1359
      %v1361 = vmul.f32 %v1357, 1.442695
      %v1362 = vpow.pop %v1361
      %v1363 = vmul.f32 %v1358, 1.442695
      %v1364 = vpow.pop %v1363
      %v1365 = vsel %vm1011, %v1360, 0.0
      %1366 = vadd.xlane.f32.xlu0 %v1365
      %v1367 = vpop.xlane.xlu0 %1366
      %v1368 = vsel %vm1011, %v1362, 0.0
      %1369 = vadd.xlane.f32.xlu0 %v1368
      %v1370 = vpop.xlane.xlu0 %1369
      %v1371 = vsel %vm1011, %v1364, 0.0
      %1372 = vadd.xlane.f32.xlu0 %v1371
      %v1373 = vpop.xlane.xlu0 %1372
      %v1374 = vrcp.pop %v1367
      %v1375 = vrcp.pop %v1370
      %v1376 = vrcp.pop %v1373
      %v1377 = vmul.f32 %v1360, %v1374
      %v1378 = vmul.f32 %v1362, %v1375
      %v1379 = vmul.f32 %v1364, %v1376
      %v1380 = vpack.c.bf16 %v1378, %v1377
      %v1381 = vpack.c.bf16 %v1379, %v1379
      %1382 = vrot.lane.b32.xlu0 %v972, 32
      %v1383 = vpop.permute.xlu0 %1382
      %1384 = vrot.lane.b32.xlu0 %v973, 32
      %v1385 = vpop.permute.xlu0 %1384
      %v1388 = vsel %vm1011, %v1380, 0
      %v1391 = vsel %vm1011, %v1381, 0
      %v1394 = vsel %vm1053, %v1385, 0
      %1396 = vmatpush.bf16.msra.mxu0 0
      %1397 = vmatpush.bf16.msra.mxu0 0
      %1398 = vmatpush.bf16.msra.mxu0 0
      %1399 = vmatpush.bf16.msra.mxu0 0
      %1400 = vmatpush.bf16.msra.mxu0 0
      %1401 = vmatpush.bf16.msra.mxu0 0
      %1402 = vmatpush.bf16.msra.mxu0 %v1394
      %1403 = vmatpush.bf16.msra.mxu0 %v1383
      %1404 = vmatmul.bf16.gmra.mxu0 %v1388
      %v1405 = vpop.f32.mrf.mxu0
      %v1406 = vadd.f32 0.0, %v1405
      %v1407 = vpop.f32.mrf.mxu0
      %v1408 = vadd.f32 0.0, %v1407
      %1409 = vmatmul.bf16.gmra.mxu0 %v1391
      %v1410 = vpop.f32.mrf.mxu0
      %v1411 = vadd.f32 0.0, %v1410
      %v1412 = vpop.f32.mrf.mxu0
      %1413 = vdwg.mxu0
      %1417 = vrot.lane.b32.xlu0 %v1184, 32
      %v1418 = vpop.permute.xlu0 %1417
      %1419 = vrot.lane.b32.xlu0 %v1186, 32
      %v1420 = vpop.permute.xlu0 %1419
      %1421 = vrot.lane.b32.xlu0 %v1189, 32
      %v1422 = vpop.permute.xlu0 %1421
      %1429 = vrot.lane.b32.xlu0 %v1295, 64
      %v1430 = vpop.permute.xlu0 %1429
      %1431 = vrot.lane.b32.xlu0 %v1297, 64
      %v1432 = vpop.permute.xlu0 %1431
      %1433 = vrot.lane.b32.xlu0 %v1300, 64
      %v1434 = vpop.permute.xlu0 %1433
      %1441 = vrot.lane.b32.xlu0 %v1406, 96
      %v1442 = vpop.permute.xlu0 %1441
      %1443 = vrot.lane.b32.xlu0 %v1408, 96
      %v1444 = vpop.permute.xlu0 %1443
      %1445 = vrot.lane.b32.xlu0 %v1411, 96
      %v1446 = vpop.permute.xlu0 %1445
      %v1450 = vsel %vm974, %v1067, %v1418
      %v1451 = vsel %vm974, %v1069, %v1420
      %v1452 = vsel %vm974, %v1072, %v1422
      %vm1453 = vcmask 523264
      %v1454 = vsel %vm1453, %v1450, %v1430
      %v1455 = vsel %vm1453, %v1451, %v1432
      %v1456 = vsel %vm1453, %v1452, %v1434
      %vm1457 = vcmask 785408
      %v1458 = vsel %vm1457, %v1454, %v1442
      %v1459 = vsel %vm1457, %v1455, %v1444
      %v1460 = vsel %vm1457, %v1456, %v1446
      %v1461 = vpack.c.bf16 %v913, %v910
      %v1462 = vpack.c.bf16 %v915, %v915
      %v1463 = vpack.c.bf16 %v937, %v934
      %v1464 = vpack.c.bf16 %v939, %v939
      %v1465 = vpack.c.bf16 %v961, %v958
      %v1466 = vpack.c.bf16 %v963, %v963
      %v1468 = vsel %vm974, %v1461, 0
      %v1471 = vsel %vm974, %v1462, 0
      %v1474 = vsel %vm974, %v1463, 0
      %v1477 = vsel %vm974, %v1464, 0
      %1479 = vmatpush.bf16.xpose.msra.mxu0 0
      %1480 = vmatpush.bf16.xpose.msra.mxu0 0
      %1481 = vmatpush.bf16.xpose.msra.mxu0 0
      %1482 = vmatpush.bf16.xpose.msra.mxu0 0
      %1483 = vmatpush.bf16.xpose.msra.mxu0 0
      %1484 = vmatpush.bf16.xpose.msra.mxu0 0
      %1485 = vmatpush.bf16.xpose.msra.mxu0 %v1477
      %1486 = vmatpush.bf16.xpose.msra.mxu0 %v1474
      %1487 = vmatmul.bf16.gmra.mxu0 %v1468
      %v1488 = vpop.f32.mrf.mxu0
      %v1489 = vadd.f32 0.0, %v1488
      %v1490 = vpop.f32.mrf.mxu0
      %v1491 = vadd.f32 0.0, %v1490
      %1492 = vmatmul.bf16.gmra.mxu0 %v1471
      %v1493 = vpop.f32.mrf.mxu0
      %v1494 = vadd.f32 0.0, %v1493
      %v1495 = vpop.f32.mrf.mxu0
      %1496 = vdwg.mxu0
      %v1497 = vmul.f32 %v1489, 0.17677669
      %v1498 = vmul.f32 %v1491, 0.17677669
      %v1499 = vmul.f32 %v1494, 0.17677669
      %v1500 = vsel %vm967, %v1497, -1e+30
      %v1501 = vsel %vm967, %v1498, -1e+30
      %v1502 = vsel %vm967, %v1499, -1e+30
      %v1503 = vsel %vm1011, %v1500, -inf
      %1504 = vmax.xlane.f32.xlu0 %v1503
      %v1505 = vpop.xlane.xlu0 %1504
      %v1506 = vsel %vm1011, %v1501, -inf
      %1507 = vmax.xlane.f32.xlu0 %v1506
      %v1508 = vpop.xlane.xlu0 %1507
      %v1509 = vsel %vm1011, %v1502, -inf
      %1510 = vmax.xlane.f32.xlu0 %v1509
      %v1511 = vpop.xlane.xlu0 %1510
      %v1512 = vsub.f32 %v1500, %v1505
      %v1513 = vsub.f32 %v1501, %v1508
      %v1514 = vsub.f32 %v1502, %v1511
      %v1515 = vmul.f32 %v1512, 1.442695
      %v1516 = vpow.pop %v1515
      %v1517 = vmul.f32 %v1513, 1.442695
      %v1518 = vpow.pop %v1517
      %v1519 = vmul.f32 %v1514, 1.442695
      %v1520 = vpow.pop %v1519
      %v1521 = vsel %vm1011, %v1516, 0.0
      %1522 = vadd.xlane.f32.xlu0 %v1521
      %v1523 = vpop.xlane.xlu0 %1522
      %v1524 = vsel %vm1011, %v1518, 0.0
      %1525 = vadd.xlane.f32.xlu0 %v1524
      %v1526 = vpop.xlane.xlu0 %1525
      %v1527 = vsel %vm1011, %v1520, 0.0
      %1528 = vadd.xlane.f32.xlu0 %v1527
      %v1529 = vpop.xlane.xlu0 %1528
      %v1530 = vrcp.pop %v1523
      %v1531 = vrcp.pop %v1526
      %v1532 = vrcp.pop %v1529
      %v1533 = vmul.f32 %v1516, %v1530
      %v1534 = vmul.f32 %v1518, %v1531
      %v1535 = vmul.f32 %v1520, %v1532
      %v1536 = vpack.c.bf16 %v1534, %v1533
      %v1537 = vpack.c.bf16 %v1535, %v1535
      %v1539 = vsel %vm1011, %v1536, 0
      %v1542 = vsel %vm1011, %v1537, 0
      %v1545 = vsel %vm1053, %v1466, 0
      %1547 = vmatpush.bf16.msra.mxu0 0
      %1548 = vmatpush.bf16.msra.mxu0 0
      %1549 = vmatpush.bf16.msra.mxu0 0
      %1550 = vmatpush.bf16.msra.mxu0 0
      %1551 = vmatpush.bf16.msra.mxu0 0
      %1552 = vmatpush.bf16.msra.mxu0 0
      %1553 = vmatpush.bf16.msra.mxu0 %v1545
      %1554 = vmatpush.bf16.msra.mxu0 %v1465
      %1555 = vmatmul.bf16.gmra.mxu0 %v1539
      %v1556 = vpop.f32.mrf.mxu0
      %v1557 = vadd.f32 0.0, %v1556
      %v1558 = vpop.f32.mrf.mxu0
      %v1559 = vadd.f32 0.0, %v1558
      %1560 = vmatmul.bf16.gmra.mxu0 %v1542
      %v1561 = vpop.f32.mrf.mxu0
      %v1562 = vadd.f32 0.0, %v1561
      %v1563 = vpop.f32.mrf.mxu0
      %1564 = vdwg.mxu0
      %1567 = vrot.lane.b32.xlu0 %v1461, 96
      %v1568 = vpop.permute.xlu0 %1567
      %1569 = vrot.lane.b32.xlu0 %v1462, 96
      %v1570 = vpop.permute.xlu0 %1569
      %1573 = vrot.lane.b32.xlu0 %v1463, 96
      %v1574 = vpop.permute.xlu0 %1573
      %1575 = vrot.lane.b32.xlu0 %v1464, 96
      %v1576 = vpop.permute.xlu0 %1575
      %v1578 = vsel %vm974, %v1568, 0
      %v1581 = vsel %vm974, %v1570, 0
      %v1584 = vsel %vm974, %v1574, 0
      %v1587 = vsel %vm974, %v1576, 0
      %1589 = vmatpush.bf16.xpose.msra.mxu0 0
      %1590 = vmatpush.bf16.xpose.msra.mxu0 0
      %1591 = vmatpush.bf16.xpose.msra.mxu0 0
      %1592 = vmatpush.bf16.xpose.msra.mxu0 0
      %1593 = vmatpush.bf16.xpose.msra.mxu0 0
      %1594 = vmatpush.bf16.xpose.msra.mxu0 0
      %1595 = vmatpush.bf16.xpose.msra.mxu0 %v1587
      %1596 = vmatpush.bf16.xpose.msra.mxu0 %v1584
      %1597 = vmatmul.bf16.gmra.mxu0 %v1578
      %v1598 = vpop.f32.mrf.mxu0
      %v1599 = vadd.f32 0.0, %v1598
      %v1600 = vpop.f32.mrf.mxu0
      %v1601 = vadd.f32 0.0, %v1600
      %1602 = vmatmul.bf16.gmra.mxu0 %v1581
      %v1603 = vpop.f32.mrf.mxu0
      %v1604 = vadd.f32 0.0, %v1603
      %v1605 = vpop.f32.mrf.mxu0
      %1606 = vdwg.mxu0
      %v1607 = vmul.f32 %v1599, 0.17677669
      %v1608 = vmul.f32 %v1601, 0.17677669
      %v1609 = vmul.f32 %v1604, 0.17677669
      %v1610 = vsel %vm967, %v1607, -1e+30
      %v1611 = vsel %vm967, %v1608, -1e+30
      %v1612 = vsel %vm967, %v1609, -1e+30
      %v1613 = vsel %vm1011, %v1610, -inf
      %1614 = vmax.xlane.f32.xlu0 %v1613
      %v1615 = vpop.xlane.xlu0 %1614
      %v1616 = vsel %vm1011, %v1611, -inf
      %1617 = vmax.xlane.f32.xlu0 %v1616
      %v1618 = vpop.xlane.xlu0 %1617
      %v1619 = vsel %vm1011, %v1612, -inf
      %1620 = vmax.xlane.f32.xlu0 %v1619
      %v1621 = vpop.xlane.xlu0 %1620
      %v1622 = vsub.f32 %v1610, %v1615
      %v1623 = vsub.f32 %v1611, %v1618
      %v1624 = vsub.f32 %v1612, %v1621
      %v1625 = vmul.f32 %v1622, 1.442695
      %v1626 = vpow.pop %v1625
      %v1627 = vmul.f32 %v1623, 1.442695
      %v1628 = vpow.pop %v1627
      %v1629 = vmul.f32 %v1624, 1.442695
      %v1630 = vpow.pop %v1629
      %v1631 = vsel %vm1011, %v1626, 0.0
      %1632 = vadd.xlane.f32.xlu0 %v1631
      %v1633 = vpop.xlane.xlu0 %1632
      %v1634 = vsel %vm1011, %v1628, 0.0
      %1635 = vadd.xlane.f32.xlu0 %v1634
      %v1636 = vpop.xlane.xlu0 %1635
      %v1637 = vsel %vm1011, %v1630, 0.0
      %1638 = vadd.xlane.f32.xlu0 %v1637
      %v1639 = vpop.xlane.xlu0 %1638
      %v1640 = vrcp.pop %v1633
      %v1641 = vrcp.pop %v1636
      %v1642 = vrcp.pop %v1639
      %v1643 = vmul.f32 %v1626, %v1640
      %v1644 = vmul.f32 %v1628, %v1641
      %v1645 = vmul.f32 %v1630, %v1642
      %v1646 = vpack.c.bf16 %v1644, %v1643
      %v1647 = vpack.c.bf16 %v1645, %v1645
      %1650 = vrot.lane.b32.xlu0 %v1465, 96
      %v1651 = vpop.permute.xlu0 %1650
      %1652 = vrot.lane.b32.xlu0 %v1466, 96
      %v1653 = vpop.permute.xlu0 %1652
      %v1656 = vsel %vm1011, %v1646, 0
      %v1659 = vsel %vm1011, %v1647, 0
      %v1662 = vsel %vm1053, %v1653, 0
      %1664 = vmatpush.bf16.msra.mxu0 0
      %1665 = vmatpush.bf16.msra.mxu0 0
      %1666 = vmatpush.bf16.msra.mxu0 0
      %1667 = vmatpush.bf16.msra.mxu0 0
      %1668 = vmatpush.bf16.msra.mxu0 0
      %1669 = vmatpush.bf16.msra.mxu0 0
      %1670 = vmatpush.bf16.msra.mxu0 %v1662
      %1671 = vmatpush.bf16.msra.mxu0 %v1651
      %1672 = vmatmul.bf16.gmra.mxu0 %v1656
      %v1673 = vpop.f32.mrf.mxu0
      %v1674 = vadd.f32 0.0, %v1673
      %v1675 = vpop.f32.mrf.mxu0
      %v1676 = vadd.f32 0.0, %v1675
      %1677 = vmatmul.bf16.gmra.mxu0 %v1659
      %v1678 = vpop.f32.mrf.mxu0
      %v1679 = vadd.f32 0.0, %v1678
      %v1680 = vpop.f32.mrf.mxu0
      %1681 = vdwg.mxu0
      %1682 = vrot.lane.b32.xlu0 %v1461, 64
      %v1683 = vpop.permute.xlu0 %1682
      %1684 = vrot.lane.b32.xlu0 %v1462, 64
      %v1685 = vpop.permute.xlu0 %1684
      %1686 = vrot.lane.b32.xlu0 %v1463, 64
      %v1687 = vpop.permute.xlu0 %1686
      %1688 = vrot.lane.b32.xlu0 %v1464, 64
      %v1689 = vpop.permute.xlu0 %1688
      %v1691 = vsel %vm974, %v1683, 0
      %v1694 = vsel %vm974, %v1685, 0
      %v1697 = vsel %vm974, %v1687, 0
      %v1700 = vsel %vm974, %v1689, 0
      %1702 = vmatpush.bf16.xpose.msra.mxu0 0
      %1703 = vmatpush.bf16.xpose.msra.mxu0 0
      %1704 = vmatpush.bf16.xpose.msra.mxu0 0
      %1705 = vmatpush.bf16.xpose.msra.mxu0 0
      %1706 = vmatpush.bf16.xpose.msra.mxu0 0
      %1707 = vmatpush.bf16.xpose.msra.mxu0 0
      %1708 = vmatpush.bf16.xpose.msra.mxu0 %v1700
      %1709 = vmatpush.bf16.xpose.msra.mxu0 %v1697
      %1710 = vmatmul.bf16.gmra.mxu0 %v1691
      %v1711 = vpop.f32.mrf.mxu0
      %v1712 = vadd.f32 0.0, %v1711
      %v1713 = vpop.f32.mrf.mxu0
      %v1714 = vadd.f32 0.0, %v1713
      %1715 = vmatmul.bf16.gmra.mxu0 %v1694
      %v1716 = vpop.f32.mrf.mxu0
      %v1717 = vadd.f32 0.0, %v1716
      %v1718 = vpop.f32.mrf.mxu0
      %1719 = vdwg.mxu0
      %v1720 = vmul.f32 %v1712, 0.17677669
      %v1721 = vmul.f32 %v1714, 0.17677669
      %v1722 = vmul.f32 %v1717, 0.17677669
      %v1723 = vsel %vm967, %v1720, -1e+30
      %v1724 = vsel %vm967, %v1721, -1e+30
      %v1725 = vsel %vm967, %v1722, -1e+30
      %v1726 = vsel %vm1011, %v1723, -inf
      %1727 = vmax.xlane.f32.xlu0 %v1726
      %v1728 = vpop.xlane.xlu0 %1727
      %v1729 = vsel %vm1011, %v1724, -inf
      %1730 = vmax.xlane.f32.xlu0 %v1729
      %v1731 = vpop.xlane.xlu0 %1730
      %v1732 = vsel %vm1011, %v1725, -inf
      %1733 = vmax.xlane.f32.xlu0 %v1732
      %v1734 = vpop.xlane.xlu0 %1733
      %v1735 = vsub.f32 %v1723, %v1728
      %v1736 = vsub.f32 %v1724, %v1731
      %v1737 = vsub.f32 %v1725, %v1734
      %v1738 = vmul.f32 %v1735, 1.442695
      %v1739 = vpow.pop %v1738
      %v1740 = vmul.f32 %v1736, 1.442695
      %v1741 = vpow.pop %v1740
      %v1742 = vmul.f32 %v1737, 1.442695
      %v1743 = vpow.pop %v1742
      %v1744 = vsel %vm1011, %v1739, 0.0
      %1745 = vadd.xlane.f32.xlu0 %v1744
      %v1746 = vpop.xlane.xlu0 %1745
      %v1747 = vsel %vm1011, %v1741, 0.0
      %1748 = vadd.xlane.f32.xlu0 %v1747
      %v1749 = vpop.xlane.xlu0 %1748
      %v1750 = vsel %vm1011, %v1743, 0.0
      %1751 = vadd.xlane.f32.xlu0 %v1750
      %v1752 = vpop.xlane.xlu0 %1751
      %v1753 = vrcp.pop %v1746
      %v1754 = vrcp.pop %v1749
      %v1755 = vrcp.pop %v1752
      %v1756 = vmul.f32 %v1739, %v1753
      %v1757 = vmul.f32 %v1741, %v1754
      %v1758 = vmul.f32 %v1743, %v1755
      %v1759 = vpack.c.bf16 %v1757, %v1756
      %v1760 = vpack.c.bf16 %v1758, %v1758
      %1761 = vrot.lane.b32.xlu0 %v1465, 64
      %v1762 = vpop.permute.xlu0 %1761
      %1763 = vrot.lane.b32.xlu0 %v1466, 64
      %v1764 = vpop.permute.xlu0 %1763
      %v1767 = vsel %vm1011, %v1759, 0
      %v1770 = vsel %vm1011, %v1760, 0
      %v1773 = vsel %vm1053, %v1764, 0
      %1775 = vmatpush.bf16.msra.mxu0 0
      %1776 = vmatpush.bf16.msra.mxu0 0
      %1777 = vmatpush.bf16.msra.mxu0 0
      %1778 = vmatpush.bf16.msra.mxu0 0
      %1779 = vmatpush.bf16.msra.mxu0 0
      %1780 = vmatpush.bf16.msra.mxu0 0
      %1781 = vmatpush.bf16.msra.mxu0 %v1773
      %1782 = vmatpush.bf16.msra.mxu0 %v1762
      %1783 = vmatmul.bf16.gmra.mxu0 %v1767
      %v1784 = vpop.f32.mrf.mxu0
      %v1785 = vadd.f32 0.0, %v1784
      %v1786 = vpop.f32.mrf.mxu0
      %v1787 = vadd.f32 0.0, %v1786
      %1788 = vmatmul.bf16.gmra.mxu0 %v1770
      %v1789 = vpop.f32.mrf.mxu0
      %v1790 = vadd.f32 0.0, %v1789
      %v1791 = vpop.f32.mrf.mxu0
      %1792 = vdwg.mxu0
      %1793 = vrot.lane.b32.xlu0 %v1461, 32
      %v1794 = vpop.permute.xlu0 %1793
      %1795 = vrot.lane.b32.xlu0 %v1462, 32
      %v1796 = vpop.permute.xlu0 %1795
      %1797 = vrot.lane.b32.xlu0 %v1463, 32
      %v1798 = vpop.permute.xlu0 %1797
      %1799 = vrot.lane.b32.xlu0 %v1464, 32
      %v1800 = vpop.permute.xlu0 %1799
      %v1802 = vsel %vm974, %v1794, 0
      %v1805 = vsel %vm974, %v1796, 0
      %v1808 = vsel %vm974, %v1798, 0
      %v1811 = vsel %vm974, %v1800, 0
      %1813 = vmatpush.bf16.xpose.msra.mxu0 0
      %1814 = vmatpush.bf16.xpose.msra.mxu0 0
      %1815 = vmatpush.bf16.xpose.msra.mxu0 0
      %1816 = vmatpush.bf16.xpose.msra.mxu0 0
      %1817 = vmatpush.bf16.xpose.msra.mxu0 0
      %1818 = vmatpush.bf16.xpose.msra.mxu0 0
      %1819 = vmatpush.bf16.xpose.msra.mxu0 %v1811
      %1820 = vmatpush.bf16.xpose.msra.mxu0 %v1808
      %1821 = vmatmul.bf16.gmra.mxu0 %v1802
      %v1822 = vpop.f32.mrf.mxu0
      %v1823 = vadd.f32 0.0, %v1822
      %v1824 = vpop.f32.mrf.mxu0
      %v1825 = vadd.f32 0.0, %v1824
      %1826 = vmatmul.bf16.gmra.mxu0 %v1805
      %v1827 = vpop.f32.mrf.mxu0
      %v1828 = vadd.f32 0.0, %v1827
      %v1829 = vpop.f32.mrf.mxu0
      %1830 = vdwg.mxu0
      %v1831 = vmul.f32 %v1823, 0.17677669
      %v1832 = vmul.f32 %v1825, 0.17677669
      %v1833 = vmul.f32 %v1828, 0.17677669
      %v1834 = vsel %vm967, %v1831, -1e+30
      %v1835 = vsel %vm967, %v1832, -1e+30
      %v1836 = vsel %vm967, %v1833, -1e+30
      %v1837 = vsel %vm1011, %v1834, -inf
      %1838 = vmax.xlane.f32.xlu0 %v1837
      %v1839 = vpop.xlane.xlu0 %1838
      %v1840 = vsel %vm1011, %v1835, -inf
      %1841 = vmax.xlane.f32.xlu0 %v1840
      %v1842 = vpop.xlane.xlu0 %1841
      %v1843 = vsel %vm1011, %v1836, -inf
      %1844 = vmax.xlane.f32.xlu0 %v1843
      %v1845 = vpop.xlane.xlu0 %1844
      %v1846 = vsub.f32 %v1834, %v1839
      %v1847 = vsub.f32 %v1835, %v1842
      %v1848 = vsub.f32 %v1836, %v1845
      %v1849 = vmul.f32 %v1846, 1.442695
      %v1850 = vpow.pop %v1849
      %v1851 = vmul.f32 %v1847, 1.442695
      %v1852 = vpow.pop %v1851
      %v1853 = vmul.f32 %v1848, 1.442695
      %v1854 = vpow.pop %v1853
      %v1855 = vsel %vm1011, %v1850, 0.0
      %1856 = vadd.xlane.f32.xlu0 %v1855
      %v1857 = vpop.xlane.xlu0 %1856
      %v1858 = vsel %vm1011, %v1852, 0.0
      %1859 = vadd.xlane.f32.xlu0 %v1858
      %v1860 = vpop.xlane.xlu0 %1859
      %v1861 = vsel %vm1011, %v1854, 0.0
      %1862 = vadd.xlane.f32.xlu0 %v1861
      %v1863 = vpop.xlane.xlu0 %1862
      %v1864 = vrcp.pop %v1857
      %v1865 = vrcp.pop %v1860
      %v1866 = vrcp.pop %v1863
      %v1867 = vmul.f32 %v1850, %v1864
      %v1868 = vmul.f32 %v1852, %v1865
      %v1869 = vmul.f32 %v1854, %v1866
      %v1870 = vpack.c.bf16 %v1868, %v1867
      %v1871 = vpack.c.bf16 %v1869, %v1869
      %1872 = vrot.lane.b32.xlu0 %v1465, 32
      %v1873 = vpop.permute.xlu0 %1872
      %1874 = vrot.lane.b32.xlu0 %v1466, 32
      %v1875 = vpop.permute.xlu0 %1874
      %v1878 = vsel %vm1011, %v1870, 0
      %v1881 = vsel %vm1011, %v1871, 0
      %v1884 = vsel %vm1053, %v1875, 0
      %1886 = vmatpush.bf16.msra.mxu0 0
      %1887 = vmatpush.bf16.msra.mxu0 0
      %1888 = vmatpush.bf16.msra.mxu0 0
      %1889 = vmatpush.bf16.msra.mxu0 0
      %1890 = vmatpush.bf16.msra.mxu0 0
      %1891 = vmatpush.bf16.msra.mxu0 0
      %1892 = vmatpush.bf16.msra.mxu0 %v1884
      %1893 = vmatpush.bf16.msra.mxu0 %v1873
      %1894 = vmatmul.bf16.gmra.mxu0 %v1878
      %v1895 = vpop.f32.mrf.mxu0
      %v1896 = vadd.f32 0.0, %v1895
      %v1897 = vpop.f32.mrf.mxu0
      %v1898 = vadd.f32 0.0, %v1897
      %1899 = vmatmul.bf16.gmra.mxu0 %v1881
      %v1900 = vpop.f32.mrf.mxu0
      %v1901 = vadd.f32 0.0, %v1900
      %v1902 = vpop.f32.mrf.mxu0
      %1903 = vdwg.mxu0
      %1907 = vrot.lane.b32.xlu0 %v1674, 32
      %v1908 = vpop.permute.xlu0 %1907
      %1909 = vrot.lane.b32.xlu0 %v1676, 32
      %v1910 = vpop.permute.xlu0 %1909
      %1911 = vrot.lane.b32.xlu0 %v1679, 32
      %v1912 = vpop.permute.xlu0 %1911
      %1919 = vrot.lane.b32.xlu0 %v1785, 64
      %v1920 = vpop.permute.xlu0 %1919
      %1921 = vrot.lane.b32.xlu0 %v1787, 64
      %v1922 = vpop.permute.xlu0 %1921
      %1923 = vrot.lane.b32.xlu0 %v1790, 64
      %v1924 = vpop.permute.xlu0 %1923
      %1931 = vrot.lane.b32.xlu0 %v1896, 96
      %v1932 = vpop.permute.xlu0 %1931
      %1933 = vrot.lane.b32.xlu0 %v1898, 96
      %v1934 = vpop.permute.xlu0 %1933
      %1935 = vrot.lane.b32.xlu0 %v1901, 96
      %v1936 = vpop.permute.xlu0 %1935
      %v1940 = vsel %vm974, %v1557, %v1908
      %v1941 = vsel %vm974, %v1559, %v1910
      %v1942 = vsel %vm974, %v1562, %v1912
      %v1943 = vsel %vm1453, %v1940, %v1920
      %v1944 = vsel %vm1453, %v1941, %v1922
      %v1945 = vsel %vm1453, %v1942, %v1924
      %v1946 = vsel %vm1457, %v1943, %v1932
      %v1947 = vsel %vm1457, %v1944, %v1934
      %v1948 = vsel %vm1457, %v1945, %v1936
      %v1949 = vpack.c.bf16 %v1459, %v1458
      %v1950 = vpack.c.bf16 %v1946, %v1460
      %v1951 = vpack.c.bf16 %v1948, %v1947
      %v1952 = vld [vmem:[%s533] sm:$0xf]
      %v1953 = vld [vmem:[%s533 + $0x4] sm:$0xf]
      %v1954 = vld [vmem:[%s533 + $0x8] sm:$0xf]
      %v1955 = vld [vmem:[%s533 + $0xc] sm:$0xf]
      %v1956 = vld [vmem:[%s533 + $0x10] sm:$0xf]
      %v1957 = vld [vmem:[%s533 + $0x14] sm:$0xf]
      %v1958 = vld [vmem:[%s533 + $0x18] sm:$0xf]
      %v1959 = vld [vmem:[%s533 + $0x1c] sm:$0xf]
      %v1960 = vld [vmem:[%s533 + $0x20] sm:$0xf]
      %v1961 = vld [vmem:[%s533 + $0x24] sm:$0xf]
      %v1962 = vld [vmem:[%s533 + $0x28] sm:$0xf]
      %v1963 = vld [vmem:[%s533 + $0x2c] sm:$0xf]
      %v1964 = vld [vmem:[%s533 + $0x30] sm:$0xf]
      %v1965 = vld [vmem:[%s533 + $0x34] sm:$0xf]
      %v1966 = vld [vmem:[%s533 + $0x38] sm:$0xf]
      %v1967 = vld [vmem:[%s533 + $0x3c] sm:$0xf]
      %v1984 = vunpack.c.l.b16 %v1952
      %v1985 = vunpack.c.l.b16 %v1953
      %v1986 = vunpack.c.l.b16 %v1954
      %v1987 = vunpack.c.l.b16 %v1955
      %v1988 = vunpack.c.l.b16 %v1956
      %v1989 = vunpack.c.l.b16 %v1957
      %v1990 = vunpack.c.l.b16 %v1958
      %v1991 = vunpack.c.l.b16 %v1959
      %v1992 = vunpack.c.l.b16 %v1960
      %v1993 = vunpack.c.l.b16 %v1961
      %v1994 = vunpack.c.l.b16 %v1962
      %v1995 = vunpack.c.l.b16 %v1963
      %v1996 = vunpack.c.l.b16 %v1964
      %v1997 = vunpack.c.l.b16 %v1965
      %v1998 = vunpack.c.l.b16 %v1966
      %v1999 = vunpack.c.l.b16 %v1967
      %v2000 = vpack.c.b16 %v1985, %v1984
      %v2001 = vpack.c.b16 %v1987, %v1986
      %v2002 = vpack.c.b16 %v1989, %v1988
      %v2003 = vpack.c.b16 %v1991, %v1990
      %v2004 = vpack.c.b16 %v1993, %v1992
      %v2005 = vpack.c.b16 %v1995, %v1994
      %v2006 = vpack.c.b16 %v1997, %v1996
      %v2007 = vpack.c.b16 %v1999, %v1998
      %2016 = vmatpush.bf16.msra.mxu0 %v2007
      %2017 = vmatpush.bf16.msra.mxu0 %v2006
      %2018 = vmatpush.bf16.msra.mxu0 %v2005
      %2019 = vmatpush.bf16.msra.mxu0 %v2004
      %2020 = vmatpush.bf16.msra.mxu0 %v2003
      %2021 = vmatpush.bf16.msra.mxu0 %v2002
      %2022 = vmatpush.bf16.msra.mxu0 %v2001
      %2023 = vmatpush.bf16.msra.mxu0 %v2000
      %2024 = vmatmul.bf16.gmra.mxu0 %v1949
      %v2025 = vpop.f32.mrf.mxu0
      %v2026 = vadd.f32 0.0, %v2025
      %v2027 = vpop.f32.mrf.mxu0
      %v2028 = vadd.f32 0.0, %v2027
      %2029 = vmatmul.bf16.gmra.mxu0 %v1950
      %v2030 = vpop.f32.mrf.mxu0
      %v2031 = vadd.f32 0.0, %v2030
      %v2032 = vpop.f32.mrf.mxu0
      %v2033 = vadd.f32 0.0, %v2032
      %2034 = vmatmul.bf16.gmra.mxu0 %v1951
      %v2035 = vpop.f32.mrf.mxu0
      %v2036 = vadd.f32 0.0, %v2035
      %v2037 = vpop.f32.mrf.mxu0
      %v2038 = vadd.f32 0.0, %v2037
      %2039 = vdwg.mxu0
      %v2040 = vadd.f32 %v577, %v2026
      %v2041 = vadd.f32 %v578, %v2028
      %v2042 = vadd.f32 %v579, %v2031
      %v2043 = vadd.f32 %v580, %v2033
      %v2044 = vadd.f32 %v581, %v2036
      %v2045 = vadd.f32 %v582, %v2038
      %v2046 = vld [vmem:[%s536] sm:$0x1]
      %v2048 = vperm.slane %v2046, 0
      %v2050 = vadd.f32 %v2040, %v2048
      %v2051 = vadd.f32 %v2041, %v2048
      %v2052 = vadd.f32 %v2042, %v2048
      %v2053 = vadd.f32 %v2043, %v2048
      %v2054 = vadd.f32 %v2044, %v2048
      %v2055 = vadd.f32 %v2045, %v2048
      %v2056 = vld [vmem:[%s539] sm:$0x1]
      %v2057 = vld [vmem:[%s542] sm:$0x1]
      %2058 = vadd.xlane.f32.xlu0 %v2050
      %v2059 = vpop.xlane.xlu0 %2058
      %2060 = vadd.xlane.f32.xlu0 %v2051
      %v2061 = vpop.xlane.xlu0 %2060
      %2062 = vadd.xlane.f32.xlu0 %v2052
      %v2063 = vpop.xlane.xlu0 %2062
      %2064 = vadd.xlane.f32.xlu0 %v2053
      %v2065 = vpop.xlane.xlu0 %2064
      %2066 = vadd.xlane.f32.xlu0 %v2054
      %v2067 = vpop.xlane.xlu0 %2066
      %2068 = vadd.xlane.f32.xlu0 %v2055
      %v2069 = vpop.xlane.xlu0 %2068
      %v2070 = vmul.f32 %v2059, %v603
      %v2071 = vmul.f32 %v2061, %v603
      %v2072 = vmul.f32 %v2063, %v603
      %v2073 = vmul.f32 %v2065, %v603
      %v2074 = vmul.f32 %v2067, %v603
      %v2075 = vmul.f32 %v2069, %v603
      %v2076 = vsub.f32 %v2050, %v2070
      %v2077 = vsub.f32 %v2051, %v2071
      %v2078 = vsub.f32 %v2052, %v2072
      %v2079 = vsub.f32 %v2053, %v2073
      %v2080 = vsub.f32 %v2054, %v2074
      %v2081 = vsub.f32 %v2055, %v2075
      %v2082 = vmul.f32 %v2076, %v2076
      %v2083 = vmul.f32 %v2077, %v2077
      %v2084 = vmul.f32 %v2078, %v2078
      %v2085 = vmul.f32 %v2079, %v2079
      %v2086 = vmul.f32 %v2080, %v2080
      %v2087 = vmul.f32 %v2081, %v2081
      %2088 = vadd.xlane.f32.xlu0 %v2082
      %v2089 = vpop.xlane.xlu0 %2088
      %2090 = vadd.xlane.f32.xlu0 %v2083
      %v2091 = vpop.xlane.xlu0 %2090
      %2092 = vadd.xlane.f32.xlu0 %v2084
      %v2093 = vpop.xlane.xlu0 %2092
      %2094 = vadd.xlane.f32.xlu0 %v2085
      %v2095 = vpop.xlane.xlu0 %2094
      %2096 = vadd.xlane.f32.xlu0 %v2086
      %v2097 = vpop.xlane.xlu0 %2096
      %2098 = vadd.xlane.f32.xlu0 %v2087
      %v2099 = vpop.xlane.xlu0 %2098
      %v2100 = vmul.f32 %v2089, %v603
      %v2101 = vmul.f32 %v2091, %v603
      %v2102 = vmul.f32 %v2093, %v603
      %v2103 = vmul.f32 %v2095, %v603
      %v2104 = vmul.f32 %v2097, %v603
      %v2105 = vmul.f32 %v2099, %v603
      %v2106 = vadd.f32 %v2100, 1e-05
      %v2107 = vadd.f32 %v2101, 1e-05
      %v2108 = vadd.f32 %v2102, 1e-05
      %v2109 = vadd.f32 %v2103, 1e-05
      %v2110 = vadd.f32 %v2104, 1e-05
      %v2111 = vadd.f32 %v2105, 1e-05
      %v2112 = vrsqrt.pop %v2106
      %v2113 = vmul.f32 %v2112, %v2106
      %v2114 = vmul.f32 %v2113, %v2112
      %v2115 = vmul.f32 0.5, %v2114
      %v2116 = vsub.f32 1.5, %v2115
      %v2117 = vmul.f32 %v2112, %v2116
      %vm2118 = vweird.f32 %v2106
      %vm2119 = vweird.f32 %v2112
      %vm2120 = vmor %vm2118, %vm2119
      %v2121 = vsel %vm2120, %v2112, %v2117
      %v2122 = vrsqrt.pop %v2107
      %v2123 = vmul.f32 %v2122, %v2107
      %v2124 = vmul.f32 %v2123, %v2122
      %v2125 = vmul.f32 0.5, %v2124
      %v2126 = vsub.f32 1.5, %v2125
      %v2127 = vmul.f32 %v2122, %v2126
      %vm2128 = vweird.f32 %v2107
      %vm2129 = vweird.f32 %v2122
      %vm2130 = vmor %vm2128, %vm2129
      %v2131 = vsel %vm2130, %v2122, %v2127
      %v2132 = vrsqrt.pop %v2108
      %v2133 = vmul.f32 %v2132, %v2108
      %v2134 = vmul.f32 %v2133, %v2132
      %v2135 = vmul.f32 0.5, %v2134
      %v2136 = vsub.f32 1.5, %v2135
      %v2137 = vmul.f32 %v2132, %v2136
      %vm2138 = vweird.f32 %v2108
      %vm2139 = vweird.f32 %v2132
      %vm2140 = vmor %vm2138, %vm2139
      %v2141 = vsel %vm2140, %v2132, %v2137
      %v2142 = vrsqrt.pop %v2109
      %v2143 = vmul.f32 %v2142, %v2109
      %v2144 = vmul.f32 %v2143, %v2142
      %v2145 = vmul.f32 0.5, %v2144
      %v2146 = vsub.f32 1.5, %v2145
      %v2147 = vmul.f32 %v2142, %v2146
      %vm2148 = vweird.f32 %v2109
      %vm2149 = vweird.f32 %v2142
      %vm2150 = vmor %vm2148, %vm2149
      %v2151 = vsel %vm2150, %v2142, %v2147
      %v2152 = vrsqrt.pop %v2110
      %v2153 = vmul.f32 %v2152, %v2110
      %v2154 = vmul.f32 %v2153, %v2152
      %v2155 = vmul.f32 0.5, %v2154
      %v2156 = vsub.f32 1.5, %v2155
      %v2157 = vmul.f32 %v2152, %v2156
      %vm2158 = vweird.f32 %v2110
      %vm2159 = vweird.f32 %v2152
      %vm2160 = vmor %vm2158, %vm2159
      %v2161 = vsel %vm2160, %v2152, %v2157
      %v2162 = vrsqrt.pop %v2111
      %v2163 = vmul.f32 %v2162, %v2111
      %v2164 = vmul.f32 %v2163, %v2162
      %v2165 = vmul.f32 0.5, %v2164
      %v2166 = vsub.f32 1.5, %v2165
      %v2167 = vmul.f32 %v2162, %v2166
      %vm2168 = vweird.f32 %v2111
      %vm2169 = vweird.f32 %v2162
      %vm2170 = vmor %vm2168, %vm2169
      %v2171 = vsel %vm2170, %v2162, %v2167
      %v2172 = vmul.f32 %v2076, %v2121
      %v2173 = vmul.f32 %v2077, %v2131
      %v2174 = vmul.f32 %v2078, %v2141
      %v2175 = vmul.f32 %v2079, %v2151
      %v2176 = vmul.f32 %v2080, %v2161
      %v2177 = vmul.f32 %v2081, %v2171
      %v2179 = vperm.slane %v2056, 0
      %v2181 = vmul.f32 %v2172, %v2179
      %v2182 = vmul.f32 %v2173, %v2179
      %v2183 = vmul.f32 %v2174, %v2179
      %v2184 = vmul.f32 %v2175, %v2179
      %v2185 = vmul.f32 %v2176, %v2179
      %v2186 = vmul.f32 %v2177, %v2179
      %v2188 = vperm.slane %v2057, 0
      %v2190 = vadd.f32 %v2181, %v2188
      %v2191 = vadd.f32 %v2182, %v2188
      %v2192 = vadd.f32 %v2183, %v2188
      %v2193 = vadd.f32 %v2184, %v2188
      %v2194 = vadd.f32 %v2185, %v2188
      %v2195 = vadd.f32 %v2186, %v2188
      %v2196 = vpack.c.bf16 %v2191, %v2190
      %v2197 = vpack.c.bf16 %v2193, %v2192
      %v2198 = vpack.c.bf16 %v2195, %v2194
      %v2199 = vld [vmem:[%s547] sm:$0xff]
      %v2200 = vld [vmem:[%s547 + $0x8] sm:$0xff]
      %v2201 = vld [vmem:[%s547 + $0x10] sm:$0xff]
      %v2202 = vld [vmem:[%s547 + $0x18] sm:$0xff]
      %v2203 = vld [vmem:[%s547 + $0x20] sm:$0xff]
      %v2204 = vld [vmem:[%s547 + $0x28] sm:$0xff]
      %v2205 = vld [vmem:[%s547 + $0x30] sm:$0xff]
      %v2206 = vld [vmem:[%s547 + $0x38] sm:$0xff]
      %v2207 = vld [vmem:[%s547 + $0x40] sm:$0xff]
      %v2208 = vld [vmem:[%s547 + $0x48] sm:$0xff]
      %v2209 = vld [vmem:[%s547 + $0x50] sm:$0xff]
      %v2210 = vld [vmem:[%s547 + $0x58] sm:$0xff]
      %v2211 = vld [vmem:[%s547 + $0x60] sm:$0xff]
      %v2212 = vld [vmem:[%s547 + $0x68] sm:$0xff]
      %v2213 = vld [vmem:[%s547 + $0x70] sm:$0xff]
      %v2214 = vld [vmem:[%s547 + $0x78] sm:$0xff]
      %v2215 = vld [vmem:[%s547 + $0x80] sm:$0xff]
      %v2216 = vld [vmem:[%s547 + $0x88] sm:$0xff]
      %v2217 = vld [vmem:[%s547 + $0x90] sm:$0xff]
      %v2218 = vld [vmem:[%s547 + $0x98] sm:$0xff]
      %v2219 = vld [vmem:[%s547 + $0xa0] sm:$0xff]
      %v2220 = vld [vmem:[%s547 + $0xa8] sm:$0xff]
      %v2221 = vld [vmem:[%s547 + $0xb0] sm:$0xff]
      %v2222 = vld [vmem:[%s547 + $0xb8] sm:$0xff]
      %v2223 = vld [vmem:[%s547 + $0xc0] sm:$0xff]
      %v2224 = vld [vmem:[%s547 + $0xc8] sm:$0xff]
      %v2225 = vld [vmem:[%s547 + $0xd0] sm:$0xff]
      %v2226 = vld [vmem:[%s547 + $0xd8] sm:$0xff]
      %v2227 = vld [vmem:[%s547 + $0xe0] sm:$0xff]
      %v2228 = vld [vmem:[%s547 + $0xe8] sm:$0xff]
      %v2229 = vld [vmem:[%s547 + $0xf0] sm:$0xff]
      %v2230 = vld [vmem:[%s547 + $0xf8] sm:$0xff]
      %v2231 = vld [vmem:[%s551] sm:$0xf]
      %v2233 = vperm.slane %v2231, 0
      %v2234 = vperm.slane %v2231, 1
      %v2235 = vperm.slane %v2231, 2
      %v2236 = vperm.slane %v2231, 3
      %v2273 = vunpack.c.l.b16 %v2199
      %v2274 = vunpack.c.h.b16 %v2199
      %v2275 = vunpack.c.l.b16 %v2200
      %v2276 = vunpack.c.h.b16 %v2200
      %v2277 = vunpack.c.l.b16 %v2201
      %v2278 = vunpack.c.h.b16 %v2201
      %v2279 = vunpack.c.l.b16 %v2202
      %v2280 = vunpack.c.h.b16 %v2202
      %v2281 = vunpack.c.l.b16 %v2203
      %v2282 = vunpack.c.h.b16 %v2203
      %v2283 = vunpack.c.l.b16 %v2204
      %v2284 = vunpack.c.h.b16 %v2204
      %v2285 = vunpack.c.l.b16 %v2205
      %v2286 = vunpack.c.h.b16 %v2205
      %v2287 = vunpack.c.l.b16 %v2206
      %v2288 = vunpack.c.h.b16 %v2206
      %v2289 = vunpack.c.l.b16 %v2207
      %v2290 = vunpack.c.h.b16 %v2207
      %v2291 = vunpack.c.l.b16 %v2208
      %v2292 = vunpack.c.h.b16 %v2208
      %v2293 = vunpack.c.l.b16 %v2209
      %v2294 = vunpack.c.h.b16 %v2209
      %v2295 = vunpack.c.l.b16 %v2210
      %v2296 = vunpack.c.h.b16 %v2210
      %v2297 = vunpack.c.l.b16 %v2211
      %v2298 = vunpack.c.h.b16 %v2211
      %v2299 = vunpack.c.l.b16 %v2212
      %v2300 = vunpack.c.h.b16 %v2212
      %v2301 = vunpack.c.l.b16 %v2213
      %v2302 = vunpack.c.h.b16 %v2213
      %v2303 = vunpack.c.l.b16 %v2214
      %v2304 = vunpack.c.h.b16 %v2214
      %v2305 = vunpack.c.l.b16 %v2215
      %v2306 = vunpack.c.h.b16 %v2215
      %v2307 = vunpack.c.l.b16 %v2216
      %v2308 = vunpack.c.h.b16 %v2216
      %v2309 = vunpack.c.l.b16 %v2217
      %v2310 = vunpack.c.h.b16 %v2217
      %v2311 = vunpack.c.l.b16 %v2218
      %v2312 = vunpack.c.h.b16 %v2218
      %v2313 = vunpack.c.l.b16 %v2219
      %v2314 = vunpack.c.h.b16 %v2219
      %v2315 = vunpack.c.l.b16 %v2220
      %v2316 = vunpack.c.h.b16 %v2220
      %v2317 = vunpack.c.l.b16 %v2221
      %v2318 = vunpack.c.h.b16 %v2221
      %v2319 = vunpack.c.l.b16 %v2222
      %v2320 = vunpack.c.h.b16 %v2222
      %v2321 = vunpack.c.l.b16 %v2223
      %v2322 = vunpack.c.h.b16 %v2223
      %v2323 = vunpack.c.l.b16 %v2224
      %v2324 = vunpack.c.h.b16 %v2224
      %v2325 = vunpack.c.l.b16 %v2225
      %v2326 = vunpack.c.h.b16 %v2225
      %v2327 = vunpack.c.l.b16 %v2226
      %v2328 = vunpack.c.h.b16 %v2226
      %v2329 = vunpack.c.l.b16 %v2227
      %v2330 = vunpack.c.h.b16 %v2227
      %v2331 = vunpack.c.l.b16 %v2228
      %v2332 = vunpack.c.h.b16 %v2228
      %v2333 = vunpack.c.l.b16 %v2229
      %v2334 = vunpack.c.h.b16 %v2229
      %v2335 = vunpack.c.l.b16 %v2230
      %v2336 = vunpack.c.h.b16 %v2230
      %v2337 = vpack.c.b16 %v2277, %v2273
      %v2338 = vpack.c.b16 %v2278, %v2274
      %v2339 = vpack.c.b16 %v2279, %v2275
      %v2340 = vpack.c.b16 %v2280, %v2276
      %v2341 = vpack.c.b16 %v2285, %v2281
      %v2342 = vpack.c.b16 %v2286, %v2282
      %v2343 = vpack.c.b16 %v2287, %v2283
      %v2344 = vpack.c.b16 %v2288, %v2284
      %v2345 = vpack.c.b16 %v2293, %v2289
      %v2346 = vpack.c.b16 %v2294, %v2290
      %v2347 = vpack.c.b16 %v2295, %v2291
      %v2348 = vpack.c.b16 %v2296, %v2292
      %v2349 = vpack.c.b16 %v2301, %v2297
      %v2350 = vpack.c.b16 %v2302, %v2298
      %v2351 = vpack.c.b16 %v2303, %v2299
      %v2352 = vpack.c.b16 %v2304, %v2300
      %v2353 = vpack.c.b16 %v2309, %v2305
      %v2354 = vpack.c.b16 %v2310, %v2306
      %v2355 = vpack.c.b16 %v2311, %v2307
      %v2356 = vpack.c.b16 %v2312, %v2308
      %v2357 = vpack.c.b16 %v2317, %v2313
      %v2358 = vpack.c.b16 %v2318, %v2314
      %v2359 = vpack.c.b16 %v2319, %v2315
      %v2360 = vpack.c.b16 %v2320, %v2316
      %v2361 = vpack.c.b16 %v2325, %v2321
      %v2362 = vpack.c.b16 %v2326, %v2322
      %v2363 = vpack.c.b16 %v2327, %v2323
      %v2364 = vpack.c.b16 %v2328, %v2324
      %v2365 = vpack.c.b16 %v2333, %v2329
      %v2366 = vpack.c.b16 %v2334, %v2330
      %v2367 = vpack.c.b16 %v2335, %v2331
      %v2368 = vpack.c.b16 %v2336, %v2332
      %2401 = vmatpush.bf16.msra.mxu0 %v2365
      %2402 = vmatpush.bf16.msra.mxu0 %v2361
      %2403 = vmatpush.bf16.msra.mxu0 %v2357
      %2404 = vmatpush.bf16.msra.mxu0 %v2353
      %2405 = vmatpush.bf16.msra.mxu0 %v2349
      %2406 = vmatpush.bf16.msra.mxu0 %v2345
      %2407 = vmatpush.bf16.msra.mxu0 %v2341
      %2408 = vmatpush.bf16.msra.mxu0 %v2337
      %2409 = vmatmul.bf16.gmra.mxu0 %v2196
      %v2410 = vpop.f32.mrf.mxu0
      %v2411 = vadd.f32 %v2233, %v2410
      %v2412 = vpop.f32.mrf.mxu0
      %v2413 = vadd.f32 %v2233, %v2412
      %2414 = vmatmul.bf16.gmra.mxu0 %v2197
      %v2415 = vpop.f32.mrf.mxu0
      %v2416 = vadd.f32 %v2233, %v2415
      %v2417 = vpop.f32.mrf.mxu0
      %v2418 = vadd.f32 %v2233, %v2417
      %2419 = vmatmul.bf16.gmra.mxu0 %v2198
      %v2420 = vpop.f32.mrf.mxu0
      %v2421 = vadd.f32 %v2233, %v2420
      %v2422 = vpop.f32.mrf.mxu0
      %v2423 = vadd.f32 %v2233, %v2422
      %2424 = vdwg.mxu0
      %2425 = vmatpush.bf16.msra.mxu0 %v2366
      %2426 = vmatpush.bf16.msra.mxu0 %v2362
      %2427 = vmatpush.bf16.msra.mxu0 %v2358
      %2428 = vmatpush.bf16.msra.mxu0 %v2354
      %2429 = vmatpush.bf16.msra.mxu0 %v2350
      %2430 = vmatpush.bf16.msra.mxu0 %v2346
      %2431 = vmatpush.bf16.msra.mxu0 %v2342
      %2432 = vmatpush.bf16.msra.mxu0 %v2338
      %2433 = vmatmul.bf16.gmra.mxu0 %v2196
      %v2434 = vpop.f32.mrf.mxu0
      %v2435 = vadd.f32 %v2234, %v2434
      %v2436 = vpop.f32.mrf.mxu0
      %v2437 = vadd.f32 %v2234, %v2436
      %2438 = vmatmul.bf16.gmra.mxu0 %v2197
      %v2439 = vpop.f32.mrf.mxu0
      %v2440 = vadd.f32 %v2234, %v2439
      %v2441 = vpop.f32.mrf.mxu0
      %v2442 = vadd.f32 %v2234, %v2441
      %2443 = vmatmul.bf16.gmra.mxu0 %v2198
      %v2444 = vpop.f32.mrf.mxu0
      %v2445 = vadd.f32 %v2234, %v2444
      %v2446 = vpop.f32.mrf.mxu0
      %v2447 = vadd.f32 %v2234, %v2446
      %2448 = vdwg.mxu0
      %2449 = vmatpush.bf16.msra.mxu0 %v2367
      %2450 = vmatpush.bf16.msra.mxu0 %v2363
      %2451 = vmatpush.bf16.msra.mxu0 %v2359
      %2452 = vmatpush.bf16.msra.mxu0 %v2355
      %2453 = vmatpush.bf16.msra.mxu0 %v2351
      %2454 = vmatpush.bf16.msra.mxu0 %v2347
      %2455 = vmatpush.bf16.msra.mxu0 %v2343
      %2456 = vmatpush.bf16.msra.mxu0 %v2339
      %2457 = vmatmul.bf16.gmra.mxu0 %v2196
      %v2458 = vpop.f32.mrf.mxu0
      %v2459 = vadd.f32 %v2235, %v2458
      %v2460 = vpop.f32.mrf.mxu0
      %v2461 = vadd.f32 %v2235, %v2460
      %2462 = vmatmul.bf16.gmra.mxu0 %v2197
      %v2463 = vpop.f32.mrf.mxu0
      %v2464 = vadd.f32 %v2235, %v2463
      %v2465 = vpop.f32.mrf.mxu0
      %v2466 = vadd.f32 %v2235, %v2465
      %2467 = vmatmul.bf16.gmra.mxu0 %v2198
      %v2468 = vpop.f32.mrf.mxu0
      %v2469 = vadd.f32 %v2235, %v2468
      %v2470 = vpop.f32.mrf.mxu0
      %v2471 = vadd.f32 %v2235, %v2470
      %2472 = vdwg.mxu0
      %2473 = vmatpush.bf16.msra.mxu0 %v2368
      %2474 = vmatpush.bf16.msra.mxu0 %v2364
      %2475 = vmatpush.bf16.msra.mxu0 %v2360
      %2476 = vmatpush.bf16.msra.mxu0 %v2356
      %2477 = vmatpush.bf16.msra.mxu0 %v2352
      %2478 = vmatpush.bf16.msra.mxu0 %v2348
      %2479 = vmatpush.bf16.msra.mxu0 %v2344
      %2480 = vmatpush.bf16.msra.mxu0 %v2340
      %2481 = vmatmul.bf16.gmra.mxu0 %v2196
      %v2482 = vpop.f32.mrf.mxu0
      %v2483 = vadd.f32 %v2236, %v2482
      %v2484 = vpop.f32.mrf.mxu0
      %v2485 = vadd.f32 %v2236, %v2484
      %2486 = vmatmul.bf16.gmra.mxu0 %v2197
      %v2487 = vpop.f32.mrf.mxu0
      %v2488 = vadd.f32 %v2236, %v2487
      %v2489 = vpop.f32.mrf.mxu0
      %v2490 = vadd.f32 %v2236, %v2489
      %2491 = vmatmul.bf16.gmra.mxu0 %v2198
      %v2492 = vpop.f32.mrf.mxu0
      %v2493 = vadd.f32 %v2236, %v2492
      %v2494 = vpop.f32.mrf.mxu0
      %v2495 = vadd.f32 %v2236, %v2494
      %2496 = vdwg.mxu0
      %v2497 = vmul.f32 %v2411, 0.5
      %v2498 = vmul.f32 %v2435, 0.5
      %v2499 = vmul.f32 %v2459, 0.5
      %v2500 = vmul.f32 %v2483, 0.5
      %v2501 = vmul.f32 %v2413, 0.5
      %v2502 = vmul.f32 %v2437, 0.5
      %v2503 = vmul.f32 %v2461, 0.5
      %v2504 = vmul.f32 %v2485, 0.5
      %v2505 = vmul.f32 %v2416, 0.5
      %v2506 = vmul.f32 %v2440, 0.5
      %v2507 = vmul.f32 %v2464, 0.5
      %v2508 = vmul.f32 %v2488, 0.5
      %v2509 = vmul.f32 %v2418, 0.5
      %v2510 = vmul.f32 %v2442, 0.5
      %v2511 = vmul.f32 %v2466, 0.5
      %v2512 = vmul.f32 %v2490, 0.5
      %v2513 = vmul.f32 %v2421, 0.5
      %v2514 = vmul.f32 %v2445, 0.5
      %v2515 = vmul.f32 %v2469, 0.5
      %v2516 = vmul.f32 %v2493, 0.5
      %v2517 = vmul.f32 %v2423, 0.5
      %v2518 = vmul.f32 %v2447, 0.5
      %v2519 = vmul.f32 %v2471, 0.5
      %v2520 = vmul.f32 %v2495, 0.5
      %v2521 = vmul.f32 %v2411, 0.70710677
      %v2522 = vmul.f32 %v2435, 0.70710677
      %v2523 = vmul.f32 %v2459, 0.70710677
      %v2524 = vmul.f32 %v2483, 0.70710677
      %v2525 = vmul.f32 %v2413, 0.70710677
      %v2526 = vmul.f32 %v2437, 0.70710677
      %v2527 = vmul.f32 %v2461, 0.70710677
      %v2528 = vmul.f32 %v2485, 0.70710677
      %v2529 = vmul.f32 %v2416, 0.70710677
      %v2530 = vmul.f32 %v2440, 0.70710677
      %v2531 = vmul.f32 %v2464, 0.70710677
      %v2532 = vmul.f32 %v2488, 0.70710677
      %v2533 = vmul.f32 %v2418, 0.70710677
      %v2534 = vmul.f32 %v2442, 0.70710677
      %v2535 = vmul.f32 %v2466, 0.70710677
      %v2536 = vmul.f32 %v2490, 0.70710677
      %v2537 = vmul.f32 %v2421, 0.70710677
      %v2538 = vmul.f32 %v2445, 0.70710677
      %v2539 = vmul.f32 %v2469, 0.70710677
      %v2540 = vmul.f32 %v2493, 0.70710677
      %v2541 = vmul.f32 %v2423, 0.70710677
      %v2542 = vmul.f32 %v2447, 0.70710677
      %v2543 = vmul.f32 %v2471, 0.70710677
      %v2544 = vmul.f32 %v2495, 0.70710677
      %vm2545 = vcmp.ge.f32.partialorder %v2521, 0.0
      %vm2546 = vcmp.ge.f32.partialorder %v2522, 0.0
      %vm2547 = vcmp.ge.f32.partialorder %v2523, 0.0
      %vm2548 = vcmp.ge.f32.partialorder %v2524, 0.0
      %vm2549 = vcmp.ge.f32.partialorder %v2525, 0.0
      %vm2550 = vcmp.ge.f32.partialorder %v2526, 0.0
      %vm2551 = vcmp.ge.f32.partialorder %v2527, 0.0
      %vm2552 = vcmp.ge.f32.partialorder %v2528, 0.0
      %vm2553 = vcmp.ge.f32.partialorder %v2529, 0.0
      %vm2554 = vcmp.ge.f32.partialorder %v2530, 0.0
      %vm2555 = vcmp.ge.f32.partialorder %v2531, 0.0
      %vm2556 = vcmp.ge.f32.partialorder %v2532, 0.0
      %vm2557 = vcmp.ge.f32.partialorder %v2533, 0.0
      %vm2558 = vcmp.ge.f32.partialorder %v2534, 0.0
      %vm2559 = vcmp.ge.f32.partialorder %v2535, 0.0
      %vm2560 = vcmp.ge.f32.partialorder %v2536, 0.0
      %vm2561 = vcmp.ge.f32.partialorder %v2537, 0.0
      %vm2562 = vcmp.ge.f32.partialorder %v2538, 0.0
      %vm2563 = vcmp.ge.f32.partialorder %v2539, 0.0
      %vm2564 = vcmp.ge.f32.partialorder %v2540, 0.0
      %vm2565 = vcmp.ge.f32.partialorder %v2541, 0.0
      %vm2566 = vcmp.ge.f32.partialorder %v2542, 0.0
      %vm2567 = vcmp.ge.f32.partialorder %v2543, 0.0
      %vm2568 = vcmp.ge.f32.partialorder %v2544, 0.0
      %v2569 = vsel %vm2545, 1.0, -1.0
      %v2570 = vsel %vm2546, 1.0, -1.0
      %v2571 = vsel %vm2547, 1.0, -1.0
      %v2572 = vsel %vm2548, 1.0, -1.0
      %v2573 = vsel %vm2549, 1.0, -1.0
      %v2574 = vsel %vm2550, 1.0, -1.0
      %v2575 = vsel %vm2551, 1.0, -1.0
      %v2576 = vsel %vm2552, 1.0, -1.0
      %v2577 = vsel %vm2553, 1.0, -1.0
      %v2578 = vsel %vm2554, 1.0, -1.0
      %v2579 = vsel %vm2555, 1.0, -1.0
      %v2580 = vsel %vm2556, 1.0, -1.0
      %v2581 = vsel %vm2557, 1.0, -1.0
      %v2582 = vsel %vm2558, 1.0, -1.0
      %v2583 = vsel %vm2559, 1.0, -1.0
      %v2584 = vsel %vm2560, 1.0, -1.0
      %v2585 = vsel %vm2561, 1.0, -1.0
      %v2586 = vsel %vm2562, 1.0, -1.0
      %v2587 = vsel %vm2563, 1.0, -1.0
      %v2588 = vsel %vm2564, 1.0, -1.0
      %v2589 = vsel %vm2565, 1.0, -1.0
      %v2590 = vsel %vm2566, 1.0, -1.0
      %v2591 = vsel %vm2567, 1.0, -1.0
      %v2592 = vsel %vm2568, 1.0, -1.0
      %v2593 = vand.u32 2147483647, %v2521
      %v2594 = vand.u32 2147483647, %v2522
      %v2595 = vand.u32 2147483647, %v2523
      %v2596 = vand.u32 2147483647, %v2524
      %v2597 = vand.u32 2147483647, %v2525
      %v2598 = vand.u32 2147483647, %v2526
      %v2599 = vand.u32 2147483647, %v2527
      %v2600 = vand.u32 2147483647, %v2528
      %v2601 = vand.u32 2147483647, %v2529
      %v2602 = vand.u32 2147483647, %v2530
      %v2603 = vand.u32 2147483647, %v2531
      %v2604 = vand.u32 2147483647, %v2532
      %v2605 = vand.u32 2147483647, %v2533
      %v2606 = vand.u32 2147483647, %v2534
      %v2607 = vand.u32 2147483647, %v2535
      %v2608 = vand.u32 2147483647, %v2536
      %v2609 = vand.u32 2147483647, %v2537
      %v2610 = vand.u32 2147483647, %v2538
      %v2611 = vand.u32 2147483647, %v2539
      %v2612 = vand.u32 2147483647, %v2540
      %v2613 = vand.u32 2147483647, %v2541
      %v2614 = vand.u32 2147483647, %v2542
      %v2615 = vand.u32 2147483647, %v2543
      %v2616 = vand.u32 2147483647, %v2544
      %v2617 = vmul.f32 %v2593, 0.3275911
      %v2618 = vmul.f32 %v2594, 0.3275911
      %v2619 = vmul.f32 %v2595, 0.3275911
      %v2620 = vmul.f32 %v2596, 0.3275911
      %v2621 = vmul.f32 %v2597, 0.3275911
      %v2622 = vmul.f32 %v2598, 0.3275911
      %v2623 = vmul.f32 %v2599, 0.3275911
      %v2624 = vmul.f32 %v2600, 0.3275911
      %v2625 = vmul.f32 %v2601, 0.3275911
      %v2626 = vmul.f32 %v2602, 0.3275911
      %v2627 = vmul.f32 %v2603, 0.3275911
      %v2628 = vmul.f32 %v2604, 0.3275911
      %v2629 = vmul.f32 %v2605, 0.3275911
      %v2630 = vmul.f32 %v2606, 0.3275911
      %v2631 = vmul.f32 %v2607, 0.3275911
      %v2632 = vmul.f32 %v2608, 0.3275911
      %v2633 = vmul.f32 %v2609, 0.3275911
      %v2634 = vmul.f32 %v2610, 0.3275911
      %v2635 = vmul.f32 %v2611, 0.3275911
      %v2636 = vmul.f32 %v2612, 0.3275911
      %v2637 = vmul.f32 %v2613, 0.3275911
      %v2638 = vmul.f32 %v2614, 0.3275911
      %v2639 = vmul.f32 %v2615, 0.3275911
      %v2640 = vmul.f32 %v2616, 0.3275911
      %v2641 = vadd.f32 %v2617, 1.0
      %v2642 = vadd.f32 %v2618, 1.0
      %v2643 = vadd.f32 %v2619, 1.0
      %v2644 = vadd.f32 %v2620, 1.0
      %v2645 = vadd.f32 %v2621, 1.0
      %v2646 = vadd.f32 %v2622, 1.0
      %v2647 = vadd.f32 %v2623, 1.0
      %v2648 = vadd.f32 %v2624, 1.0
      %v2649 = vadd.f32 %v2625, 1.0
      %v2650 = vadd.f32 %v2626, 1.0
      %v2651 = vadd.f32 %v2627, 1.0
      %v2652 = vadd.f32 %v2628, 1.0
      %v2653 = vadd.f32 %v2629, 1.0
      %v2654 = vadd.f32 %v2630, 1.0
      %v2655 = vadd.f32 %v2631, 1.0
      %v2656 = vadd.f32 %v2632, 1.0
      %v2657 = vadd.f32 %v2633, 1.0
      %v2658 = vadd.f32 %v2634, 1.0
      %v2659 = vadd.f32 %v2635, 1.0
      %v2660 = vadd.f32 %v2636, 1.0
      %v2661 = vadd.f32 %v2637, 1.0
      %v2662 = vadd.f32 %v2638, 1.0
      %v2663 = vadd.f32 %v2639, 1.0
      %v2664 = vadd.f32 %v2640, 1.0
      %v2665 = vrcp.pop %v2641
      %v2666 = vmul.f32 %v2641, %v2665
      %v2667 = vsub.f32 1.0, %v2666
      %v2668 = vmul.f32 %v2665, %v2667
      %v2669 = vadd.f32 %v2665, %v2668
      %vm2670 = vweird.f32 %v2641
      %vm2671 = vweird.f32 %v2665
      %vm2672 = vmor %vm2670, %vm2671
      %v2673 = vsel %vm2672, %v2665, %v2669
      %v2674 = vand.u32 2147483647, %v2641
      %vm2675 = vcmp.eq.f32.partialorder %v2674, 8.507059e+37
      %v2676 = vand.u32 %v2641, 2147483648
      %v2677 = vor.u32 1.1754944e-38, %v2676
      %v2678 = vsel %vm2675, %v2677, %v2673
      %v2679 = vmul.f32 1.0, %v2678
      %v2680 = vrcp.pop %v2642
      %v2681 = vmul.f32 %v2642, %v2680
      %v2682 = vsub.f32 1.0, %v2681
      %v2683 = vmul.f32 %v2680, %v2682
      %v2684 = vadd.f32 %v2680, %v2683
      %vm2685 = vweird.f32 %v2642
      %vm2686 = vweird.f32 %v2680
      %vm2687 = vmor %vm2685, %vm2686
      %v2688 = vsel %vm2687, %v2680, %v2684
      %v2689 = vand.u32 2147483647, %v2642
      %vm2690 = vcmp.eq.f32.partialorder %v2689, 8.507059e+37
      %v2691 = vand.u32 %v2642, 2147483648
      %v2692 = vor.u32 1.1754944e-38, %v2691
      %v2693 = vsel %vm2690, %v2692, %v2688
      %v2694 = vmul.f32 1.0, %v2693
      %v2695 = vrcp.pop %v2643
      %v2696 = vmul.f32 %v2643, %v2695
      %v2697 = vsub.f32 1.0, %v2696
      %v2698 = vmul.f32 %v2695, %v2697
      %v2699 = vadd.f32 %v2695, %v2698
      %vm2700 = vweird.f32 %v2643
      %vm2701 = vweird.f32 %v2695
      %vm2702 = vmor %vm2700, %vm2701
      %v2703 = vsel %vm2702, %v2695, %v2699
      %v2704 = vand.u32 2147483647, %v2643
      %vm2705 = vcmp.eq.f32.partialorder %v2704, 8.507059e+37
      %v2706 = vand.u32 %v2643, 2147483648
      %v2707 = vor.u32 1.1754944e-38, %v2706
      %v2708 = vsel %vm2705, %v2707, %v2703
      %v2709 = vmul.f32 1.0, %v2708
      %v2710 = vrcp.pop %v2644
      %v2711 = vmul.f32 %v2644, %v2710
      %v2712 = vsub.f32 1.0, %v2711
      %v2713 = vmul.f32 %v2710, %v2712
      %v2714 = vadd.f32 %v2710, %v2713
      %vm2715 = vweird.f32 %v2644
      %vm2716 = vweird.f32 %v2710
      %vm2717 = vmor %vm2715, %vm2716
      %v2718 = vsel %vm2717, %v2710, %v2714
      %v2719 = vand.u32 2147483647, %v2644
      %vm2720 = vcmp.eq.f32.partialorder %v2719, 8.507059e+37
      %v2721 = vand.u32 %v2644, 2147483648
      %v2722 = vor.u32 1.1754944e-38, %v2721
      %v2723 = vsel %vm2720, %v2722, %v2718
      %v2724 = vmul.f32 1.0, %v2723
      %v2725 = vrcp.pop %v2645
      %v2726 = vmul.f32 %v2645, %v2725
      %v2727 = vsub.f32 1.0, %v2726
      %v2728 = vmul.f32 %v2725, %v2727
      %v2729 = vadd.f32 %v2725, %v2728
      %vm2730 = vweird.f32 %v2645
      %vm2731 = vweird.f32 %v2725
      %vm2732 = vmor %vm2730, %vm2731
      %v2733 = vsel %vm2732, %v2725, %v2729
      %v2734 = vand.u32 2147483647, %v2645
      %vm2735 = vcmp.eq.f32.partialorder %v2734, 8.507059e+37
      %v2736 = vand.u32 %v2645, 2147483648
      %v2737 = vor.u32 1.1754944e-38, %v2736
      %v2738 = vsel %vm2735, %v2737, %v2733
      %v2739 = vmul.f32 1.0, %v2738
      %v2740 = vrcp.pop %v2646
      %v2741 = vmul.f32 %v2646, %v2740
      %v2742 = vsub.f32 1.0, %v2741
      %v2743 = vmul.f32 %v2740, %v2742
      %v2744 = vadd.f32 %v2740, %v2743
      %vm2745 = vweird.f32 %v2646
      %vm2746 = vweird.f32 %v2740
      %vm2747 = vmor %vm2745, %vm2746
      %v2748 = vsel %vm2747, %v2740, %v2744
      %v2749 = vand.u32 2147483647, %v2646
      %vm2750 = vcmp.eq.f32.partialorder %v2749, 8.507059e+37
      %v2751 = vand.u32 %v2646, 2147483648
      %v2752 = vor.u32 1.1754944e-38, %v2751
      %v2753 = vsel %vm2750, %v2752, %v2748
      %v2754 = vmul.f32 1.0, %v2753
      %v2755 = vrcp.pop %v2647
      %v2756 = vmul.f32 %v2647, %v2755
      %v2757 = vsub.f32 1.0, %v2756
      %v2758 = vmul.f32 %v2755, %v2757
      %v2759 = vadd.f32 %v2755, %v2758
      %vm2760 = vweird.f32 %v2647
      %vm2761 = vweird.f32 %v2755
      %vm2762 = vmor %vm2760, %vm2761
      %v2763 = vsel %vm2762, %v2755, %v2759
      %v2764 = vand.u32 2147483647, %v2647
      %vm2765 = vcmp.eq.f32.partialorder %v2764, 8.507059e+37
      %v2766 = vand.u32 %v2647, 2147483648
      %v2767 = vor.u32 1.1754944e-38, %v2766
      %v2768 = vsel %vm2765, %v2767, %v2763
      %v2769 = vmul.f32 1.0, %v2768
      %v2770 = vrcp.pop %v2648
      %v2771 = vmul.f32 %v2648, %v2770
      %v2772 = vsub.f32 1.0, %v2771
      %v2773 = vmul.f32 %v2770, %v2772
      %v2774 = vadd.f32 %v2770, %v2773
      %vm2775 = vweird.f32 %v2648
      %vm2776 = vweird.f32 %v2770
      %vm2777 = vmor %vm2775, %vm2776
      %v2778 = vsel %vm2777, %v2770, %v2774
      %v2779 = vand.u32 2147483647, %v2648
      %vm2780 = vcmp.eq.f32.partialorder %v2779, 8.507059e+37
      %v2781 = vand.u32 %v2648, 2147483648
      %v2782 = vor.u32 1.1754944e-38, %v2781
      %v2783 = vsel %vm2780, %v2782, %v2778
      %v2784 = vmul.f32 1.0, %v2783
      %v2785 = vrcp.pop %v2649
      %v2786 = vmul.f32 %v2649, %v2785
      %v2787 = vsub.f32 1.0, %v2786
      %v2788 = vmul.f32 %v2785, %v2787
      %v2789 = vadd.f32 %v2785, %v2788
      %vm2790 = vweird.f32 %v2649
      %vm2791 = vweird.f32 %v2785
      %vm2792 = vmor %vm2790, %vm2791
      %v2793 = vsel %vm2792, %v2785, %v2789
      %v2794 = vand.u32 2147483647, %v2649
      %vm2795 = vcmp.eq.f32.partialorder %v2794, 8.507059e+37
      %v2796 = vand.u32 %v2649, 2147483648
      %v2797 = vor.u32 1.1754944e-38, %v2796
      %v2798 = vsel %vm2795, %v2797, %v2793
      %v2799 = vmul.f32 1.0, %v2798
      %v2800 = vrcp.pop %v2650
      %v2801 = vmul.f32 %v2650, %v2800
      %v2802 = vsub.f32 1.0, %v2801
      %v2803 = vmul.f32 %v2800, %v2802
      %v2804 = vadd.f32 %v2800, %v2803
      %vm2805 = vweird.f32 %v2650
      %vm2806 = vweird.f32 %v2800
      %vm2807 = vmor %vm2805, %vm2806
      %v2808 = vsel %vm2807, %v2800, %v2804
      %v2809 = vand.u32 2147483647, %v2650
      %vm2810 = vcmp.eq.f32.partialorder %v2809, 8.507059e+37
      %v2811 = vand.u32 %v2650, 2147483648
      %v2812 = vor.u32 1.1754944e-38, %v2811
      %v2813 = vsel %vm2810, %v2812, %v2808
      %v2814 = vmul.f32 1.0, %v2813
      %v2815 = vrcp.pop %v2651
      %v2816 = vmul.f32 %v2651, %v2815
      %v2817 = vsub.f32 1.0, %v2816
      %v2818 = vmul.f32 %v2815, %v2817
      %v2819 = vadd.f32 %v2815, %v2818
      %vm2820 = vweird.f32 %v2651
      %vm2821 = vweird.f32 %v2815
      %vm2822 = vmor %vm2820, %vm2821
      %v2823 = vsel %vm2822, %v2815, %v2819
      %v2824 = vand.u32 2147483647, %v2651
      %vm2825 = vcmp.eq.f32.partialorder %v2824, 8.507059e+37
      %v2826 = vand.u32 %v2651, 2147483648
      %v2827 = vor.u32 1.1754944e-38, %v2826
      %v2828 = vsel %vm2825, %v2827, %v2823
      %v2829 = vmul.f32 1.0, %v2828
      %v2830 = vrcp.pop %v2652
      %v2831 = vmul.f32 %v2652, %v2830
      %v2832 = vsub.f32 1.0, %v2831
      %v2833 = vmul.f32 %v2830, %v2832
      %v2834 = vadd.f32 %v2830, %v2833
      %vm2835 = vweird.f32 %v2652
      %vm2836 = vweird.f32 %v2830
      %vm2837 = vmor %vm2835, %vm2836
      %v2838 = vsel %vm2837, %v2830, %v2834
      %v2839 = vand.u32 2147483647, %v2652
      %vm2840 = vcmp.eq.f32.partialorder %v2839, 8.507059e+37
      %v2841 = vand.u32 %v2652, 2147483648
      %v2842 = vor.u32 1.1754944e-38, %v2841
      %v2843 = vsel %vm2840, %v2842, %v2838
      %v2844 = vmul.f32 1.0, %v2843
      %v2845 = vrcp.pop %v2653
      %v2846 = vmul.f32 %v2653, %v2845
      %v2847 = vsub.f32 1.0, %v2846
      %v2848 = vmul.f32 %v2845, %v2847
      %v2849 = vadd.f32 %v2845, %v2848
      %vm2850 = vweird.f32 %v2653
      %vm2851 = vweird.f32 %v2845
      %vm2852 = vmor %vm2850, %vm2851
      %v2853 = vsel %vm2852, %v2845, %v2849
      %v2854 = vand.u32 2147483647, %v2653
      %vm2855 = vcmp.eq.f32.partialorder %v2854, 8.507059e+37
      %v2856 = vand.u32 %v2653, 2147483648
      %v2857 = vor.u32 1.1754944e-38, %v2856
      %v2858 = vsel %vm2855, %v2857, %v2853
      %v2859 = vmul.f32 1.0, %v2858
      %v2860 = vrcp.pop %v2654
      %v2861 = vmul.f32 %v2654, %v2860
      %v2862 = vsub.f32 1.0, %v2861
      %v2863 = vmul.f32 %v2860, %v2862
      %v2864 = vadd.f32 %v2860, %v2863
      %vm2865 = vweird.f32 %v2654
      %vm2866 = vweird.f32 %v2860
      %vm2867 = vmor %vm2865, %vm2866
      %v2868 = vsel %vm2867, %v2860, %v2864
      %v2869 = vand.u32 2147483647, %v2654
      %vm2870 = vcmp.eq.f32.partialorder %v2869, 8.507059e+37
      %v2871 = vand.u32 %v2654, 2147483648
      %v2872 = vor.u32 1.1754944e-38, %v2871
      %v2873 = vsel %vm2870, %v2872, %v2868
      %v2874 = vmul.f32 1.0, %v2873
      %v2875 = vrcp.pop %v2655
      %v2876 = vmul.f32 %v2655, %v2875
      %v2877 = vsub.f32 1.0, %v2876
      %v2878 = vmul.f32 %v2875, %v2877
      %v2879 = vadd.f32 %v2875, %v2878
      %vm2880 = vweird.f32 %v2655
      %vm2881 = vweird.f32 %v2875
      %vm2882 = vmor %vm2880, %vm2881
      %v2883 = vsel %vm2882, %v2875, %v2879
      %v2884 = vand.u32 2147483647, %v2655
      %vm2885 = vcmp.eq.f32.partialorder %v2884, 8.507059e+37
      %v2886 = vand.u32 %v2655, 2147483648
      %v2887 = vor.u32 1.1754944e-38, %v2886
      %v2888 = vsel %vm2885, %v2887, %v2883
      %v2889 = vmul.f32 1.0, %v2888
      %v2890 = vrcp.pop %v2656
      %v2891 = vmul.f32 %v2656, %v2890
      %v2892 = vsub.f32 1.0, %v2891
      %v2893 = vmul.f32 %v2890, %v2892
      %v2894 = vadd.f32 %v2890, %v2893
      %vm2895 = vweird.f32 %v2656
      %vm2896 = vweird.f32 %v2890
      %vm2897 = vmor %vm2895, %vm2896
      %v2898 = vsel %vm2897, %v2890, %v2894
      %v2899 = vand.u32 2147483647, %v2656
      %vm2900 = vcmp.eq.f32.partialorder %v2899, 8.507059e+37
      %v2901 = vand.u32 %v2656, 2147483648
      %v2902 = vor.u32 1.1754944e-38, %v2901
      %v2903 = vsel %vm2900, %v2902, %v2898
      %v2904 = vmul.f32 1.0, %v2903
      %v2905 = vrcp.pop %v2657
      %v2906 = vmul.f32 %v2657, %v2905
      %v2907 = vsub.f32 1.0, %v2906
      %v2908 = vmul.f32 %v2905, %v2907
      %v2909 = vadd.f32 %v2905, %v2908
      %vm2910 = vweird.f32 %v2657
      %vm2911 = vweird.f32 %v2905
      %vm2912 = vmor %vm2910, %vm2911
      %v2913 = vsel %vm2912, %v2905, %v2909
      %v2914 = vand.u32 2147483647, %v2657
      %vm2915 = vcmp.eq.f32.partialorder %v2914, 8.507059e+37
      %v2916 = vand.u32 %v2657, 2147483648
      %v2917 = vor.u32 1.1754944e-38, %v2916
      %v2918 = vsel %vm2915, %v2917, %v2913
      %v2919 = vmul.f32 1.0, %v2918
      %v2920 = vrcp.pop %v2658
      %v2921 = vmul.f32 %v2658, %v2920
      %v2922 = vsub.f32 1.0, %v2921
      %v2923 = vmul.f32 %v2920, %v2922
      %v2924 = vadd.f32 %v2920, %v2923
      %vm2925 = vweird.f32 %v2658
      %vm2926 = vweird.f32 %v2920
      %vm2927 = vmor %vm2925, %vm2926
      %v2928 = vsel %vm2927, %v2920, %v2924
      %v2929 = vand.u32 2147483647, %v2658
      %vm2930 = vcmp.eq.f32.partialorder %v2929, 8.507059e+37
      %v2931 = vand.u32 %v2658, 2147483648
      %v2932 = vor.u32 1.1754944e-38, %v2931
      %v2933 = vsel %vm2930, %v2932, %v2928
      %v2934 = vmul.f32 1.0, %v2933
      %v2935 = vrcp.pop %v2659
      %v2936 = vmul.f32 %v2659, %v2935
      %v2937 = vsub.f32 1.0, %v2936
      %v2938 = vmul.f32 %v2935, %v2937
      %v2939 = vadd.f32 %v2935, %v2938
      %vm2940 = vweird.f32 %v2659
      %vm2941 = vweird.f32 %v2935
      %vm2942 = vmor %vm2940, %vm2941
      %v2943 = vsel %vm2942, %v2935, %v2939
      %v2944 = vand.u32 2147483647, %v2659
      %vm2945 = vcmp.eq.f32.partialorder %v2944, 8.507059e+37
      %v2946 = vand.u32 %v2659, 2147483648
      %v2947 = vor.u32 1.1754944e-38, %v2946
      %v2948 = vsel %vm2945, %v2947, %v2943
      %v2949 = vmul.f32 1.0, %v2948
      %v2950 = vrcp.pop %v2660
      %v2951 = vmul.f32 %v2660, %v2950
      %v2952 = vsub.f32 1.0, %v2951
      %v2953 = vmul.f32 %v2950, %v2952
      %v2954 = vadd.f32 %v2950, %v2953
      %vm2955 = vweird.f32 %v2660
      %vm2956 = vweird.f32 %v2950
      %vm2957 = vmor %vm2955, %vm2956
      %v2958 = vsel %vm2957, %v2950, %v2954
      %v2959 = vand.u32 2147483647, %v2660
      %vm2960 = vcmp.eq.f32.partialorder %v2959, 8.507059e+37
      %v2961 = vand.u32 %v2660, 2147483648
      %v2962 = vor.u32 1.1754944e-38, %v2961
      %v2963 = vsel %vm2960, %v2962, %v2958
      %v2964 = vmul.f32 1.0, %v2963
      %v2965 = vrcp.pop %v2661
      %v2966 = vmul.f32 %v2661, %v2965
      %v2967 = vsub.f32 1.0, %v2966
      %v2968 = vmul.f32 %v2965, %v2967
      %v2969 = vadd.f32 %v2965, %v2968
      %vm2970 = vweird.f32 %v2661
      %vm2971 = vweird.f32 %v2965
      %vm2972 = vmor %vm2970, %vm2971
      %v2973 = vsel %vm2972, %v2965, %v2969
      %v2974 = vand.u32 2147483647, %v2661
      %vm2975 = vcmp.eq.f32.partialorder %v2974, 8.507059e+37
      %v2976 = vand.u32 %v2661, 2147483648
      %v2977 = vor.u32 1.1754944e-38, %v2976
      %v2978 = vsel %vm2975, %v2977, %v2973
      %v2979 = vmul.f32 1.0, %v2978
      %v2980 = vrcp.pop %v2662
      %v2981 = vmul.f32 %v2662, %v2980
      %v2982 = vsub.f32 1.0, %v2981
      %v2983 = vmul.f32 %v2980, %v2982
      %v2984 = vadd.f32 %v2980, %v2983
      %vm2985 = vweird.f32 %v2662
      %vm2986 = vweird.f32 %v2980
      %vm2987 = vmor %vm2985, %vm2986
      %v2988 = vsel %vm2987, %v2980, %v2984
      %v2989 = vand.u32 2147483647, %v2662
      %vm2990 = vcmp.eq.f32.partialorder %v2989, 8.507059e+37
      %v2991 = vand.u32 %v2662, 2147483648
      %v2992 = vor.u32 1.1754944e-38, %v2991
      %v2993 = vsel %vm2990, %v2992, %v2988
      %v2994 = vmul.f32 1.0, %v2993
      %v2995 = vrcp.pop %v2663
      %v2996 = vmul.f32 %v2663, %v2995
      %v2997 = vsub.f32 1.0, %v2996
      %v2998 = vmul.f32 %v2995, %v2997
      %v2999 = vadd.f32 %v2995, %v2998
      %vm3000 = vweird.f32 %v2663
      %vm3001 = vweird.f32 %v2995
      %vm3002 = vmor %vm3000, %vm3001
      %v3003 = vsel %vm3002, %v2995, %v2999
      %v3004 = vand.u32 2147483647, %v2663
      %vm3005 = vcmp.eq.f32.partialorder %v3004, 8.507059e+37
      %v3006 = vand.u32 %v2663, 2147483648
      %v3007 = vor.u32 1.1754944e-38, %v3006
      %v3008 = vsel %vm3005, %v3007, %v3003
      %v3009 = vmul.f32 1.0, %v3008
      %v3010 = vrcp.pop %v2664
      %v3011 = vmul.f32 %v2664, %v3010
      %v3012 = vsub.f32 1.0, %v3011
      %v3013 = vmul.f32 %v3010, %v3012
      %v3014 = vadd.f32 %v3010, %v3013
      %vm3015 = vweird.f32 %v2664
      %vm3016 = vweird.f32 %v3010
      %vm3017 = vmor %vm3015, %vm3016
      %v3018 = vsel %vm3017, %v3010, %v3014
      %v3019 = vand.u32 2147483647, %v2664
      %vm3020 = vcmp.eq.f32.partialorder %v3019, 8.507059e+37
      %v3021 = vand.u32 %v2664, 2147483648
      %v3022 = vor.u32 1.1754944e-38, %v3021
      %v3023 = vsel %vm3020, %v3022, %v3018
      %v3024 = vmul.f32 1.0, %v3023
      %v3025 = vmul.f32 %v2679, 1.0614054
      %v3026 = vmul.f32 %v2694, 1.0614054
      %v3027 = vmul.f32 %v2709, 1.0614054
      %v3028 = vmul.f32 %v2724, 1.0614054
      %v3029 = vmul.f32 %v2739, 1.0614054
      %v3030 = vmul.f32 %v2754, 1.0614054
      %v3031 = vmul.f32 %v2769, 1.0614054
      %v3032 = vmul.f32 %v2784, 1.0614054
      %v3033 = vmul.f32 %v2799, 1.0614054
      %v3034 = vmul.f32 %v2814, 1.0614054
      %v3035 = vmul.f32 %v2829, 1.0614054
      %v3036 = vmul.f32 %v2844, 1.0614054
      %v3037 = vmul.f32 %v2859, 1.0614054
      %v3038 = vmul.f32 %v2874, 1.0614054
      %v3039 = vmul.f32 %v2889, 1.0614054
      %v3040 = vmul.f32 %v2904, 1.0614054
      %v3041 = vmul.f32 %v2919, 1.0614054
      %v3042 = vmul.f32 %v2934, 1.0614054
      %v3043 = vmul.f32 %v2949, 1.0614054
      %v3044 = vmul.f32 %v2964, 1.0614054
      %v3045 = vmul.f32 %v2979, 1.0614054
      %v3046 = vmul.f32 %v2994, 1.0614054
      %v3047 = vmul.f32 %v3009, 1.0614054
      %v3048 = vmul.f32 %v3024, 1.0614054
      %v3049 = vadd.f32 %v3025, -1.4531521
      %v3050 = vadd.f32 %v3026, -1.4531521
      %v3051 = vadd.f32 %v3027, -1.4531521
      %v3052 = vadd.f32 %v3028, -1.4531521
      %v3053 = vadd.f32 %v3029, -1.4531521
      %v3054 = vadd.f32 %v3030, -1.4531521
      %v3055 = vadd.f32 %v3031, -1.4531521
      %v3056 = vadd.f32 %v3032, -1.4531521
      %v3057 = vadd.f32 %v3033, -1.4531521
      %v3058 = vadd.f32 %v3034, -1.4531521
      %v3059 = vadd.f32 %v3035, -1.4531521
      %v3060 = vadd.f32 %v3036, -1.4531521
      %v3061 = vadd.f32 %v3037, -1.4531521
      %v3062 = vadd.f32 %v3038, -1.4531521
      %v3063 = vadd.f32 %v3039, -1.4531521
      %v3064 = vadd.f32 %v3040, -1.4531521
      %v3065 = vadd.f32 %v3041, -1.4531521
      %v3066 = vadd.f32 %v3042, -1.4531521
      %v3067 = vadd.f32 %v3043, -1.4531521
      %v3068 = vadd.f32 %v3044, -1.4531521
      %v3069 = vadd.f32 %v3045, -1.4531521
      %v3070 = vadd.f32 %v3046, -1.4531521
      %v3071 = vadd.f32 %v3047, -1.4531521
      %v3072 = vadd.f32 %v3048, -1.4531521
      %v3073 = vmul.f32 %v3049, %v2679
      %v3074 = vmul.f32 %v3050, %v2694
      %v3075 = vmul.f32 %v3051, %v2709
      %v3076 = vmul.f32 %v3052, %v2724
      %v3077 = vmul.f32 %v3053, %v2739
      %v3078 = vmul.f32 %v3054, %v2754
      %v3079 = vmul.f32 %v3055, %v2769
      %v3080 = vmul.f32 %v3056, %v2784
      %v3081 = vmul.f32 %v3057, %v2799
      %v3082 = vmul.f32 %v3058, %v2814
      %v3083 = vmul.f32 %v3059, %v2829
      %v3084 = vmul.f32 %v3060, %v2844
      %v3085 = vmul.f32 %v3061, %v2859
      %v3086 = vmul.f32 %v3062, %v2874
      %v3087 = vmul.f32 %v3063, %v2889
      %v3088 = vmul.f32 %v3064, %v2904
      %v3089 = vmul.f32 %v3065, %v2919
      %v3090 = vmul.f32 %v3066, %v2934
      %v3091 = vmul.f32 %v3067, %v2949
      %v3092 = vmul.f32 %v3068, %v2964
      %v3093 = vmul.f32 %v3069, %v2979
      %v3094 = vmul.f32 %v3070, %v2994
      %v3095 = vmul.f32 %v3071, %v3009
      %v3096 = vmul.f32 %v3072, %v3024
      %v3097 = vadd.f32 %v3073, 1.4214138
      %v3098 = vadd.f32 %v3074, 1.4214138
      %v3099 = vadd.f32 %v3075, 1.4214138
      %v3100 = vadd.f32 %v3076, 1.4214138
      %v3101 = vadd.f32 %v3077, 1.4214138
      %v3102 = vadd.f32 %v3078, 1.4214138
      %v3103 = vadd.f32 %v3079, 1.4214138
      %v3104 = vadd.f32 %v3080, 1.4214138
      %v3105 = vadd.f32 %v3081, 1.4214138
      %v3106 = vadd.f32 %v3082, 1.4214138
      %v3107 = vadd.f32 %v3083, 1.4214138
      %v3108 = vadd.f32 %v3084, 1.4214138
      %v3109 = vadd.f32 %v3085, 1.4214138
      %v3110 = vadd.f32 %v3086, 1.4214138
      %v3111 = vadd.f32 %v3087, 1.4214138
      %v3112 = vadd.f32 %v3088, 1.4214138
      %v3113 = vadd.f32 %v3089, 1.4214138
      %v3114 = vadd.f32 %v3090, 1.4214138
      %v3115 = vadd.f32 %v3091, 1.4214138
      %v3116 = vadd.f32 %v3092, 1.4214138
      %v3117 = vadd.f32 %v3093, 1.4214138
      %v3118 = vadd.f32 %v3094, 1.4214138
      %v3119 = vadd.f32 %v3095, 1.4214138
      %v3120 = vadd.f32 %v3096, 1.4214138
      %v3121 = vmul.f32 %v3097, %v2679
      %v3122 = vmul.f32 %v3098, %v2694
      %v3123 = vmul.f32 %v3099, %v2709
      %v3124 = vmul.f32 %v3100, %v2724
      %v3125 = vmul.f32 %v3101, %v2739
      %v3126 = vmul.f32 %v3102, %v2754
      %v3127 = vmul.f32 %v3103, %v2769
      %v3128 = vmul.f32 %v3104, %v2784
      %v3129 = vmul.f32 %v3105, %v2799
      %v3130 = vmul.f32 %v3106, %v2814
      %v3131 = vmul.f32 %v3107, %v2829
      %v3132 = vmul.f32 %v3108, %v2844
      %v3133 = vmul.f32 %v3109, %v2859
      %v3134 = vmul.f32 %v3110, %v2874
      %v3135 = vmul.f32 %v3111, %v2889
      %v3136 = vmul.f32 %v3112, %v2904
      %v3137 = vmul.f32 %v3113, %v2919
      %v3138 = vmul.f32 %v3114, %v2934
      %v3139 = vmul.f32 %v3115, %v2949
      %v3140 = vmul.f32 %v3116, %v2964
      %v3141 = vmul.f32 %v3117, %v2979
      %v3142 = vmul.f32 %v3118, %v2994
      %v3143 = vmul.f32 %v3119, %v3009
      %v3144 = vmul.f32 %v3120, %v3024
      %v3145 = vadd.f32 %v3121, -0.28449672
      %v3146 = vadd.f32 %v3122, -0.28449672
      %v3147 = vadd.f32 %v3123, -0.28449672
      %v3148 = vadd.f32 %v3124, -0.28449672
      %v3149 = vadd.f32 %v3125, -0.28449672
      %v3150 = vadd.f32 %v3126, -0.28449672
      %v3151 = vadd.f32 %v3127, -0.28449672
      %v3152 = vadd.f32 %v3128, -0.28449672
      %v3153 = vadd.f32 %v3129, -0.28449672
      %v3154 = vadd.f32 %v3130, -0.28449672
      %v3155 = vadd.f32 %v3131, -0.28449672
      %v3156 = vadd.f32 %v3132, -0.28449672
      %v3157 = vadd.f32 %v3133, -0.28449672
      %v3158 = vadd.f32 %v3134, -0.28449672
      %v3159 = vadd.f32 %v3135, -0.28449672
      %v3160 = vadd.f32 %v3136, -0.28449672
      %v3161 = vadd.f32 %v3137, -0.28449672
      %v3162 = vadd.f32 %v3138, -0.28449672
      %v3163 = vadd.f32 %v3139, -0.28449672
      %v3164 = vadd.f32 %v3140, -0.28449672
      %v3165 = vadd.f32 %v3141, -0.28449672
      %v3166 = vadd.f32 %v3142, -0.28449672
      %v3167 = vadd.f32 %v3143, -0.28449672
      %v3168 = vadd.f32 %v3144, -0.28449672
      %v3169 = vmul.f32 %v3145, %v2679
      %v3170 = vmul.f32 %v3146, %v2694
      %v3171 = vmul.f32 %v3147, %v2709
      %v3172 = vmul.f32 %v3148, %v2724
      %v3173 = vmul.f32 %v3149, %v2739
      %v3174 = vmul.f32 %v3150, %v2754
      %v3175 = vmul.f32 %v3151, %v2769
      %v3176 = vmul.f32 %v3152, %v2784
      %v3177 = vmul.f32 %v3153, %v2799
      %v3178 = vmul.f32 %v3154, %v2814
      %v3179 = vmul.f32 %v3155, %v2829
      %v3180 = vmul.f32 %v3156, %v2844
      %v3181 = vmul.f32 %v3157, %v2859
      %v3182 = vmul.f32 %v3158, %v2874
      %v3183 = vmul.f32 %v3159, %v2889
      %v3184 = vmul.f32 %v3160, %v2904
      %v3185 = vmul.f32 %v3161, %v2919
      %v3186 = vmul.f32 %v3162, %v2934
      %v3187 = vmul.f32 %v3163, %v2949
      %v3188 = vmul.f32 %v3164, %v2964
      %v3189 = vmul.f32 %v3165, %v2979
      %v3190 = vmul.f32 %v3166, %v2994
      %v3191 = vmul.f32 %v3167, %v3009
      %v3192 = vmul.f32 %v3168, %v3024
      %v3193 = vadd.f32 %v3169, 0.2548296
      %v3194 = vadd.f32 %v3170, 0.2548296
      %v3195 = vadd.f32 %v3171, 0.2548296
      %v3196 = vadd.f32 %v3172, 0.2548296
      %v3197 = vadd.f32 %v3173, 0.2548296
      %v3198 = vadd.f32 %v3174, 0.2548296
      %v3199 = vadd.f32 %v3175, 0.2548296
      %v3200 = vadd.f32 %v3176, 0.2548296
      %v3201 = vadd.f32 %v3177, 0.2548296
      %v3202 = vadd.f32 %v3178, 0.2548296
      %v3203 = vadd.f32 %v3179, 0.2548296
      %v3204 = vadd.f32 %v3180, 0.2548296
      %v3205 = vadd.f32 %v3181, 0.2548296
      %v3206 = vadd.f32 %v3182, 0.2548296
      %v3207 = vadd.f32 %v3183, 0.2548296
      %v3208 = vadd.f32 %v3184, 0.2548296
      %v3209 = vadd.f32 %v3185, 0.2548296
      %v3210 = vadd.f32 %v3186, 0.2548296
      %v3211 = vadd.f32 %v3187, 0.2548296
      %v3212 = vadd.f32 %v3188, 0.2548296
      %v3213 = vadd.f32 %v3189, 0.2548296
      %v3214 = vadd.f32 %v3190, 0.2548296
      %v3215 = vadd.f32 %v3191, 0.2548296
      %v3216 = vadd.f32 %v3192, 0.2548296
      %v3217 = vmul.f32 %v3193, %v2679
      %v3218 = vmul.f32 %v3194, %v2694
      %v3219 = vmul.f32 %v3195, %v2709
      %v3220 = vmul.f32 %v3196, %v2724
      %v3221 = vmul.f32 %v3197, %v2739
      %v3222 = vmul.f32 %v3198, %v2754
      %v3223 = vmul.f32 %v3199, %v2769
      %v3224 = vmul.f32 %v3200, %v2784
      %v3225 = vmul.f32 %v3201, %v2799
      %v3226 = vmul.f32 %v3202, %v2814
      %v3227 = vmul.f32 %v3203, %v2829
      %v3228 = vmul.f32 %v3204, %v2844
      %v3229 = vmul.f32 %v3205, %v2859
      %v3230 = vmul.f32 %v3206, %v2874
      %v3231 = vmul.f32 %v3207, %v2889
      %v3232 = vmul.f32 %v3208, %v2904
      %v3233 = vmul.f32 %v3209, %v2919
      %v3234 = vmul.f32 %v3210, %v2934
      %v3235 = vmul.f32 %v3211, %v2949
      %v3236 = vmul.f32 %v3212, %v2964
      %v3237 = vmul.f32 %v3213, %v2979
      %v3238 = vmul.f32 %v3214, %v2994
      %v3239 = vmul.f32 %v3215, %v3009
      %v3240 = vmul.f32 %v3216, %v3024
      %v3241 = vsub.f32 0.0, %v2593
      %v3242 = vsub.f32 0.0, %v2594
      %v3243 = vsub.f32 0.0, %v2595
      %v3244 = vsub.f32 0.0, %v2596
      %v3245 = vsub.f32 0.0, %v2597
      %v3246 = vsub.f32 0.0, %v2598
      %v3247 = vsub.f32 0.0, %v2599
      %v3248 = vsub.f32 0.0, %v2600
      %v3249 = vsub.f32 0.0, %v2601
      %v3250 = vsub.f32 0.0, %v2602
      %v3251 = vsub.f32 0.0, %v2603
      %v3252 = vsub.f32 0.0, %v2604
      %v3253 = vsub.f32 0.0, %v2605
      %v3254 = vsub.f32 0.0, %v2606
      %v3255 = vsub.f32 0.0, %v2607
      %v3256 = vsub.f32 0.0, %v2608
      %v3257 = vsub.f32 0.0, %v2609
      %v3258 = vsub.f32 0.0, %v2610
      %v3259 = vsub.f32 0.0, %v2611
      %v3260 = vsub.f32 0.0, %v2612
      %v3261 = vsub.f32 0.0, %v2613
      %v3262 = vsub.f32 0.0, %v2614
      %v3263 = vsub.f32 0.0, %v2615
      %v3264 = vsub.f32 0.0, %v2616
      %v3265 = vmul.f32 %v3241, %v2593
      %v3266 = vmul.f32 %v3242, %v2594
      %v3267 = vmul.f32 %v3243, %v2595
      %v3268 = vmul.f32 %v3244, %v2596
      %v3269 = vmul.f32 %v3245, %v2597
      %v3270 = vmul.f32 %v3246, %v2598
      %v3271 = vmul.f32 %v3247, %v2599
      %v3272 = vmul.f32 %v3248, %v2600
      %v3273 = vmul.f32 %v3249, %v2601
      %v3274 = vmul.f32 %v3250, %v2602
      %v3275 = vmul.f32 %v3251, %v2603
      %v3276 = vmul.f32 %v3252, %v2604
      %v3277 = vmul.f32 %v3253, %v2605
      %v3278 = vmul.f32 %v3254, %v2606
      %v3279 = vmul.f32 %v3255, %v2607
      %v3280 = vmul.f32 %v3256, %v2608
      %v3281 = vmul.f32 %v3257, %v2609
      %v3282 = vmul.f32 %v3258, %v2610
      %v3283 = vmul.f32 %v3259, %v2611
      %v3284 = vmul.f32 %v3260, %v2612
      %v3285 = vmul.f32 %v3261, %v2613
      %v3286 = vmul.f32 %v3262, %v2614
      %v3287 = vmul.f32 %v3263, %v2615
      %v3288 = vmul.f32 %v3264, %v2616
      %v3289 = vmul.f32 %v3265, 1.442695
      %v3290 = vpow.pop %v3289
      %v3291 = vmul.f32 %v3266, 1.442695
      %v3292 = vpow.pop %v3291
      %v3293 = vmul.f32 %v3267, 1.442695
      %v3294 = vpow.pop %v3293
      %v3295 = vmul.f32 %v3268, 1.442695
      %v3296 = vpow.pop %v3295
      %v3297 = vmul.f32 %v3269, 1.442695
      %v3298 = vpow.pop %v3297
      %v3299 = vmul.f32 %v3270, 1.442695
      %v3300 = vpow.pop %v3299
      %v3301 = vmul.f32 %v3271, 1.442695
      %v3302 = vpow.pop %v3301
      %v3303 = vmul.f32 %v3272, 1.442695
      %v3304 = vpow.pop %v3303
      %v3305 = vmul.f32 %v3273, 1.442695
      %v3306 = vpow.pop %v3305
      %v3307 = vmul.f32 %v3274, 1.442695
      %v3308 = vpow.pop %v3307
      %v3309 = vmul.f32 %v3275, 1.442695
      %v3310 = vpow.pop %v3309
      %v3311 = vmul.f32 %v3276, 1.442695
      %v3312 = vpow.pop %v3311
      %v3313 = vmul.f32 %v3277, 1.442695
      %v3314 = vpow.pop %v3313
      %v3315 = vmul.f32 %v3278, 1.442695
      %v3316 = vpow.pop %v3315
      %v3317 = vmul.f32 %v3279, 1.442695
      %v3318 = vpow.pop %v3317
      %v3319 = vmul.f32 %v3280, 1.442695
      %v3320 = vpow.pop %v3319
      %v3321 = vmul.f32 %v3281, 1.442695
      %v3322 = vpow.pop %v3321
      %v3323 = vmul.f32 %v3282, 1.442695
      %v3324 = vpow.pop %v3323
      %v3325 = vmul.f32 %v3283, 1.442695
      %v3326 = vpow.pop %v3325
      %v3327 = vmul.f32 %v3284, 1.442695
      %v3328 = vpow.pop %v3327
      %v3329 = vmul.f32 %v3285, 1.442695
      %v3330 = vpow.pop %v3329
      %v3331 = vmul.f32 %v3286, 1.442695
      %v3332 = vpow.pop %v3331
      %v3333 = vmul.f32 %v3287, 1.442695
      %v3334 = vpow.pop %v3333
      %v3335 = vmul.f32 %v3288, 1.442695
      %v3336 = vpow.pop %v3335
      %v3337 = vmul.f32 %v3217, %v3290
      %v3338 = vmul.f32 %v3218, %v3292
      %v3339 = vmul.f32 %v3219, %v3294
      %v3340 = vmul.f32 %v3220, %v3296
      %v3341 = vmul.f32 %v3221, %v3298
      %v3342 = vmul.f32 %v3222, %v3300
      %v3343 = vmul.f32 %v3223, %v3302
      %v3344 = vmul.f32 %v3224, %v3304
      %v3345 = vmul.f32 %v3225, %v3306
      %v3346 = vmul.f32 %v3226, %v3308
      %v3347 = vmul.f32 %v3227, %v3310
      %v3348 = vmul.f32 %v3228, %v3312
      %v3349 = vmul.f32 %v3229, %v3314
      %v3350 = vmul.f32 %v3230, %v3316
      %v3351 = vmul.f32 %v3231, %v3318
      %v3352 = vmul.f32 %v3232, %v3320
      %v3353 = vmul.f32 %v3233, %v3322
      %v3354 = vmul.f32 %v3234, %v3324
      %v3355 = vmul.f32 %v3235, %v3326
      %v3356 = vmul.f32 %v3236, %v3328
      %v3357 = vmul.f32 %v3237, %v3330
      %v3358 = vmul.f32 %v3238, %v3332
      %v3359 = vmul.f32 %v3239, %v3334
      %v3360 = vmul.f32 %v3240, %v3336
      %v3361 = vsub.f32 1.0, %v3337
      %v3362 = vsub.f32 1.0, %v3338
      %v3363 = vsub.f32 1.0, %v3339
      %v3364 = vsub.f32 1.0, %v3340
      %v3365 = vsub.f32 1.0, %v3341
      %v3366 = vsub.f32 1.0, %v3342
      %v3367 = vsub.f32 1.0, %v3343
      %v3368 = vsub.f32 1.0, %v3344
      %v3369 = vsub.f32 1.0, %v3345
      %v3370 = vsub.f32 1.0, %v3346
      %v3371 = vsub.f32 1.0, %v3347
      %v3372 = vsub.f32 1.0, %v3348
      %v3373 = vsub.f32 1.0, %v3349
      %v3374 = vsub.f32 1.0, %v3350
      %v3375 = vsub.f32 1.0, %v3351
      %v3376 = vsub.f32 1.0, %v3352
      %v3377 = vsub.f32 1.0, %v3353
      %v3378 = vsub.f32 1.0, %v3354
      %v3379 = vsub.f32 1.0, %v3355
      %v3380 = vsub.f32 1.0, %v3356
      %v3381 = vsub.f32 1.0, %v3357
      %v3382 = vsub.f32 1.0, %v3358
      %v3383 = vsub.f32 1.0, %v3359
      %v3384 = vsub.f32 1.0, %v3360
      %v3385 = vmul.f32 %v2569, %v3361
      %v3386 = vmul.f32 %v2570, %v3362
      %v3387 = vmul.f32 %v2571, %v3363
      %v3388 = vmul.f32 %v2572, %v3364
      %v3389 = vmul.f32 %v2573, %v3365
      %v3390 = vmul.f32 %v2574, %v3366
      %v3391 = vmul.f32 %v2575, %v3367
      %v3392 = vmul.f32 %v2576, %v3368
      %v3393 = vmul.f32 %v2577, %v3369
      %v3394 = vmul.f32 %v2578, %v3370
      %v3395 = vmul.f32 %v2579, %v3371
      %v3396 = vmul.f32 %v2580, %v3372
      %v3397 = vmul.f32 %v2581, %v3373
      %v3398 = vmul.f32 %v2582, %v3374
      %v3399 = vmul.f32 %v2583, %v3375
      %v3400 = vmul.f32 %v2584, %v3376
      %v3401 = vmul.f32 %v2585, %v3377
      %v3402 = vmul.f32 %v2586, %v3378
      %v3403 = vmul.f32 %v2587, %v3379
      %v3404 = vmul.f32 %v2588, %v3380
      %v3405 = vmul.f32 %v2589, %v3381
      %v3406 = vmul.f32 %v2590, %v3382
      %v3407 = vmul.f32 %v2591, %v3383
      %v3408 = vmul.f32 %v2592, %v3384
      %v3409 = vadd.f32 %v3385, 1.0
      %v3410 = vadd.f32 %v3386, 1.0
      %v3411 = vadd.f32 %v3387, 1.0
      %v3412 = vadd.f32 %v3388, 1.0
      %v3413 = vadd.f32 %v3389, 1.0
      %v3414 = vadd.f32 %v3390, 1.0
      %v3415 = vadd.f32 %v3391, 1.0
      %v3416 = vadd.f32 %v3392, 1.0
      %v3417 = vadd.f32 %v3393, 1.0
      %v3418 = vadd.f32 %v3394, 1.0
      %v3419 = vadd.f32 %v3395, 1.0
      %v3420 = vadd.f32 %v3396, 1.0
      %v3421 = vadd.f32 %v3397, 1.0
      %v3422 = vadd.f32 %v3398, 1.0
      %v3423 = vadd.f32 %v3399, 1.0
      %v3424 = vadd.f32 %v3400, 1.0
      %v3425 = vadd.f32 %v3401, 1.0
      %v3426 = vadd.f32 %v3402, 1.0
      %v3427 = vadd.f32 %v3403, 1.0
      %v3428 = vadd.f32 %v3404, 1.0
      %v3429 = vadd.f32 %v3405, 1.0
      %v3430 = vadd.f32 %v3406, 1.0
      %v3431 = vadd.f32 %v3407, 1.0
      %v3432 = vadd.f32 %v3408, 1.0
      %v3433 = vmul.f32 %v2497, %v3409
      %v3434 = vmul.f32 %v2498, %v3410
      %v3435 = vmul.f32 %v2499, %v3411
      %v3436 = vmul.f32 %v2500, %v3412
      %v3437 = vmul.f32 %v2501, %v3413
      %v3438 = vmul.f32 %v2502, %v3414
      %v3439 = vmul.f32 %v2503, %v3415
      %v3440 = vmul.f32 %v2504, %v3416
      %v3441 = vmul.f32 %v2505, %v3417
      %v3442 = vmul.f32 %v2506, %v3418
      %v3443 = vmul.f32 %v2507, %v3419
      %v3444 = vmul.f32 %v2508, %v3420
      %v3445 = vmul.f32 %v2509, %v3421
      %v3446 = vmul.f32 %v2510, %v3422
      %v3447 = vmul.f32 %v2511, %v3423
      %v3448 = vmul.f32 %v2512, %v3424
      %v3449 = vmul.f32 %v2513, %v3425
      %v3450 = vmul.f32 %v2514, %v3426
      %v3451 = vmul.f32 %v2515, %v3427
      %v3452 = vmul.f32 %v2516, %v3428
      %v3453 = vmul.f32 %v2517, %v3429
      %v3454 = vmul.f32 %v2518, %v3430
      %v3455 = vmul.f32 %v2519, %v3431
      %v3456 = vmul.f32 %v2520, %v3432
      %v3457 = vpack.c.bf16 %v3437, %v3433
      %v3458 = vpack.c.bf16 %v3438, %v3434
      %v3459 = vpack.c.bf16 %v3439, %v3435
      %v3460 = vpack.c.bf16 %v3440, %v3436
      %v3461 = vpack.c.bf16 %v3445, %v3441
      %v3462 = vpack.c.bf16 %v3446, %v3442
      %v3463 = vpack.c.bf16 %v3447, %v3443
      %v3464 = vpack.c.bf16 %v3448, %v3444
      %v3465 = vpack.c.bf16 %v3453, %v3449
      %v3466 = vpack.c.bf16 %v3454, %v3450
      %v3467 = vpack.c.bf16 %v3455, %v3451
      %v3468 = vpack.c.bf16 %v3456, %v3452
      %v3469 = vld [vmem:[%s556] sm:$0xf]
      %v3470 = vld [vmem:[%s556 + $0x4] sm:$0xf]
      %v3471 = vld [vmem:[%s556 + $0x8] sm:$0xf]
      %v3472 = vld [vmem:[%s556 + $0xc] sm:$0xf]
      %v3473 = vld [vmem:[%s556 + $0x10] sm:$0xf]
      %v3474 = vld [vmem:[%s556 + $0x14] sm:$0xf]
      %v3475 = vld [vmem:[%s556 + $0x18] sm:$0xf]
      %v3476 = vld [vmem:[%s556 + $0x1c] sm:$0xf]
      %v3477 = vld [vmem:[%s556 + $0x20] sm:$0xf]
      %v3478 = vld [vmem:[%s556 + $0x24] sm:$0xf]
      %v3479 = vld [vmem:[%s556 + $0x28] sm:$0xf]
      %v3480 = vld [vmem:[%s556 + $0x2c] sm:$0xf]
      %v3481 = vld [vmem:[%s556 + $0x30] sm:$0xf]
      %v3482 = vld [vmem:[%s556 + $0x34] sm:$0xf]
      %v3483 = vld [vmem:[%s556 + $0x38] sm:$0xf]
      %v3484 = vld [vmem:[%s556 + $0x3c] sm:$0xf]
      %v3485 = vld [vmem:[%s556 + $0x40] sm:$0xf]
      %v3486 = vld [vmem:[%s556 + $0x44] sm:$0xf]
      %v3487 = vld [vmem:[%s556 + $0x48] sm:$0xf]
      %v3488 = vld [vmem:[%s556 + $0x4c] sm:$0xf]
      %v3489 = vld [vmem:[%s556 + $0x50] sm:$0xf]
      %v3490 = vld [vmem:[%s556 + $0x54] sm:$0xf]
      %v3491 = vld [vmem:[%s556 + $0x58] sm:$0xf]
      %v3492 = vld [vmem:[%s556 + $0x5c] sm:$0xf]
      %v3493 = vld [vmem:[%s556 + $0x60] sm:$0xf]
      %v3494 = vld [vmem:[%s556 + $0x64] sm:$0xf]
      %v3495 = vld [vmem:[%s556 + $0x68] sm:$0xf]
      %v3496 = vld [vmem:[%s556 + $0x6c] sm:$0xf]
      %v3497 = vld [vmem:[%s556 + $0x70] sm:$0xf]
      %v3498 = vld [vmem:[%s556 + $0x74] sm:$0xf]
      %v3499 = vld [vmem:[%s556 + $0x78] sm:$0xf]
      %v3500 = vld [vmem:[%s556 + $0x7c] sm:$0xf]
      %v3501 = vld [vmem:[%s556 + $0x80] sm:$0xf]
      %v3502 = vld [vmem:[%s556 + $0x84] sm:$0xf]
      %v3503 = vld [vmem:[%s556 + $0x88] sm:$0xf]
      %v3504 = vld [vmem:[%s556 + $0x8c] sm:$0xf]
      %v3505 = vld [vmem:[%s556 + $0x90] sm:$0xf]
      %v3506 = vld [vmem:[%s556 + $0x94] sm:$0xf]
      %v3507 = vld [vmem:[%s556 + $0x98] sm:$0xf]
      %v3508 = vld [vmem:[%s556 + $0x9c] sm:$0xf]
      %v3509 = vld [vmem:[%s556 + $0xa0] sm:$0xf]
      %v3510 = vld [vmem:[%s556 + $0xa4] sm:$0xf]
      %v3511 = vld [vmem:[%s556 + $0xa8] sm:$0xf]
      %v3512 = vld [vmem:[%s556 + $0xac] sm:$0xf]
      %v3513 = vld [vmem:[%s556 + $0xb0] sm:$0xf]
      %v3514 = vld [vmem:[%s556 + $0xb4] sm:$0xf]
      %v3515 = vld [vmem:[%s556 + $0xb8] sm:$0xf]
      %v3516 = vld [vmem:[%s556 + $0xbc] sm:$0xf]
      %v3517 = vld [vmem:[%s556 + $0xc0] sm:$0xf]
      %v3518 = vld [vmem:[%s556 + $0xc4] sm:$0xf]
      %v3519 = vld [vmem:[%s556 + $0xc8] sm:$0xf]
      %v3520 = vld [vmem:[%s556 + $0xcc] sm:$0xf]
      %v3521 = vld [vmem:[%s556 + $0xd0] sm:$0xf]
      %v3522 = vld [vmem:[%s556 + $0xd4] sm:$0xf]
      %v3523 = vld [vmem:[%s556 + $0xd8] sm:$0xf]
      %v3524 = vld [vmem:[%s556 + $0xdc] sm:$0xf]
      %v3525 = vld [vmem:[%s556 + $0xe0] sm:$0xf]
      %v3526 = vld [vmem:[%s556 + $0xe4] sm:$0xf]
      %v3527 = vld [vmem:[%s556 + $0xe8] sm:$0xf]
      %v3528 = vld [vmem:[%s556 + $0xec] sm:$0xf]
      %v3529 = vld [vmem:[%s556 + $0xf0] sm:$0xf]
      %v3530 = vld [vmem:[%s556 + $0xf4] sm:$0xf]
      %v3531 = vld [vmem:[%s556 + $0xf8] sm:$0xf]
      %v3532 = vld [vmem:[%s556 + $0xfc] sm:$0xf]
      %v3597 = vunpack.c.l.b16 %v3469
      %v3598 = vunpack.c.l.b16 %v3470
      %v3599 = vunpack.c.l.b16 %v3471
      %v3600 = vunpack.c.l.b16 %v3472
      %v3601 = vunpack.c.l.b16 %v3473
      %v3602 = vunpack.c.l.b16 %v3474
      %v3603 = vunpack.c.l.b16 %v3475
      %v3604 = vunpack.c.l.b16 %v3476
      %v3605 = vunpack.c.l.b16 %v3477
      %v3606 = vunpack.c.l.b16 %v3478
      %v3607 = vunpack.c.l.b16 %v3479
      %v3608 = vunpack.c.l.b16 %v3480
      %v3609 = vunpack.c.l.b16 %v3481
      %v3610 = vunpack.c.l.b16 %v3482
      %v3611 = vunpack.c.l.b16 %v3483
      %v3612 = vunpack.c.l.b16 %v3484
      %v3613 = vunpack.c.l.b16 %v3485
      %v3614 = vunpack.c.l.b16 %v3486
      %v3615 = vunpack.c.l.b16 %v3487
      %v3616 = vunpack.c.l.b16 %v3488
      %v3617 = vunpack.c.l.b16 %v3489
      %v3618 = vunpack.c.l.b16 %v3490
      %v3619 = vunpack.c.l.b16 %v3491
      %v3620 = vunpack.c.l.b16 %v3492
      %v3621 = vunpack.c.l.b16 %v3493
      %v3622 = vunpack.c.l.b16 %v3494
      %v3623 = vunpack.c.l.b16 %v3495
      %v3624 = vunpack.c.l.b16 %v3496
      %v3625 = vunpack.c.l.b16 %v3497
      %v3626 = vunpack.c.l.b16 %v3498
      %v3627 = vunpack.c.l.b16 %v3499
      %v3628 = vunpack.c.l.b16 %v3500
      %v3629 = vunpack.c.l.b16 %v3501
      %v3630 = vunpack.c.l.b16 %v3502
      %v3631 = vunpack.c.l.b16 %v3503
      %v3632 = vunpack.c.l.b16 %v3504
      %v3633 = vunpack.c.l.b16 %v3505
      %v3634 = vunpack.c.l.b16 %v3506
      %v3635 = vunpack.c.l.b16 %v3507
      %v3636 = vunpack.c.l.b16 %v3508
      %v3637 = vunpack.c.l.b16 %v3509
      %v3638 = vunpack.c.l.b16 %v3510
      %v3639 = vunpack.c.l.b16 %v3511
      %v3640 = vunpack.c.l.b16 %v3512
      %v3641 = vunpack.c.l.b16 %v3513
      %v3642 = vunpack.c.l.b16 %v3514
      %v3643 = vunpack.c.l.b16 %v3515
      %v3644 = vunpack.c.l.b16 %v3516
      %v3645 = vunpack.c.l.b16 %v3517
      %v3646 = vunpack.c.l.b16 %v3518
      %v3647 = vunpack.c.l.b16 %v3519
      %v3648 = vunpack.c.l.b16 %v3520
      %v3649 = vunpack.c.l.b16 %v3521
      %v3650 = vunpack.c.l.b16 %v3522
      %v3651 = vunpack.c.l.b16 %v3523
      %v3652 = vunpack.c.l.b16 %v3524
      %v3653 = vunpack.c.l.b16 %v3525
      %v3654 = vunpack.c.l.b16 %v3526
      %v3655 = vunpack.c.l.b16 %v3527
      %v3656 = vunpack.c.l.b16 %v3528
      %v3657 = vunpack.c.l.b16 %v3529
      %v3658 = vunpack.c.l.b16 %v3530
      %v3659 = vunpack.c.l.b16 %v3531
      %v3660 = vunpack.c.l.b16 %v3532
      %v3661 = vpack.c.b16 %v3598, %v3597
      %v3662 = vpack.c.b16 %v3600, %v3599
      %v3663 = vpack.c.b16 %v3602, %v3601
      %v3664 = vpack.c.b16 %v3604, %v3603
      %v3665 = vpack.c.b16 %v3606, %v3605
      %v3666 = vpack.c.b16 %v3608, %v3607
      %v3667 = vpack.c.b16 %v3610, %v3609
      %v3668 = vpack.c.b16 %v3612, %v3611
      %v3669 = vpack.c.b16 %v3614, %v3613
      %v3670 = vpack.c.b16 %v3616, %v3615
      %v3671 = vpack.c.b16 %v3618, %v3617
      %v3672 = vpack.c.b16 %v3620, %v3619
      %v3673 = vpack.c.b16 %v3622, %v3621
      %v3674 = vpack.c.b16 %v3624, %v3623
      %v3675 = vpack.c.b16 %v3626, %v3625
      %v3676 = vpack.c.b16 %v3628, %v3627
      %v3677 = vpack.c.b16 %v3630, %v3629
      %v3678 = vpack.c.b16 %v3632, %v3631
      %v3679 = vpack.c.b16 %v3634, %v3633
      %v3680 = vpack.c.b16 %v3636, %v3635
      %v3681 = vpack.c.b16 %v3638, %v3637
      %v3682 = vpack.c.b16 %v3640, %v3639
      %v3683 = vpack.c.b16 %v3642, %v3641
      %v3684 = vpack.c.b16 %v3644, %v3643
      %v3685 = vpack.c.b16 %v3646, %v3645
      %v3686 = vpack.c.b16 %v3648, %v3647
      %v3687 = vpack.c.b16 %v3650, %v3649
      %v3688 = vpack.c.b16 %v3652, %v3651
      %v3689 = vpack.c.b16 %v3654, %v3653
      %v3690 = vpack.c.b16 %v3656, %v3655
      %v3691 = vpack.c.b16 %v3658, %v3657
      %v3692 = vpack.c.b16 %v3660, %v3659
      %3725 = vmatpush.bf16.msra.mxu0 %v3668
      %3726 = vmatpush.bf16.msra.mxu0 %v3667
      %3727 = vmatpush.bf16.msra.mxu0 %v3666
      %3728 = vmatpush.bf16.msra.mxu0 %v3665
      %3729 = vmatpush.bf16.msra.mxu0 %v3664
      %3730 = vmatpush.bf16.msra.mxu0 %v3663
      %3731 = vmatpush.bf16.msra.mxu0 %v3662
      %3732 = vmatpush.bf16.msra.mxu0 %v3661
      %3733 = vmatmul.bf16.gmra.mxu0 %v3457
      %v3734 = vpop.f32.mrf.mxu0
      %v3735 = vadd.f32 0.0, %v3734
      %v3736 = vpop.f32.mrf.mxu0
      %v3737 = vadd.f32 0.0, %v3736
      %3738 = vmatmul.bf16.gmra.mxu0 %v3461
      %v3739 = vpop.f32.mrf.mxu0
      %v3740 = vadd.f32 0.0, %v3739
      %v3741 = vpop.f32.mrf.mxu0
      %v3742 = vadd.f32 0.0, %v3741
      %3743 = vmatmul.bf16.gmra.mxu0 %v3465
      %v3744 = vpop.f32.mrf.mxu0
      %v3745 = vadd.f32 0.0, %v3744
      %v3746 = vpop.f32.mrf.mxu0
      %v3747 = vadd.f32 0.0, %v3746
      %3748 = vdwg.mxu0
      %3749 = vmatpush.bf16.msra.mxu0 %v3676
      %3750 = vmatpush.bf16.msra.mxu0 %v3675
      %3751 = vmatpush.bf16.msra.mxu0 %v3674
      %3752 = vmatpush.bf16.msra.mxu0 %v3673
      %3753 = vmatpush.bf16.msra.mxu0 %v3672
      %3754 = vmatpush.bf16.msra.mxu0 %v3671
      %3755 = vmatpush.bf16.msra.mxu0 %v3670
      %3756 = vmatpush.bf16.msra.mxu0 %v3669
      %3757 = vmatmul.bf16.gmra.mxu0 %v3458
      %v3758 = vpop.f32.mrf.mxu0
      %v3759 = vadd.f32 %v3735, %v3758
      %v3760 = vpop.f32.mrf.mxu0
      %v3761 = vadd.f32 %v3737, %v3760
      %3762 = vmatmul.bf16.gmra.mxu0 %v3462
      %v3763 = vpop.f32.mrf.mxu0
      %v3764 = vadd.f32 %v3740, %v3763
      %v3765 = vpop.f32.mrf.mxu0
      %v3766 = vadd.f32 %v3742, %v3765
      %3767 = vmatmul.bf16.gmra.mxu0 %v3466
      %v3768 = vpop.f32.mrf.mxu0
      %v3769 = vadd.f32 %v3745, %v3768
      %v3770 = vpop.f32.mrf.mxu0
      %v3771 = vadd.f32 %v3747, %v3770
      %3772 = vdwg.mxu0
      %3773 = vmatpush.bf16.msra.mxu0 %v3684
      %3774 = vmatpush.bf16.msra.mxu0 %v3683
      %3775 = vmatpush.bf16.msra.mxu0 %v3682
      %3776 = vmatpush.bf16.msra.mxu0 %v3681
      %3777 = vmatpush.bf16.msra.mxu0 %v3680
      %3778 = vmatpush.bf16.msra.mxu0 %v3679
      %3779 = vmatpush.bf16.msra.mxu0 %v3678
      %3780 = vmatpush.bf16.msra.mxu0 %v3677
      %3781 = vmatmul.bf16.gmra.mxu0 %v3459
      %v3782 = vpop.f32.mrf.mxu0
      %v3783 = vadd.f32 %v3759, %v3782
      %v3784 = vpop.f32.mrf.mxu0
      %v3785 = vadd.f32 %v3761, %v3784
      %3786 = vmatmul.bf16.gmra.mxu0 %v3463
      %v3787 = vpop.f32.mrf.mxu0
      %v3788 = vadd.f32 %v3764, %v3787
      %v3789 = vpop.f32.mrf.mxu0
      %v3790 = vadd.f32 %v3766, %v3789
      %3791 = vmatmul.bf16.gmra.mxu0 %v3467
      %v3792 = vpop.f32.mrf.mxu0
      %v3793 = vadd.f32 %v3769, %v3792
      %v3794 = vpop.f32.mrf.mxu0
      %v3795 = vadd.f32 %v3771, %v3794
      %3796 = vdwg.mxu0
      %3797 = vmatpush.bf16.msra.mxu0 %v3692
      %3798 = vmatpush.bf16.msra.mxu0 %v3691
      %3799 = vmatpush.bf16.msra.mxu0 %v3690
      %3800 = vmatpush.bf16.msra.mxu0 %v3689
      %3801 = vmatpush.bf16.msra.mxu0 %v3688
      %3802 = vmatpush.bf16.msra.mxu0 %v3687
      %3803 = vmatpush.bf16.msra.mxu0 %v3686
      %3804 = vmatpush.bf16.msra.mxu0 %v3685
      %3805 = vmatmul.bf16.gmra.mxu0 %v3460
      %v3806 = vpop.f32.mrf.mxu0
      %v3807 = vadd.f32 %v3783, %v3806
      %v3808 = vpop.f32.mrf.mxu0
      %v3809 = vadd.f32 %v3785, %v3808
      %3810 = vmatmul.bf16.gmra.mxu0 %v3464
      %v3811 = vpop.f32.mrf.mxu0
      %v3812 = vadd.f32 %v3788, %v3811
      %v3813 = vpop.f32.mrf.mxu0
      %v3814 = vadd.f32 %v3790, %v3813
      %3815 = vmatmul.bf16.gmra.mxu0 %v3468
      %v3816 = vpop.f32.mrf.mxu0
      %v3817 = vadd.f32 %v3793, %v3816
      %v3818 = vpop.f32.mrf.mxu0
      %v3819 = vadd.f32 %v3795, %v3818
      %3820 = vdwg.mxu0
      %v3821 = vadd.f32 %v2050, %v3807
      %v3822 = vadd.f32 %v2051, %v3809
      %v3823 = vadd.f32 %v2052, %v3812
      %v3824 = vadd.f32 %v2053, %v3814
      %v3825 = vadd.f32 %v2054, %v3817
      %v3826 = vadd.f32 %v2055, %v3819
      %v3827 = vld [vmem:[%s559] sm:$0x1]
      %v3829 = vperm.slane %v3827, 0
      %v3831 = vadd.f32 %v3821, %v3829
      %v3832 = vadd.f32 %v3822, %v3829
      %v3833 = vadd.f32 %v3823, %v3829
      %v3834 = vadd.f32 %v3824, %v3829
      %v3835 = vadd.f32 %v3825, %v3829
      %v3836 = vadd.f32 %v3826, %v3829
      %3837 = vst [vmem:[%s12] sm:$0xff] %v3831
      %3838 = vst [vmem:[%s12 + $0x8] sm:$0xff] %v3832
      %3839 = vst [vmem:[%s12 + $0x10] sm:$0xff] %v3833
      %3840 = vst [vmem:[%s12 + $0x18] sm:$0xff] %v3834
      %3841 = vst [vmem:[%s12 + $0x20] sm:$0xff] %v3835
      %3842 = vst [vmem:[%s12 + $0x28] sm:$0xff] %v3836
      // Predicated region
      $region73: #{ast_forward.6} parent=67 // pred_check
        %p3843 = pneg %p343
      $region74: #{ast_forward.6} parent=67 // pred_check_branch
        %3845 = sbr.rel (%p3843) target = $region76
      $region75: #{ast_forward.6} parent=67 // pred_region
        _
      $region76: #{ast_forward.6} parent=67 // pred_fallthru
        _
      // Predicated region
      $region77: #{ast_forward.6} parent=67 // pred_check
        %p3846 = pneg %p343
      $region78: #{ast_forward.6} parent=67 // pred_check_branch
        %3848 = sbr.rel (%p3846) target = $region80
      $region79: #{ast_forward.6} parent=67 // pred_region
        _
      $region80: #{ast_forward.6} parent=67 // pred_fallthru
        _
    $region68: #{ast_forward.6} parent=5 // pred_fallthru
      _
    %p3849 = scmp.le.s32.totalorder 2, %s18
    // Predicated region
    $region81: #{ast_forward.6} parent=5 // pred_check
      %p3850 = pneg %p3849
    $region82: #{ast_forward.6} parent=5 // pred_check_branch
      %3852 = sbr.rel (%p3850) target = $region84
    $region83: #{ast_forward.6} parent=5 // pred_region
      %s3853 = ssub.s32 %s18, 2
    $region84: #{ast_forward.6} parent=5 // pred_fallthru
      _
  $region6: #{ast_forward.6} parent=0 // loop_footer
    %s22 = sadd.s32 1, %s18
  $region7: #{ast_forward.6} parent=0 // loop_footer_branch
    %17 = sbr.rel target = $region3
  $region8: #{ast_forward.6} parent=0 // loop_exit
    _

</llo_original>
